<compile_context>
chip_gen: v6e
topology: v6e:2x2x1
jax: 0.10.0
libtpu: 0.0.40
codegen_flags: <defaults>
</compile_context>

<pallas_src>
import functools

import jax
import jax.numpy as jnp
from jax import lax
from jax.experimental import pallas as pl
from jax.experimental.pallas import tpu as pltpu

LANE = 128
_VMEM_LIMIT = 64 * 1024 * 1024


def _round_up(x, m):
    return (x + m - 1) // m * m


# ----------------------------------------------------------------------------------
# Kernel A: row-tiled matmul + bias (drives ConvTranspose2d(k=2, s=2); each input
# pixel's row produces the (kh, kw, cout) tap values, scattered in glue afterwards)
# ----------------------------------------------------------------------------------
def _matmul_bias_kernel(x_ref, w_ref, b_ref, o_ref):
    acc = jnp.dot(x_ref[...], w_ref[...], preferred_element_type=jnp.float32)
    o_ref[...] = (acc + b_ref[...]).astype(o_ref.dtype)


def conv_transpose_2x2_s2(x_nhwc, w, b, cp_mid):
    """ConvTranspose2d(kernel_size=2, stride=2, padding=0).

    x_nhwc: (N, H, W, Cp_in) bf16, channel-padded to a multiple of 128.
    w:      (Cin, mid, 2, 2) f32 (PyTorch ConvTranspose2d layout), b: (mid,) f32.
    cp_mid: padded output-channel count (multiple of 128).
    returns (N, 2H, 2W, cp_mid) bf16 (padded channels are zero).
    """
    N, H, W, Cp_in = x_nhwc.shape
    Cin, mid, K, _ = w.shape
    assert K == 2, "kernel supports maxpool_kernel == stride == 2 (non-overlapping)"
    R = N * H * W

    # weight -> (Cp_in, K*K*cp_mid), columns ordered (kh, kw, cout); zero pad rows/cols.
    w_p = jnp.zeros((Cp_in, cp_mid, K, K), jnp.float32).at[:Cin, :mid].set(w)
    w_flat = (jnp.transpose(w_p, (0, 2, 3, 1))
              .reshape(Cp_in, K * K * cp_mid).astype(jnp.bfloat16))
    b_p = jnp.zeros((cp_mid,), jnp.float32).at[:mid].set(b)
    b_tiled = jnp.tile(b_p, K * K).reshape(1, K * K * cp_mid)

    x_flat = x_nhwc.reshape(R, Cp_in)
    TM = 512 if R >= 512 else R          # row tile; pipelined over the grid

    y = pl.pallas_call(
        _matmul_bias_kernel,
        out_shape=jax.ShapeDtypeStruct((R, K * K * cp_mid), jnp.bfloat16),
        grid=(pl.cdiv(R, TM),),
        in_specs=[
            pl.BlockSpec((TM, Cp_in), lambda i: (i, 0)),
            pl.BlockSpec((Cp_in, K * K * cp_mid), lambda i: (0, 0)),
            pl.BlockSpec((1, K * K * cp_mid), lambda i: (0, 0)),
        ],
        out_specs=pl.BlockSpec((TM, K * K * cp_mid), lambda i: (i, 0)),
        compiler_params=pltpu.CompilerParams(
            dimension_semantics=("parallel",),
            vmem_limit_bytes=_VMEM_LIMIT),
    )(x_flat, w_flat, b_tiled)

    # scatter (glue): out[n, 2i+kh, 2j+kw, c] = y[n, i, j, kh, kw, c]
    y = y.reshape(N, H, W, K, K, cp_mid).transpose(0, 1, 3, 2, 4, 5)
    return y.reshape(N, H * K, W * K, cp_mid)


# ----------------------------------------------------------------------------------
# Kernel B: 3x3 conv (padding=1) + bias + ReLU over row strips.
#   - height taps: free leading-dim slices of the (TH+2)-row slab
#   - width taps : stacked once along the lane axis -> 3 matmuls with K = 3*Cp
#   - halo rows  : separate 1-row auto-pipelined blocks (clamped index_map), masked
#                  to zero at the image border in-kernel (no wrapper jnp.pad)
# ----------------------------------------------------------------------------------
def _conv3x3_bias_relu_kernel(xt_ref, xc_ref, xb_ref, w_ref, b_ref, o_ref,
                              *, TH, W, Cp, Coutp):
    s = pl.program_id(1)
    ns = pl.num_programs(1)
    dt = xc_ref.dtype

    # zero the halo rows at the image border (clamped fetch brought in a real row)
    top_scale = jnp.where(s > 0, 1.0, 0.0).astype(dt)
    bot_scale = jnp.where(s < ns - 1, 1.0, 0.0).astype(dt)

    top = xt_ref[...].reshape(1, W, Cp) * top_scale
    mid = xc_ref[...].reshape(TH, W, Cp)
    bot = xb_ref[...].reshape(1, W, Cp) * bot_scale
    x = jnp.concatenate([top, mid, bot], axis=0)              # (TH+2, W, Cp)

    # width taps, built once: channel-stacked [x(w-1) | x(w) | x(w+1)]
    zcol = jnp.zeros((TH + 2, 1, Cp), dt)
    xl = jnp.concatenate([zcol, x[:, :W - 1, :]], axis=1)      # X[., w-1, .]
    xr = jnp.concatenate([x[:, 1:, :], zcol], axis=1)          # X[., w+1, .]
    xcat = jnp.concatenate([xl, x, xr], axis=-1)               # (TH+2, W, 3*Cp)

    acc = None
    for dh in range(3):                                        # height taps
        lhs = xcat[dh:dh + TH].reshape(TH * W, 3 * Cp)
        t = jnp.dot(lhs, w_ref[dh], preferred_element_type=jnp.float32)
        acc = t if acc is None else acc + t

    y = jnp.maximum(acc + b_ref[...], 0.0)
    o_ref[...] = y.reshape(1, TH, W, Coutp).astype(o_ref.dtype)


def conv3x3_relu(x_nhwc, w, b, out_dtype=jnp.bfloat16):
    """Conv2d(kernel_size=3, padding=1) + bias + ReLU.

    x_nhwc: (N, H, W, Cp_in) bf16, channels padded to a multiple of 128.
    w: (Cout, Cin_true, 3, 3) PyTorch layout; b: (Cout,).
    returns (N, H, W, Coutp) with padded output channels equal to zero.
    """
    N, H, W, Cp_in = x_nhwc.shape
    Cout, Cin_true = w.shape[0], w.shape[1]
    Coutp = _round_up(Cout, LANE)

    w_hwio = jnp.transpose(w, (2, 3, 1, 0))                    # (3, 3, Cin, Cout)
    w_p = (jnp.zeros((3, 3, Cp_in, Coutp), jnp.float32)
           .at[:, :, :Cin_true, :Cout].set(w_hwio))
    w_cat = w_p.reshape(3, 3 * Cp_in, Coutp).astype(jnp.bfloat16)   # rows = (dw, cin)
    b_p = jnp.zeros((1, Coutp), jnp.float32).at[0, :Cout].set(b)

    # row-strip height: small enough that the slab + f32 accumulator stay well inside
    # VMEM even on v7x (64 MiB) and the accumulator does not blow vreg pressure.
    TH = next(d for d in (8, 4, 2, 1) if H % d == 0)
    ns = H // TH

    kern = functools.partial(_conv3x3_bias_relu_kernel,
                             TH=TH, W=W, Cp=Cp_in, Coutp=Coutp)

    return pl.pallas_call(
        kern,
        out_shape=jax.ShapeDtypeStruct((N, H, W, Coutp), out_dtype),
        grid=(N, ns),
        in_specs=[
            # top halo row (clamped at the border, zeroed in-kernel)
            pl.BlockSpec((1, 1, W, Cp_in),
                         lambda n, s: (n, jnp.maximum(s * TH - 1, 0), 0, 0)),
            # core TH rows of the strip
            pl.BlockSpec((1, TH, W, Cp_in), lambda n, s: (n, s, 0, 0)),
            # bottom halo row
            pl.BlockSpec((1, 1, W, Cp_in),
                         lambda n, s: (n, jnp.minimum((s + 1) * TH, H - 1), 0, 0)),
            pl.BlockSpec((3, 3 * Cp_in, Coutp), lambda n, s: (0, 0, 0)),
            pl.BlockSpec((1, Coutp), lambda n, s: (0, 0)),
        ],
        out_specs=pl.BlockSpec((1, TH, W, Coutp), lambda n, s: (n, s, 0, 0)),
        compiler_params=pltpu.CompilerParams(
            dimension_semantics=("parallel", "parallel"),
            vmem_limit_bytes=_VMEM_LIMIT),
    )(x_nhwc, x_nhwc, x_nhwc, w_cat, b_p)


# ----------------------------------------------------------------------------------
# `Up` module: parameters + forward
# ----------------------------------------------------------------------------------
def init_up_params(key, in_channel, out_channel, maxpool_kernel=2, conv_kernel=3):
    mid = in_channel // 2
    k1, k2, k3, k4 = jax.random.split(key, 4)
    # ConvTranspose2d is not touched by layer_init (it only hits Conv2d/Linear).
    up_w = 0.2 * jax.random.normal(
        k1, (in_channel, mid, maxpool_kernel, maxpool_kernel), jnp.float32)
    up_b = 0.05 * jax.random.normal(k4, (mid,), jnp.float32)
    # Conv2d layers: kaiming_normal_ (std = sqrt(2 / fan_in)), bias = 0.
    fan1 = mid * conv_kernel * conv_kernel
    c1_w = jax.random.normal(
        k2, (out_channel, mid, conv_kernel, conv_kernel), jnp.float32
    ) * jnp.sqrt(2.0 / fan1)
    c1_b = jnp.zeros((out_channel,), jnp.float32)
    fan2 = out_channel * conv_kernel * conv_kernel
    c2_w = jax.random.normal(
        k3, (out_channel, out_channel, conv_kernel, conv_kernel), jnp.float32
    ) * jnp.sqrt(2.0 / fan2)
    c2_b = jnp.zeros((out_channel,), jnp.float32)
    return dict(up_w=up_w, up_b=up_b, c1_w=c1_w, c1_b=c1_b, c2_w=c2_w, c2_b=c2_b)


def up_forward(params, x1_nchw, x2_nchw=None):
    """Forward of `Up` (batchNorm=False path). Inputs/outputs are NCHW like PyTorch."""
    x = jnp.transpose(x1_nchw, (0, 2, 3, 1)).astype(jnp.float32)        # -> NHWC
    N, H, W, Cin = x.shape
    mid = params["up_w"].shape[1]

    cp_in = _round_up(Cin, LANE)
    x = jnp.pad(x, ((0, 0), (0, 0), (0, 0), (0, cp_in - Cin))).astype(jnp.bfloat16)

    cat_c = mid + (x2_nchw.shape[1] if x2_nchw is not None else 0)
    cp_mid = _round_up(cat_c, LANE)

    x = conv_transpose_2x2_s2(x, params["up_w"], params["up_b"], cp_mid)  # (N,2H,2W,cp_mid)

    if x2_nchw is not None:
        x2 = jnp.transpose(x2_nchw, (0, 2, 3, 1)).astype(jnp.bfloat16)
        pad_w = cp_mid - cat_c
        x = jnp.concatenate(
            [x[..., :mid], x2,
             jnp.zeros(x.shape[:-1] + (pad_w,), jnp.bfloat16)], axis=-1)

    # TODO(synk): training-mode BatchNorm2d (batch statistics) not implemented; the
    # module is used with batchNorm=False, which skips normLayer1/normLayer2 exactly
    # as the PyTorch reference does.
    x = conv3x3_relu(x, params["c1_w"], params["c1_b"], out_dtype=jnp.bfloat16)
    x = conv3x3_relu(x, params["c2_w"], params["c2_b"], out_dtype=jnp.float32)

    out_channel = params["c2_w"].shape[0]
    return jnp.transpose(x[..., :out_channel], (0, 3, 1, 2))             # -> NCHW


# ----------------------------------------------------------------------------------
# Pure-JAX f32 reference (XLA convs) for correctness checking
# ----------------------------------------------------------------------------------
def _ref_up_forward(params, x1_nchw):
    x = jnp.transpose(x1_nchw, (0, 2, 3, 1)).astype(jnp.float32)
    Wt, b = params["up_w"], params["up_b"]
    N, H, Wd, Cin = x.shape
    Cout = Wt.shape[1]
    t = jnp.einsum("nijc,cokl->nijklo", x, Wt)
    t = t.transpose(0, 1, 3, 2, 4, 5).reshape(N, 2 * H, 2 * Wd, Cout) + b

    def conv_relu(z, w, bb):
        w_hwio = jnp.transpose(w, (2, 3, 1, 0))
        y = lax.conv_general_dilated(
            z, w_hwio, (1, 1), ((1, 1), (1, 1)),
            dimension_numbers=("NHWC", "HWIO", "NHWC")) + bb
        return jnp.maximum(y, 0.0)

    t = conv_relu(t, params["c1_w"], params["c1_b"])
    t = conv_relu(t, params["c2_w"], params["c2_b"])
    return jnp.transpose(t, (0, 3, 1, 2))


if __name__ == "__main__":
    key = jax.random.PRNGKey(0)
    kp, kx = jax.random.split(key)

    # Up(in_channel=8, out_channel=4, batchNorm=False, maxpool_kernel=2, conv_kernel=3)
    in_channel, out_channel = 8, 4
    params = init_up_params(kp, in_channel, out_channel)

    # x1: NCHW (batch=2, channels=8, 8x8 spatial) -> output (2, 4, 16, 16)
    x1 = jax.random.normal(kx, (2, in_channel, 8, 8), jnp.float32)

    fwd = jax.jit(lambda p, x: up_forward(p, x))
    out = jax.block_until_ready(fwd(params, x1))
    assert out.shape == (2, out_channel, 16, 16), out.shape

    ref = _ref_up_forward(params, x1)
    rel_err = float(jnp.max(jnp.abs(out - ref)) / (jnp.max(jnp.abs(ref)) + 1e-6))
    assert rel_err < 3e-2, f"mismatch vs reference: {rel_err}"

    print("KERNEL_OK")
</pallas_src>

<mosaic_0001>
module attributes {stable_mosaic.version = 11 : i64} {
  func.func @_matmul_bias_kernel(%arg0: i32, %arg1: memref<128x128xbf16, #tpu.memory_space<vmem>>, %arg2: memref<128x512xbf16, #tpu.memory_space<vmem>>, %arg3: memref<1x512xf32, #tpu.memory_space<vmem>>, %arg4: memref<128x512xbf16, #tpu.memory_space<vmem>>) attributes {dimension_semantics = [#tpu.dimension_semantics<parallel>], iteration_bounds = array<i64: 1>, scalar_prefetch = 0 : i64, scratch_operands = 0 : i64, tpu.core_type = #tpu.core_type<tc>, window_params = [{transform_indices = @transform_0, window_bounds = array<i64: 128, 128>}, {pipeline_mode = #tpu.pipeline_mode<synchronous>, transform_indices = @transform_1, window_bounds = array<i64: 128, 512>}, {pipeline_mode = #tpu.pipeline_mode<synchronous>, transform_indices = @transform_2, window_bounds = array<i64: 1, 512>}, {transform_indices = @transform_3, window_bounds = array<i64: 128, 512>}]} {
    %c0 = arith.constant 0 : index
    %c0_0 = arith.constant 0 : index
    %0 = vector.load %arg1[%c0, %c0_0] : memref<128x128xbf16, #tpu.memory_space<vmem>>, vector<128x128xbf16>
    %c0_1 = arith.constant 0 : index
    %c0_2 = arith.constant 0 : index
    %1 = vector.load %arg2[%c0_1, %c0_2] : memref<128x512xbf16, #tpu.memory_space<vmem>>, vector<128x512xbf16>
    %cst = arith.constant dense<0.000000e+00> : vector<128x512xf32>
    %2 = tpu.matmul %0, %1, %cst {dimension_numbers = #tpu.dot_dimension_numbers<[1], [0], [0], [1], [0, 0, 1, 1], [], []>} : vector<128x128xbf16>, vector<128x512xbf16>, vector<128x512xf32> -> vector<128x512xf32>
    %c0_3 = arith.constant 0 : index
    %c0_4 = arith.constant 0 : index
    %3 = vector.load %arg3[%c0_3, %c0_4] : memref<1x512xf32, #tpu.memory_space<vmem>>, vector<1x512xf32>
    %4 = vector.broadcast %3 : vector<1x512xf32> to vector<128x512xf32>
    %5 = arith.addf %2, %4 : vector<128x512xf32>
    %6 = arith.truncf %5 : vector<128x512xf32> to vector<128x512xbf16>
    %c0_5 = arith.constant 0 : index
    %c0_6 = arith.constant 0 : index
    %7 = vector.load %arg4[%c0_5, %c0_6] : memref<128x512xbf16, #tpu.memory_space<vmem>>, vector<128x512xbf16>
    tpu.vector_store %arg4[%c0_5, %c0_6], %6 {strides = array<i32>} : memref<128x512xbf16, #tpu.memory_space<vmem>>, vector<128x512xbf16>,
    return
  }
  func.func @transform_0(%arg0: i32) -> (i32, i32) {
    %c0_i32 = arith.constant 0 : i32
    %c0_i32_0 = arith.constant 0 : i32
    return %arg0, %c0_i32 : i32, i32
  }
  func.func @transform_1(%arg0: i32) -> (i32, i32) {
    %c0_i32 = arith.constant 0 : i32
    %c0_i32_0 = arith.constant 0 : i32
    %c0_i32_1 = arith.constant 0 : i32
    return %c0_i32, %c0_i32_0 : i32, i32
  }
  func.func @transform_2(%arg0: i32) -> (i32, i32) {
    %c0_i32 = arith.constant 0 : i32
    %c0_i32_0 = arith.constant 0 : i32
    %c0_i32_1 = arith.constant 0 : i32
    return %c0_i32, %c0_i32_0 : i32, i32
  }
  func.func @transform_3(%arg0: i32) -> (i32, i32) {
    %c0_i32 = arith.constant 0 : i32
    %c0_i32_0 = arith.constant 0 : i32
    return %arg0, %c0_i32 : i32, i32
  }
}

module attributes {stable_mosaic.version = 11 : i64} {
  func.func @_conv3x3_bias_relu_kernel(%arg0: i32, %arg1: i32, %arg2: memref<1x1x16x128xbf16, #tpu.memory_space<vmem>>, %arg3: memref<1x8x16x128xbf16, #tpu.memory_space<vmem>>, %arg4: memref<1x1x16x128xbf16, #tpu.memory_space<vmem>>, %arg5: memref<3x384x128xbf16, #tpu.memory_space<vmem>>, %arg6: memref<1x128xf32, #tpu.memory_space<vmem>>, %arg7: memref<1x8x16x128xbf16, #tpu.memory_space<vmem>>) attributes {dimension_semantics = [#tpu.dimension_semantics<parallel>, #tpu.dimension_semantics<parallel>], iteration_bounds = array<i64: 2, 2>, scalar_prefetch = 0 : i64, scratch_operands = 0 : i64, tpu.core_type = #tpu.core_type<tc>, window_params = [{transform_indices = @transform_0, window_bounds = array<i64: 1, 1, 16, 128>}, {transform_indices = @transform_1, window_bounds = array<i64: 1, 8, 16, 128>}, {transform_indices = @transform_2, window_bounds = array<i64: 1, 1, 16, 128>}, {pipeline_mode = #tpu.pipeline_mode<synchronous>, transform_indices = @transform_3, window_bounds = array<i64: 3, 384, 128>}, {pipeline_mode = #tpu.pipeline_mode<synchronous>, transform_indices = @transform_4, window_bounds = array<i64: 1, 128>}, {transform_indices = @transform_5, window_bounds = array<i64: 1, 8, 16, 128>}]} {
    %c0_i32 = arith.constant 0 : i32
    %0 = arith.cmpi sgt, %arg1, %c0_i32 : i32
    %cst = arith.constant 1.000000e+00 : f32
    %cst_0 = arith.constant 0.000000e+00 : f32
    %1 = arith.select %0, %cst, %cst_0 : f32
    %2 = arith.truncf %1 : f32 to bf16
    %c1_i32 = arith.constant 1 : i32
    %3 = arith.cmpi slt, %arg1, %c1_i32 : i32
    %cst_1 = arith.constant 1.000000e+00 : f32
    %cst_2 = arith.constant 0.000000e+00 : f32
    %4 = arith.select %3, %cst_1, %cst_2 : f32
    %5 = arith.truncf %4 : f32 to bf16
    %c0 = arith.constant 0 : index
    %c0_3 = arith.constant 0 : index
    %c0_4 = arith.constant 0 : index
    %c0_5 = arith.constant 0 : index
    %6 = vector.load %arg2[%c0, %c0_3, %c0_4, %c0_5] : memref<1x1x16x128xbf16, #tpu.memory_space<vmem>>, vector<1x1x16x128xbf16>
    %7 = vector.shape_cast %6 : vector<1x1x16x128xbf16> to vector<1x16x128xbf16>
    %8 = vector.broadcast %2 : bf16 to vector<1x16x128xbf16>
    %9 = arith.mulf %7, %8 : vector<1x16x128xbf16>
    %c0_6 = arith.constant 0 : index
    %c0_7 = arith.constant 0 : index
    %c0_8 = arith.constant 0 : index
    %c0_9 = arith.constant 0 : index
    %10 = vector.load %arg3[%c0_6, %c0_7, %c0_8, %c0_9] : memref<1x8x16x128xbf16, #tpu.memory_space<vmem>>, vector<1x8x16x128xbf16>
    %11 = vector.shape_cast %10 : vector<1x8x16x128xbf16> to vector<8x16x128xbf16>
    %c0_10 = arith.constant 0 : index
    %c0_11 = arith.constant 0 : index
    %c0_12 = arith.constant 0 : index
    %c0_13 = arith.constant 0 : index
    %12 = vector.load %arg4[%c0_10, %c0_11, %c0_12, %c0_13] : memref<1x1x16x128xbf16, #tpu.memory_space<vmem>>, vector<1x1x16x128xbf16>
    %13 = vector.shape_cast %12 : vector<1x1x16x128xbf16> to vector<1x16x128xbf16>
    %14 = vector.broadcast %5 : bf16 to vector<1x16x128xbf16>
    %15 = arith.mulf %13, %14 : vector<1x16x128xbf16>
    %16 = tpu.concatenate %9, %11, %15 in 0 : vector<1x16x128xbf16>, vector<8x16x128xbf16>, vector<1x16x128xbf16> -> vector<10x16x128xbf16>
    %cst_14 = arith.constant 0.000000e+00 : bf16
    %17 = vector.broadcast %cst_14 : bf16 to vector<10x1x128xbf16>
    %18 = vector.extract_strided_slice %16 {offsets = [0, 0, 0], sizes = [10, 15, 128], strides = [1, 1, 1]} : vector<10x16x128xbf16> to vector<10x15x128xbf16>
    %19 = tpu.concatenate %17, %18 in 1 : vector<10x1x128xbf16>, vector<10x15x128xbf16> -> vector<10x16x128xbf16>
    %20 = vector.extract_strided_slice %16 {offsets = [0, 1, 0], sizes = [10, 15, 128], strides = [1, 1, 1]} : vector<10x16x128xbf16> to vector<10x15x128xbf16>
    %21 = tpu.concatenate %20, %17 in 1 : vector<10x15x128xbf16>, vector<10x1x128xbf16> -> vector<10x16x128xbf16>
    %22 = tpu.concatenate %19, %16, %21 in 2 : vector<10x16x128xbf16>, vector<10x16x128xbf16>, vector<10x16x128xbf16> -> vector<10x16x384xbf16>
    %23 = vector.extract_strided_slice %22 {offsets = [0, 0, 0], sizes = [8, 16, 384], strides = [1, 1, 1]} : vector<10x16x384xbf16> to vector<8x16x384xbf16>
    %24 = vector.shape_cast %23 : vector<8x16x384xbf16> to vector<128x384xbf16>
    %c0_15 = arith.constant 0 : index
    %c0_16 = arith.constant 0 : index
    %c0_17 = arith.constant 0 : index
    %25 = vector.load %arg5[%c0_15, %c0_16, %c0_17] : memref<3x384x128xbf16, #tpu.memory_space<vmem>>, vector<1x384x128xbf16>
    %26 = vector.shape_cast %25 : vector<1x384x128xbf16> to vector<384x128xbf16>
    %cst_18 = arith.constant dense<0.000000e+00> : vector<128x128xf32>
    %27 = tpu.matmul %24, %26, %cst_18 {dimension_numbers = #tpu.dot_dimension_numbers<[1], [0], [0], [1], [0, 0, 1, 1], [], []>} : vector<128x384xbf16>, vector<384x128xbf16>, vector<128x128xf32> -> vector<128x128xf32>
    %28 = vector.extract_strided_slice %22 {offsets = [1, 0, 0], sizes = [8, 16, 384], strides = [1, 1, 1]} : vector<10x16x384xbf16> to vector<8x16x384xbf16>
    %29 = vector.shape_cast %28 : vector<8x16x384xbf16> to vector<128x384xbf16>
    %c1 = arith.constant 1 : index
    %c0_19 = arith.constant 0 : index
    %c0_20 = arith.constant 0 : index
    %30 = vector.load %arg5[%c1, %c0_19, %c0_20] : memref<3x384x128xbf16, #tpu.memory_space<vmem>>, vector<1x384x128xbf16>
    %31 = vector.shape_cast %30 : vector<1x384x128xbf16> to vector<384x128xbf16>
    %cst_21 = arith.constant dense<0.000000e+00> : vector<128x128xf32>
    %32 = tpu.matmul %29, %31, %cst_21 {dimension_numbers = #tpu.dot_dimension_numbers<[1], [0], [0], [1], [0, 0, 1, 1], [], []>} : vector<128x384xbf16>, vector<384x128xbf16>, vector<128x128xf32> -> vector<128x128xf32>
    %33 = arith.addf %27, %32 : vector<128x128xf32>
    %34 = vector.extract_strided_slice %22 {offsets = [2, 0, 0], sizes = [8, 16, 384], strides = [1, 1, 1]} : vector<10x16x384xbf16> to vector<8x16x384xbf16>
    %35 = vector.shape_cast %34 : vector<8x16x384xbf16> to vector<128x384xbf16>
    %c2 = arith.constant 2 : index
    %c0_22 = arith.constant 0 : index
    %c0_23 = arith.constant 0 : index
    %36 = vector.load %arg5[%c2, %c0_22, %c0_23] : memref<3x384x128xbf16, #tpu.memory_space<vmem>>, vector<1x384x128xbf16>
    %37 = vector.shape_cast %36 : vector<1x384x128xbf16> to vector<384x128xbf16>
    %cst_24 = arith.constant dense<0.000000e+00> : vector<128x128xf32>
    %38 = tpu.matmul %35, %37, %cst_24 {dimension_numbers = #tpu.dot_dimension_numbers<[1], [0], [0], [1], [0, 0, 1, 1], [], []>} : vector<128x384xbf16>, vector<384x128xbf16>, vector<128x128xf32> -> vector<128x128xf32>
    %39 = arith.addf %33, %38 : vector<128x128xf32>
    %c0_25 = arith.constant 0 : index
    %c0_26 = arith.constant 0 : index
    %40 = vector.load %arg6[%c0_25, %c0_26] : memref<1x128xf32, #tpu.memory_space<vmem>>, vector<1x128xf32>
    %41 = vector.broadcast %40 : vector<1x128xf32> to vector<128x128xf32>
    %42 = arith.addf %39, %41 : vector<128x128xf32>
    %cst_27 = arith.constant 0.000000e+00 : f32
    %43 = vector.broadcast %cst_27 : f32 to vector<128x128xf32>
    %44 = arith.maximumf %42, %43 : vector<128x128xf32>
    %45 = vector.shape_cast %44 : vector<128x128xf32> to vector<1x8x16x128xf32>
    %46 = arith.truncf %45 : vector<1x8x16x128xf32> to vector<1x8x16x128xbf16>
    %c0_28 = arith.constant 0 : index
    %c0_29 = arith.constant 0 : index
    %c0_30 = arith.constant 0 : index
    %c0_31 = arith.constant 0 : index
    %47 = vector.load %arg7[%c0_28, %c0_29, %c0_30, %c0_31] : memref<1x8x16x128xbf16, #tpu.memory_space<vmem>>, vector<1x8x16x128xbf16>
    tpu.vector_store %arg7[%c0_28, %c0_29, %c0_30, %c0_31], %46 {strides = array<i32>} : memref<1x8x16x128xbf16, #tpu.memory_space<vmem>>, vector<1x8x16x128xbf16>,
    return
  }
  func.func @transform_0(%arg0: i32, %arg1: i32) -> (i32, i32, i32, i32) {
    %c8_i32 = arith.constant 8 : i32
    %0 = arith.muli %arg1, %c8_i32 : i32
    %c1_i32 = arith.constant 1 : i32
    %1 = arith.subi %0, %c1_i32 : i32
    %c0_i32 = arith.constant 0 : i32
    %2 = arith.maxsi %1, %c0_i32 : i32
    %c0_i32_0 = arith.constant 0 : i32
    %c0_i32_1 = arith.constant 0 : i32
    %c0_i32_2 = arith.constant 0 : i32
    return %arg0, %2, %c0_i32_0, %c0_i32_1 : i32, i32, i32, i32
  }
  func.func @transform_1(%arg0: i32, %arg1: i32) -> (i32, i32, i32, i32) {
    %c0_i32 = arith.constant 0 : i32
    %c0_i32_0 = arith.constant 0 : i32
    %c0_i32_1 = arith.constant 0 : i32
    return %arg0, %arg1, %c0_i32, %c0_i32_0 : i32, i32, i32, i32
  }
  func.func @transform_2(%arg0: i32, %arg1: i32) -> (i32, i32, i32, i32) {
    %c1_i32 = arith.constant 1 : i32
    %0 = arith.addi %arg1, %c1_i32 : i32
    %c8_i32 = arith.constant 8 : i32
    %1 = arith.muli %0, %c8_i32 : i32
    %c15_i32 = arith.constant 15 : i32
    %2 = arith.minsi %1, %c15_i32 : i32
    %c0_i32 = arith.constant 0 : i32
    %c0_i32_0 = arith.constant 0 : i32
    %c0_i32_1 = arith.constant 0 : i32
    return %arg0, %2, %c0_i32, %c0_i32_0 : i32, i32, i32, i32
  }
  func.func @transform_3(%arg0: i32, %arg1: i32) -> (i32, i32, i32) {
    %c0_i32 = arith.constant 0 : i32
    %c0_i32_0 = arith.constant 0 : i32
    %c0_i32_1 = arith.constant 0 : i32
    %c0_i32_2 = arith.constant 0 : i32
    return %c0_i32, %c0_i32_0, %c0_i32_1 : i32, i32, i32
  }
  func.func @transform_4(%arg0: i32, %arg1: i32) -> (i32, i32) {
    %c0_i32 = arith.constant 0 : i32
    %c0_i32_0 = arith.constant 0 : i32
    %c0_i32_1 = arith.constant 0 : i32
    return %c0_i32, %c0_i32_0 : i32, i32
  }
  func.func @transform_5(%arg0: i32, %arg1: i32) -> (i32, i32, i32, i32) {
    %c0_i32 = arith.constant 0 : i32
    %c0_i32_0 = arith.constant 0 : i32
    %c0_i32_1 = arith.constant 0 : i32
    return %arg0, %arg1, %c0_i32, %c0_i32_0 : i32, i32, i32, i32
  }
}

module attributes {stable_mosaic.version = 11 : i64} {
  func.func @_conv3x3_bias_relu_kernel(%arg0: i32, %arg1: i32, %arg2: memref<1x1x16x128xbf16, #tpu.memory_space<vmem>>, %arg3: memref<1x8x16x128xbf16, #tpu.memory_space<vmem>>, %arg4: memref<1x1x16x128xbf16, #tpu.memory_space<vmem>>, %arg5: memref<3x384x128xbf16, #tpu.memory_space<vmem>>, %arg6: memref<1x128xf32, #tpu.memory_space<vmem>>, %arg7: memref<1x8x16x128xf32, #tpu.memory_space<vmem>>) attributes {dimension_semantics = [#tpu.dimension_semantics<parallel>, #tpu.dimension_semantics<parallel>], iteration_bounds = array<i64: 2, 2>, scalar_prefetch = 0 : i64, scratch_operands = 0 : i64, tpu.core_type = #tpu.core_type<tc>, window_params = [{transform_indices = @transform_0, window_bounds = array<i64: 1, 1, 16, 128>}, {transform_indices = @transform_1, window_bounds = array<i64: 1, 8, 16, 128>}, {transform_indices = @transform_2, window_bounds = array<i64: 1, 1, 16, 128>}, {pipeline_mode = #tpu.pipeline_mode<synchronous>, transform_indices = @transform_3, window_bounds = array<i64: 3, 384, 128>}, {pipeline_mode = #tpu.pipeline_mode<synchronous>, transform_indices = @transform_4, window_bounds = array<i64: 1, 128>}, {transform_indices = @transform_5, window_bounds = array<i64: 1, 8, 16, 128>}]} {
    %c0_i32 = arith.constant 0 : i32
    %0 = arith.cmpi sgt, %arg1, %c0_i32 : i32
    %cst = arith.constant 1.000000e+00 : f32
    %cst_0 = arith.constant 0.000000e+00 : f32
    %1 = arith.select %0, %cst, %cst_0 : f32
    %2 = arith.truncf %1 : f32 to bf16
    %c1_i32 = arith.constant 1 : i32
    %3 = arith.cmpi slt, %arg1, %c1_i32 : i32
    %cst_1 = arith.constant 1.000000e+00 : f32
    %cst_2 = arith.constant 0.000000e+00 : f32
    %4 = arith.select %3, %cst_1, %cst_2 : f32
    %5 = arith.truncf %4 : f32 to bf16
    %c0 = arith.constant 0 : index
    %c0_3 = arith.constant 0 : index
    %c0_4 = arith.constant 0 : index
    %c0_5 = arith.constant 0 : index
    %6 = vector.load %arg2[%c0, %c0_3, %c0_4, %c0_5] : memref<1x1x16x128xbf16, #tpu.memory_space<vmem>>, vector<1x1x16x128xbf16>
    %7 = vector.shape_cast %6 : vector<1x1x16x128xbf16> to vector<1x16x128xbf16>
    %8 = vector.broadcast %2 : bf16 to vector<1x16x128xbf16>
    %9 = arith.mulf %7, %8 : vector<1x16x128xbf16>
    %c0_6 = arith.constant 0 : index
    %c0_7 = arith.constant 0 : index
    %c0_8 = arith.constant 0 : index
    %c0_9 = arith.constant 0 : index
    %10 = vector.load %arg3[%c0_6, %c0_7, %c0_8, %c0_9] : memref<1x8x16x128xbf16, #tpu.memory_space<vmem>>, vector<1x8x16x128xbf16>
    %11 = vector.shape_cast %10 : vector<1x8x16x128xbf16> to vector<8x16x128xbf16>
    %c0_10 = arith.constant 0 : index
    %c0_11 = arith.constant 0 : index
    %c0_12 = arith.constant 0 : index
    %c0_13 = arith.constant 0 : index
    %12 = vector.load %arg4[%c0_10, %c0_11, %c0_12, %c0_13] : memref<1x1x16x128xbf16, #tpu.memory_space<vmem>>, vector<1x1x16x128xbf16>
    %13 = vector.shape_cast %12 : vector<1x1x16x128xbf16> to vector<1x16x128xbf16>
    %14 = vector.broadcast %5 : bf16 to vector<1x16x128xbf16>
    %15 = arith.mulf %13, %14 : vector<1x16x128xbf16>
    %16 = tpu.concatenate %9, %11, %15 in 0 : vector<1x16x128xbf16>, vector<8x16x128xbf16>, vector<1x16x128xbf16> -> vector<10x16x128xbf16>
    %cst_14 = arith.constant 0.000000e+00 : bf16
    %17 = vector.broadcast %cst_14 : bf16 to vector<10x1x128xbf16>
    %18 = vector.extract_strided_slice %16 {offsets = [0, 0, 0], sizes = [10, 15, 128], strides = [1, 1, 1]} : vector<10x16x128xbf16> to vector<10x15x128xbf16>
    %19 = tpu.concatenate %17, %18 in 1 : vector<10x1x128xbf16>, vector<10x15x128xbf16> -> vector<10x16x128xbf16>
    %20 = vector.extract_strided_slice %16 {offsets = [0, 1, 0], sizes = [10, 15, 128], strides = [1, 1, 1]} : vector<10x16x128xbf16> to vector<10x15x128xbf16>
    %21 = tpu.concatenate %20, %17 in 1 : vector<10x15x128xbf16>, vector<10x1x128xbf16> -> vector<10x16x128xbf16>
    %22 = tpu.concatenate %19, %16, %21 in 2 : vector<10x16x128xbf16>, vector<10x16x128xbf16>, vector<10x16x128xbf16> -> vector<10x16x384xbf16>
    %23 = vector.extract_strided_slice %22 {offsets = [0, 0, 0], sizes = [8, 16, 384], strides = [1, 1, 1]} : vector<10x16x384xbf16> to vector<8x16x384xbf16>
    %24 = vector.shape_cast %23 : vector<8x16x384xbf16> to vector<128x384xbf16>
    %c0_15 = arith.constant 0 : index
    %c0_16 = arith.constant 0 : index
    %c0_17 = arith.constant 0 : index
    %25 = vector.load %arg5[%c0_15, %c0_16, %c0_17] : memref<3x384x128xbf16, #tpu.memory_space<vmem>>, vector<1x384x128xbf16>
    %26 = vector.shape_cast %25 : vector<1x384x128xbf16> to vector<384x128xbf16>
    %cst_18 = arith.constant dense<0.000000e+00> : vector<128x128xf32>
    %27 = tpu.matmul %24, %26, %cst_18 {dimension_numbers = #tpu.dot_dimension_numbers<[1], [0], [0], [1], [0, 0, 1, 1], [], []>} : vector<128x384xbf16>, vector<384x128xbf16>, vector<128x128xf32> -> vector<128x128xf32>
    %28 = vector.extract_strided_slice %22 {offsets = [1, 0, 0], sizes = [8, 16, 384], strides = [1, 1, 1]} : vector<10x16x384xbf16> to vector<8x16x384xbf16>
    %29 = vector.shape_cast %28 : vector<8x16x384xbf16> to vector<128x384xbf16>
    %c1 = arith.constant 1 : index
    %c0_19 = arith.constant 0 : index
    %c0_20 = arith.constant 0 : index
    %30 = vector.load %arg5[%c1, %c0_19, %c0_20] : memref<3x384x128xbf16, #tpu.memory_space<vmem>>, vector<1x384x128xbf16>
    %31 = vector.shape_cast %30 : vector<1x384x128xbf16> to vector<384x128xbf16>
    %cst_21 = arith.constant dense<0.000000e+00> : vector<128x128xf32>
    %32 = tpu.matmul %29, %31, %cst_21 {dimension_numbers = #tpu.dot_dimension_numbers<[1], [0], [0], [1], [0, 0, 1, 1], [], []>} : vector<128x384xbf16>, vector<384x128xbf16>, vector<128x128xf32> -> vector<128x128xf32>
    %33 = arith.addf %27, %32 : vector<128x128xf32>
    %34 = vector.extract_strided_slice %22 {offsets = [2, 0, 0], sizes = [8, 16, 384], strides = [1, 1, 1]} : vector<10x16x384xbf16> to vector<8x16x384xbf16>
    %35 = vector.shape_cast %34 : vector<8x16x384xbf16> to vector<128x384xbf16>
    %c2 = arith.constant 2 : index
    %c0_22 = arith.constant 0 : index
    %c0_23 = arith.constant 0 : index
    %36 = vector.load %arg5[%c2, %c0_22, %c0_23] : memref<3x384x128xbf16, #tpu.memory_space<vmem>>, vector<1x384x128xbf16>
    %37 = vector.shape_cast %36 : vector<1x384x128xbf16> to vector<384x128xbf16>
    %cst_24 = arith.constant dense<0.000000e+00> : vector<128x128xf32>
    %38 = tpu.matmul %35, %37, %cst_24 {dimension_numbers = #tpu.dot_dimension_numbers<[1], [0], [0], [1], [0, 0, 1, 1], [], []>} : vector<128x384xbf16>, vector<384x128xbf16>, vector<128x128xf32> -> vector<128x128xf32>
    %39 = arith.addf %33, %38 : vector<128x128xf32>
    %c0_25 = arith.constant 0 : index
    %c0_26 = arith.constant 0 : index
    %40 = vector.load %arg6[%c0_25, %c0_26] : memref<1x128xf32, #tpu.memory_space<vmem>>, vector<1x128xf32>
    %41 = vector.broadcast %40 : vector<1x128xf32> to vector<128x128xf32>
    %42 = arith.addf %39, %41 : vector<128x128xf32>
    %cst_27 = arith.constant 0.000000e+00 : f32
    %43 = vector.broadcast %cst_27 : f32 to vector<128x128xf32>
    %44 = arith.maximumf %42, %43 : vector<128x128xf32>
    %45 = vector.shape_cast %44 : vector<128x128xf32> to vector<1x8x16x128xf32>
    %c0_28 = arith.constant 0 : index
    %c0_29 = arith.constant 0 : index
    %c0_30 = arith.constant 0 : index
    %c0_31 = arith.constant 0 : index
    %46 = vector.load %arg7[%c0_28, %c0_29, %c0_30, %c0_31] : memref<1x8x16x128xf32, #tpu.memory_space<vmem>>, vector<1x8x16x128xf32>
    tpu.vector_store %arg7[%c0_28, %c0_29, %c0_30, %c0_31], %45 {strides = array<i32>} : memref<1x8x16x128xf32, #tpu.memory_space<vmem>>, vector<1x8x16x128xf32>,
    return
  }
  func.func @transform_0(%arg0: i32, %arg1: i32) -> (i32, i32, i32, i32) {
    %c8_i32 = arith.constant 8 : i32
    %0 = arith.muli %arg1, %c8_i32 : i32
    %c1_i32 = arith.constant 1 : i32
    %1 = arith.subi %0, %c1_i32 : i32
    %c0_i32 = arith.constant 0 : i32
    %2 = arith.maxsi %1, %c0_i32 : i32
    %c0_i32_0 = arith.constant 0 : i32
    %c0_i32_1 = arith.constant 0 : i32
    %c0_i32_2 = arith.constant 0 : i32
    return %arg0, %2, %c0_i32_0, %c0_i32_1 : i32, i32, i32, i32
  }
  func.func @transform_1(%arg0: i32, %arg1: i32) -> (i32, i32, i32, i32) {
    %c0_i32 = arith.constant 0 : i32
    %c0_i32_0 = arith.constant 0 : i32
    %c0_i32_1 = arith.constant 0 : i32
    return %arg0, %arg1, %c0_i32, %c0_i32_0 : i32, i32, i32, i32
  }
  func.func @transform_2(%arg0: i32, %arg1: i32) -> (i32, i32, i32, i32) {
    %c1_i32 = arith.constant 1 : i32
    %0 = arith.addi %arg1, %c1_i32 : i32
    %c8_i32 = arith.constant 8 : i32
    %1 = arith.muli %0, %c8_i32 : i32
    %c15_i32 = arith.constant 15 : i32
    %2 = arith.minsi %1, %c15_i32 : i32
    %c0_i32 = arith.constant 0 : i32
    %c0_i32_0 = arith.constant 0 : i32
    %c0_i32_1 = arith.constant 0 : i32
    return %arg0, %2, %c0_i32, %c0_i32_0 : i32, i32, i32, i32
  }
  func.func @transform_3(%arg0: i32, %arg1: i32) -> (i32, i32, i32) {
    %c0_i32 = arith.constant 0 : i32
    %c0_i32_0 = arith.constant 0 : i32
    %c0_i32_1 = arith.constant 0 : i32
    %c0_i32_2 = arith.constant 0 : i32
    return %c0_i32, %c0_i32_0, %c0_i32_1 : i32, i32, i32
  }
  func.func @transform_4(%arg0: i32, %arg1: i32) -> (i32, i32) {
    %c0_i32 = arith.constant 0 : i32
    %c0_i32_0 = arith.constant 0 : i32
    %c0_i32_1 = arith.constant 0 : i32
    return %c0_i32, %c0_i32_0 : i32, i32
  }
  func.func @transform_5(%arg0: i32, %arg1: i32) -> (i32, i32, i32, i32) {
    %c0_i32 = arith.constant 0 : i32
    %c0_i32_0 = arith.constant 0 : i32
    %c0_i32_1 = arith.constant 0 : i32
    return %arg0, %arg1, %c0_i32, %c0_i32_0 : i32, i32, i32, i32
  }
}

</mosaic_0001>

<llo_original>
// kernel: tile.8
$region0: #{tile.8}
  #allocation0 [shape = 's32[1]{0}', space=sflag, size = 0x4, scoped, tag = 'scoped memory for tile.8']
  %s0 = inlined_call_operand.vmem [shape: f32[128], index: 0, kind: input, shape index: {}]
  %s1 = inlined_call_operand.vmem [shape: f32[4,128], index: 1, kind: output, shape index: {}]
  // Predicated region
  $region2: #{tile.8} parent=0 // pred_check
    _
  $region3: #{tile.8} parent=0 // pred_check_branch
    %3 = sbr.rel (0) target = $region5
  $region4: #{tile.8} parent=0 // pred_region
    _
  $region5: #{tile.8} parent=0 // pred_fallthru
    _
  %v4 = vld [vmem:[%s0] ss:$0 sm:$0xff]
  %5 = vst [vmem:[%s1] sm:$0xf] %v4

// kernel: _lambda_.3
$region0: #{_lambda_.3}
  #allocation0 [shape = 'u32[]', space=smem, size = 0x4, offset = 0x4, fixed_abs, tag = 'smem constant byte address 0x4 - core index']
  #allocation1 [shape = 'u32[144,128]{1,0:T(1,128)}', space=vmem, size = 0x12000, scoped, tag = 'internal scratch']
  %s0 = inlined_call_operand.vmem [shape: bf16[128,128], index: 0, kind: input, shape index: {}]
  %s1 = inlined_call_operand.vmem [shape: bf16[128,512], index: 1, kind: input, shape index: {}]
  %s2 = inlined_call_operand.vmem [shape: f32[1,512], index: 2, kind: input, shape index: {}]
  %s3 = inlined_call_operand.vmem [shape: bf16[128,512], index: 3, kind: output, shape index: {}]
  %s4 = sld [smem:[#allocation0]]
  $region22: #{_lambda_.3} parent=0
    _
  %s6 = ssub.s32 1, %s4
  %s7 = scalar_select 0, %s6, %s4
  // Predicated region
  $region2: #{_lambda_.3} parent=0 // pred_check
    _
  $region3: #{_lambda_.3} parent=0 // pred_check_branch
    %9 = sbr.rel (0) target = $region5
  $region4: #{_lambda_.3} parent=0 // pred_region
    _
  $region5: #{_lambda_.3} parent=0 // pred_fallthru
    _
  // Predicated region
  $region6: #{_lambda_.3} parent=0 // pred_check
    _
  $region7: #{_lambda_.3} parent=0 // pred_check_branch
    %11 = sbr.rel (0) target = $region9
  $region8: #{_lambda_.3} parent=0 // pred_region
    _
  $region9: #{_lambda_.3} parent=0 // pred_fallthru
    _
  // Predicated region
  $region10: #{_lambda_.3} parent=0 // pred_check
    _
  $region11: #{_lambda_.3} parent=0 // pred_check_branch
    %13 = sbr.rel (0) target = $region13
  $region12: #{_lambda_.3} parent=0 // pred_region
    _
  $region13: #{_lambda_.3} parent=0 // pred_fallthru
    _
  %v15 = vld [vmem:[%s0] sm:$0xf]
  %v16 = vld [vmem:[%s0 + $0x4] sm:$0xf]
  %v17 = vld [vmem:[%s0 + $0x8] sm:$0xf]
  %v18 = vld [vmem:[%s0 + $0xc] sm:$0xf]
  %v19 = vld [vmem:[%s0 + $0x10] sm:$0xf]
  %v20 = vld [vmem:[%s0 + $0x14] sm:$0xf]
  %v21 = vld [vmem:[%s0 + $0x18] sm:$0xf]
  %v22 = vld [vmem:[%s0 + $0x1c] sm:$0xf]
  %v23 = vld [vmem:[%s0 + $0x20] sm:$0xf]
  %v24 = vld [vmem:[%s0 + $0x24] sm:$0xf]
  %v25 = vld [vmem:[%s0 + $0x28] sm:$0xf]
  %v26 = vld [vmem:[%s0 + $0x2c] sm:$0xf]
  %v27 = vld [vmem:[%s0 + $0x30] sm:$0xf]
  %v28 = vld [vmem:[%s0 + $0x34] sm:$0xf]
  %v29 = vld [vmem:[%s0 + $0x38] sm:$0xf]
  %v30 = vld [vmem:[%s0 + $0x3c] sm:$0xf]
  %v31 = vld [vmem:[%s1] sm:$0xff]
  %v32 = vld [vmem:[%s1 + $0x8] sm:$0xff]
  %v33 = vld [vmem:[%s1 + $0x10] sm:$0xff]
  %v34 = vld [vmem:[%s1 + $0x18] sm:$0xff]
  %v35 = vld [vmem:[%s1 + $0x20] sm:$0xff]
  %v36 = vld [vmem:[%s1 + $0x28] sm:$0xff]
  %v37 = vld [vmem:[%s1 + $0x30] sm:$0xff]
  %v38 = vld [vmem:[%s1 + $0x38] sm:$0xff]
  %v39 = vld [vmem:[%s1 + $0x40] sm:$0xff]
  %v40 = vld [vmem:[%s1 + $0x48] sm:$0xff]
  %v41 = vld [vmem:[%s1 + $0x50] sm:$0xff]
  %v42 = vld [vmem:[%s1 + $0x58] sm:$0xff]
  %v43 = vld [vmem:[%s1 + $0x60] sm:$0xff]
  %v44 = vld [vmem:[%s1 + $0x68] sm:$0xff]
  %v45 = vld [vmem:[%s1 + $0x70] sm:$0xff]
  %v46 = vld [vmem:[%s1 + $0x78] sm:$0xff]
  %v47 = vld [vmem:[%s1 + $0x80] sm:$0xff]
  %v48 = vld [vmem:[%s1 + $0x88] sm:$0xff]
  %v49 = vld [vmem:[%s1 + $0x90] sm:$0xff]
  %v50 = vld [vmem:[%s1 + $0x98] sm:$0xff]
  %v51 = vld [vmem:[%s1 + $0xa0] sm:$0xff]
  %v52 = vld [vmem:[%s1 + $0xa8] sm:$0xff]
  %v53 = vld [vmem:[%s1 + $0xb0] sm:$0xff]
  %v54 = vld [vmem:[%s1 + $0xb8] sm:$0xff]
  %v55 = vld [vmem:[%s1 + $0xc0] sm:$0xff]
  %v56 = vld [vmem:[%s1 + $0xc8] sm:$0xff]
  %v57 = vld [vmem:[%s1 + $0xd0] sm:$0xff]
  %v58 = vld [vmem:[%s1 + $0xd8] sm:$0xff]
  %v59 = vld [vmem:[%s1 + $0xe0] sm:$0xff]
  %v60 = vld [vmem:[%s1 + $0xe8] sm:$0xff]
  %v61 = vld [vmem:[%s1 + $0xf0] sm:$0xff]
  %v62 = vld [vmem:[%s1 + $0xf8] sm:$0xff]
  %v63 = vld [vmem:[%s2] sm:$0xf]
  %v65 = vlaneseq
  %v66 = vshrl.u32 %v65, 7
  %v67 = vsub.s32 0, %v66
  %v68 = vrot.slane %v63, %v67
  %v69 = vlaneseq
  %v70 = vshrl.u32 %v69, 7
  %v71 = vsub.s32 1, %v70
  %v72 = vrot.slane %v63, %v71
  %v73 = vlaneseq
  %v74 = vshrl.u32 %v73, 7
  %v75 = vsub.s32 2, %v74
  %v76 = vrot.slane %v63, %v75
  %v77 = vlaneseq
  %v78 = vshrl.u32 %v77, 7
  %v79 = vsub.s32 3, %v78
  %v80 = vrot.slane %v63, %v79
  %v101 = vunpack.c.l.b16 %v15
  %v102 = vunpack.c.l.b16 %v16
  %v103 = vunpack.c.l.b16 %v17
  %v104 = vunpack.c.l.b16 %v18
  %v105 = vunpack.c.l.b16 %v19
  %v106 = vunpack.c.l.b16 %v20
  %v107 = vunpack.c.l.b16 %v21
  %v108 = vunpack.c.l.b16 %v22
  %v109 = vunpack.c.l.b16 %v23
  %v110 = vunpack.c.l.b16 %v24
  %v111 = vunpack.c.l.b16 %v25
  %v112 = vunpack.c.l.b16 %v26
  %v113 = vunpack.c.l.b16 %v27
  %v114 = vunpack.c.l.b16 %v28
  %v115 = vunpack.c.l.b16 %v29
  %v116 = vunpack.c.l.b16 %v30
  %v117 = vpack.c.b16 %v102, %v101
  %v118 = vpack.c.b16 %v104, %v103
  %v119 = vpack.c.b16 %v106, %v105
  %v120 = vpack.c.b16 %v108, %v107
  %v121 = vpack.c.b16 %v110, %v109
  %v122 = vpack.c.b16 %v112, %v111
  %v123 = vpack.c.b16 %v114, %v113
  %v124 = vpack.c.b16 %v116, %v115
  %v165 = vunpack.c.l.b16 %v31
  %v166 = vunpack.c.h.b16 %v31
  %v167 = vunpack.c.l.b16 %v32
  %v168 = vunpack.c.h.b16 %v32
  %v169 = vunpack.c.l.b16 %v33
  %v170 = vunpack.c.h.b16 %v33
  %v171 = vunpack.c.l.b16 %v34
  %v172 = vunpack.c.h.b16 %v34
  %v173 = vunpack.c.l.b16 %v35
  %v174 = vunpack.c.h.b16 %v35
  %v175 = vunpack.c.l.b16 %v36
  %v176 = vunpack.c.h.b16 %v36
  %v177 = vunpack.c.l.b16 %v37
  %v178 = vunpack.c.h.b16 %v37
  %v179 = vunpack.c.l.b16 %v38
  %v180 = vunpack.c.h.b16 %v38
  %v181 = vunpack.c.l.b16 %v39
  %v182 = vunpack.c.h.b16 %v39
  %v183 = vunpack.c.l.b16 %v40
  %v184 = vunpack.c.h.b16 %v40
  %v185 = vunpack.c.l.b16 %v41
  %v186 = vunpack.c.h.b16 %v41
  %v187 = vunpack.c.l.b16 %v42
  %v188 = vunpack.c.h.b16 %v42
  %v189 = vunpack.c.l.b16 %v43
  %v190 = vunpack.c.h.b16 %v43
  %v191 = vunpack.c.l.b16 %v44
  %v192 = vunpack.c.h.b16 %v44
  %v193 = vunpack.c.l.b16 %v45
  %v194 = vunpack.c.h.b16 %v45
  %v195 = vunpack.c.l.b16 %v46
  %v196 = vunpack.c.h.b16 %v46
  %v197 = vunpack.c.l.b16 %v47
  %v198 = vunpack.c.h.b16 %v47
  %v199 = vunpack.c.l.b16 %v48
  %v200 = vunpack.c.h.b16 %v48
  %v201 = vunpack.c.l.b16 %v49
  %v202 = vunpack.c.h.b16 %v49
  %v203 = vunpack.c.l.b16 %v50
  %v204 = vunpack.c.h.b16 %v50
  %v205 = vunpack.c.l.b16 %v51
  %v206 = vunpack.c.h.b16 %v51
  %v207 = vunpack.c.l.b16 %v52
  %v208 = vunpack.c.h.b16 %v52
  %v209 = vunpack.c.l.b16 %v53
  %v210 = vunpack.c.h.b16 %v53
  %v211 = vunpack.c.l.b16 %v54
  %v212 = vunpack.c.h.b16 %v54
  %v213 = vunpack.c.l.b16 %v55
  %v214 = vunpack.c.h.b16 %v55
  %v215 = vunpack.c.l.b16 %v56
  %v216 = vunpack.c.h.b16 %v56
  %v217 = vunpack.c.l.b16 %v57
  %v218 = vunpack.c.h.b16 %v57
  %v219 = vunpack.c.l.b16 %v58
  %v220 = vunpack.c.h.b16 %v58
  %v221 = vunpack.c.l.b16 %v59
  %v222 = vunpack.c.h.b16 %v59
  %v223 = vunpack.c.l.b16 %v60
  %v224 = vunpack.c.h.b16 %v60
  %v225 = vunpack.c.l.b16 %v61
  %v226 = vunpack.c.h.b16 %v61
  %v227 = vunpack.c.l.b16 %v62
  %v228 = vunpack.c.h.b16 %v62
  %v229 = vpack.c.b16 %v169, %v165
  %v230 = vpack.c.b16 %v170, %v166
  %v231 = vpack.c.b16 %v171, %v167
  %v232 = vpack.c.b16 %v172, %v168
  %v233 = vpack.c.b16 %v177, %v173
  %v234 = vpack.c.b16 %v178, %v174
  %v235 = vpack.c.b16 %v179, %v175
  %v236 = vpack.c.b16 %v180, %v176
  %v237 = vpack.c.b16 %v185, %v181
  %v238 = vpack.c.b16 %v186, %v182
  %v239 = vpack.c.b16 %v187, %v183
  %v240 = vpack.c.b16 %v188, %v184
  %v241 = vpack.c.b16 %v193, %v189
  %v242 = vpack.c.b16 %v194, %v190
  %v243 = vpack.c.b16 %v195, %v191
  %v244 = vpack.c.b16 %v196, %v192
  %v245 = vpack.c.b16 %v201, %v197
  %v246 = vpack.c.b16 %v202, %v198
  %v247 = vpack.c.b16 %v203, %v199
  %v248 = vpack.c.b16 %v204, %v200
  %v249 = vpack.c.b16 %v209, %v205
  %v250 = vpack.c.b16 %v210, %v206
  %v251 = vpack.c.b16 %v211, %v207
  %v252 = vpack.c.b16 %v212, %v208
  %v253 = vpack.c.b16 %v217, %v213
  %v254 = vpack.c.b16 %v218, %v214
  %v255 = vpack.c.b16 %v219, %v215
  %v256 = vpack.c.b16 %v220, %v216
  %v257 = vpack.c.b16 %v225, %v221
  %v258 = vpack.c.b16 %v226, %v222
  %v259 = vpack.c.b16 %v227, %v223
  %v260 = vpack.c.b16 %v228, %v224
  %293 = vmatprep.subr.bf16.mxu0 %v258
  %294 = vmatpush1.bf16.msra.mxu0 %v257
  %295 = vmatprep.subr.bf16.mxu0 %v254
  %296 = vmatpush1.bf16.msra.mxu0 %v253
  %297 = vmatprep.subr.bf16.mxu0 %v250
  %298 = vmatpush1.bf16.msra.mxu0 %v249
  %299 = vmatprep.subr.bf16.mxu0 %v246
  %300 = vmatpush1.bf16.msra.mxu0 %v245
  %301 = vmatprep.subr.bf16.mxu0 %v242
  %302 = vmatpush1.bf16.msra.mxu0 %v241
  %303 = vmatprep.subr.bf16.mxu0 %v238
  %304 = vmatpush1.bf16.msra.mxu0 %v237
  %305 = vmatprep.subr.bf16.mxu0 %v234
  %306 = vmatpush1.bf16.msra.mxu0 %v233
  %307 = vmatprep.subr.bf16.mxu0 %v230
  %308 = vmatpush1.bf16.msra.mxu0 %v229
  %309 = vmatprep.subr.bf16.mxu0 0
  %310 = vmatpush2.bf16.msra.mxu0 0
  %311 = vmatprep.subr.bf16.mxu0 0
  %312 = vmatpush2.bf16.msra.mxu0 0
  %313 = vmatprep.subr.bf16.mxu0 0
  %314 = vmatpush2.bf16.msra.mxu0 0
  %315 = vmatprep.subr.bf16.mxu0 0
  %316 = vmatpush2.bf16.msra.mxu0 0
  %317 = vmatprep.subr.bf16.mxu0 0
  %318 = vmatpush2.bf16.msra.mxu0 0
  %319 = vmatprep.subr.bf16.mxu0 0
  %320 = vmatpush2.bf16.msra.mxu0 0
  %321 = vmatprep.subr.bf16.mxu0 0
  %322 = vmatpush2.bf16.msra.mxu0 0
  %323 = vmatprep.subr.bf16.mxu0 0
  %324 = vmatpush2.bf16.msra.mxu0 0
  %325 = vmatprep.mubr.bf16.mxu0 0
  %326 = vmatmul.mubr.bf16.gmra.mxu0 %v117
  %v327 = vpop.f32.mrf.mxu0
  %v328 = vadd.f32 %v68, %v327
  %v329 = vpop.f32.mrf.mxu0
  %v330 = vadd.f32 %v72, %v329
  %v331 = vpop.f32.mrf.mxu0
  %v332 = vadd.f32 %v68, %v331
  %v333 = vpop.f32.mrf.mxu0
  %v334 = vadd.f32 %v72, %v333
  %335 = vmatprep.mubr.bf16.mxu0 0
  %336 = vmatmul.mubr.bf16.gmra.mxu0 %v118
  %v337 = vpop.f32.mrf.mxu0
  %v338 = vadd.f32 %v68, %v337
  %v339 = vpop.f32.mrf.mxu0
  %v340 = vadd.f32 %v72, %v339
  %v341 = vpop.f32.mrf.mxu0
  %v342 = vadd.f32 %v68, %v341
  %v343 = vpop.f32.mrf.mxu0
  %v344 = vadd.f32 %v72, %v343
  %345 = vmatprep.mubr.bf16.mxu0 0
  %346 = vmatmul.mubr.bf16.gmra.mxu0 %v119
  %v347 = vpop.f32.mrf.mxu0
  %v348 = vadd.f32 %v68, %v347
  %v349 = vpop.f32.mrf.mxu0
  %v350 = vadd.f32 %v72, %v349
  %v351 = vpop.f32.mrf.mxu0
  %v352 = vadd.f32 %v68, %v351
  %v353 = vpop.f32.mrf.mxu0
  %v354 = vadd.f32 %v72, %v353
  %355 = vmatprep.mubr.bf16.mxu0 0
  %356 = vmatmul.mubr.bf16.gmra.mxu0 %v120
  %v357 = vpop.f32.mrf.mxu0
  %v358 = vadd.f32 %v68, %v357
  %v359 = vpop.f32.mrf.mxu0
  %v360 = vadd.f32 %v72, %v359
  %v361 = vpop.f32.mrf.mxu0
  %v362 = vadd.f32 %v68, %v361
  %v363 = vpop.f32.mrf.mxu0
  %v364 = vadd.f32 %v72, %v363
  %365 = vmatprep.mubr.bf16.mxu0 0
  %366 = vmatmul.mubr.bf16.gmra.mxu0 %v121
  %v367 = vpop.f32.mrf.mxu0
  %v368 = vadd.f32 %v68, %v367
  %v369 = vpop.f32.mrf.mxu0
  %v370 = vadd.f32 %v72, %v369
  %v371 = vpop.f32.mrf.mxu0
  %v372 = vadd.f32 %v68, %v371
  %v373 = vpop.f32.mrf.mxu0
  %v374 = vadd.f32 %v72, %v373
  %375 = vmatprep.mubr.bf16.mxu0 0
  %376 = vmatmul.mubr.bf16.gmra.mxu0 %v122
  %v377 = vpop.f32.mrf.mxu0
  %v378 = vadd.f32 %v68, %v377
  %v379 = vpop.f32.mrf.mxu0
  %v380 = vadd.f32 %v72, %v379
  %v381 = vpop.f32.mrf.mxu0
  %v382 = vadd.f32 %v68, %v381
  %v383 = vpop.f32.mrf.mxu0
  %v384 = vadd.f32 %v72, %v383
  %385 = vmatprep.mubr.bf16.mxu0 0
  %386 = vmatmul.mubr.bf16.gmra.mxu0 %v123
  %v387 = vpop.f32.mrf.mxu0
  %v388 = vadd.f32 %v68, %v387
  %v389 = vpop.f32.mrf.mxu0
  %v390 = vadd.f32 %v72, %v389
  %v391 = vpop.f32.mrf.mxu0
  %v392 = vadd.f32 %v68, %v391
  %v393 = vpop.f32.mrf.mxu0
  %v394 = vadd.f32 %v72, %v393
  %395 = vmatprep.mubr.bf16.mxu0 0
  %396 = vmatmul.mubr.bf16.gmra.mxu0 %v124
  %v397 = vpop.f32.mrf.mxu0
  %v398 = vadd.f32 %v68, %v397
  %v399 = vpop.f32.mrf.mxu0
  %v400 = vadd.f32 %v72, %v399
  %v401 = vpop.f32.mrf.mxu0
  %v402 = vadd.f32 %v68, %v401
  %v403 = vpop.f32.mrf.mxu0
  %v404 = vadd.f32 %v72, %v403
  %405 = vdwg.mxu0
  %406 = vmatprep.subr.bf16.mxu0 %v260
  %407 = vmatpush1.bf16.msra.mxu0 %v259
  %408 = vmatprep.subr.bf16.mxu0 %v256
  %409 = vmatpush1.bf16.msra.mxu0 %v255
  %410 = vmatprep.subr.bf16.mxu0 %v252
  %411 = vmatpush1.bf16.msra.mxu0 %v251
  %412 = vmatprep.subr.bf16.mxu0 %v248
  %413 = vmatpush1.bf16.msra.mxu0 %v247
  %414 = vmatprep.subr.bf16.mxu0 %v244
  %415 = vmatpush1.bf16.msra.mxu0 %v243
  %416 = vmatprep.subr.bf16.mxu0 %v240
  %417 = vmatpush1.bf16.msra.mxu0 %v239
  %418 = vmatprep.subr.bf16.mxu0 %v236
  %419 = vmatpush1.bf16.msra.mxu0 %v235
  %420 = vmatprep.subr.bf16.mxu0 %v232
  %421 = vmatpush1.bf16.msra.mxu0 %v231
  %422 = vmatprep.subr.bf16.mxu0 0
  %423 = vmatpush2.bf16.msra.mxu0 0
  %424 = vmatprep.subr.bf16.mxu0 0
  %425 = vmatpush2.bf16.msra.mxu0 0
  %426 = vmatprep.subr.bf16.mxu0 0
  %427 = vmatpush2.bf16.msra.mxu0 0
  %428 = vmatprep.subr.bf16.mxu0 0
  %429 = vmatpush2.bf16.msra.mxu0 0
  %430 = vmatprep.subr.bf16.mxu0 0
  %431 = vmatpush2.bf16.msra.mxu0 0
  %432 = vmatprep.subr.bf16.mxu0 0
  %433 = vmatpush2.bf16.msra.mxu0 0
  %434 = vmatprep.subr.bf16.mxu0 0
  %435 = vmatpush2.bf16.msra.mxu0 0
  %436 = vmatprep.subr.bf16.mxu0 0
  %437 = vmatpush2.bf16.msra.mxu0 0
  %438 = vmatprep.mubr.bf16.mxu0 0
  %439 = vmatmul.mubr.bf16.gmra.mxu0 %v117
  %v440 = vpop.f32.mrf.mxu0
  %v441 = vadd.f32 %v76, %v440
  %v442 = vpop.f32.mrf.mxu0
  %v443 = vadd.f32 %v80, %v442
  %v444 = vpop.f32.mrf.mxu0
  %v445 = vadd.f32 %v76, %v444
  %v446 = vpop.f32.mrf.mxu0
  %v447 = vadd.f32 %v80, %v446
  %448 = vmatprep.mubr.bf16.mxu0 0
  %449 = vmatmul.mubr.bf16.gmra.mxu0 %v118
  %v450 = vpop.f32.mrf.mxu0
  %v451 = vadd.f32 %v76, %v450
  %v452 = vpop.f32.mrf.mxu0
  %v453 = vadd.f32 %v80, %v452
  %v454 = vpop.f32.mrf.mxu0
  %v455 = vadd.f32 %v76, %v454
  %v456 = vpop.f32.mrf.mxu0
  %v457 = vadd.f32 %v80, %v456
  %458 = vmatprep.mubr.bf16.mxu0 0
  %459 = vmatmul.mubr.bf16.gmra.mxu0 %v119
  %v460 = vpop.f32.mrf.mxu0
  %v461 = vadd.f32 %v76, %v460
  %v462 = vpop.f32.mrf.mxu0
  %v463 = vadd.f32 %v80, %v462
  %v464 = vpop.f32.mrf.mxu0
  %v465 = vadd.f32 %v76, %v464
  %v466 = vpop.f32.mrf.mxu0
  %v467 = vadd.f32 %v80, %v466
  %468 = vmatprep.mubr.bf16.mxu0 0
  %469 = vmatmul.mubr.bf16.gmra.mxu0 %v120
  %v470 = vpop.f32.mrf.mxu0
  %v471 = vadd.f32 %v76, %v470
  %v472 = vpop.f32.mrf.mxu0
  %v473 = vadd.f32 %v80, %v472
  %v474 = vpop.f32.mrf.mxu0
  %v475 = vadd.f32 %v76, %v474
  %v476 = vpop.f32.mrf.mxu0
  %v477 = vadd.f32 %v80, %v476
  %478 = vmatprep.mubr.bf16.mxu0 0
  %479 = vmatmul.mubr.bf16.gmra.mxu0 %v121
  %v480 = vpop.f32.mrf.mxu0
  %v481 = vadd.f32 %v76, %v480
  %v482 = vpop.f32.mrf.mxu0
  %v483 = vadd.f32 %v80, %v482
  %v484 = vpop.f32.mrf.mxu0
  %v485 = vadd.f32 %v76, %v484
  %v486 = vpop.f32.mrf.mxu0
  %v487 = vadd.f32 %v80, %v486
  %488 = vmatprep.mubr.bf16.mxu0 0
  %489 = vmatmul.mubr.bf16.gmra.mxu0 %v122
  %v490 = vpop.f32.mrf.mxu0
  %v491 = vadd.f32 %v76, %v490
  %v492 = vpop.f32.mrf.mxu0
  %v493 = vadd.f32 %v80, %v492
  %v494 = vpop.f32.mrf.mxu0
  %v495 = vadd.f32 %v76, %v494
  %v496 = vpop.f32.mrf.mxu0
  %v497 = vadd.f32 %v80, %v496
  %498 = vmatprep.mubr.bf16.mxu0 0
  %499 = vmatmul.mubr.bf16.gmra.mxu0 %v123
  %v500 = vpop.f32.mrf.mxu0
  %v501 = vadd.f32 %v76, %v500
  %v502 = vpop.f32.mrf.mxu0
  %v503 = vadd.f32 %v80, %v502
  %v504 = vpop.f32.mrf.mxu0
  %v505 = vadd.f32 %v76, %v504
  %v506 = vpop.f32.mrf.mxu0
  %v507 = vadd.f32 %v80, %v506
  %508 = vmatprep.mubr.bf16.mxu0 0
  %509 = vmatmul.mubr.bf16.gmra.mxu0 %v124
  %v510 = vpop.f32.mrf.mxu0
  %v511 = vadd.f32 %v76, %v510
  %v512 = vpop.f32.mrf.mxu0
  %v513 = vadd.f32 %v80, %v512
  %v514 = vpop.f32.mrf.mxu0
  %v515 = vadd.f32 %v76, %v514
  %v516 = vpop.f32.mrf.mxu0
  %v517 = vadd.f32 %v80, %v516
  %518 = vdwg.mxu0
  %v519 = vpack.c.bf16 %v332, %v328
  %v520 = vpack.c.bf16 %v334, %v330
  %v521 = vpack.c.bf16 %v445, %v441
  %v522 = vpack.c.bf16 %v447, %v443
  %v523 = vpack.c.bf16 %v342, %v338
  %v524 = vpack.c.bf16 %v344, %v340
  %v525 = vpack.c.bf16 %v455, %v451
  %v526 = vpack.c.bf16 %v457, %v453
  %v527 = vpack.c.bf16 %v352, %v348
  %v528 = vpack.c.bf16 %v354, %v350
  %v529 = vpack.c.bf16 %v465, %v461
  %v530 = vpack.c.bf16 %v467, %v463
  %v531 = vpack.c.bf16 %v362, %v358
  %v532 = vpack.c.bf16 %v364, %v360
  %v533 = vpack.c.bf16 %v475, %v471
  %v534 = vpack.c.bf16 %v477, %v473
  %v535 = vpack.c.bf16 %v372, %v368
  %v536 = vpack.c.bf16 %v374, %v370
  %v537 = vpack.c.bf16 %v485, %v481
  %v538 = vpack.c.bf16 %v487, %v483
  %v539 = vpack.c.bf16 %v382, %v378
  %v540 = vpack.c.bf16 %v384, %v380
  %v541 = vpack.c.bf16 %v495, %v491
  %v542 = vpack.c.bf16 %v497, %v493
  %v543 = vpack.c.bf16 %v392, %v388
  %v544 = vpack.c.bf16 %v394, %v390
  %v545 = vpack.c.bf16 %v505, %v501
  %v546 = vpack.c.bf16 %v507, %v503
  %v547 = vpack.c.bf16 %v402, %v398
  %v548 = vpack.c.bf16 %v404, %v400
  %v549 = vpack.c.bf16 %v515, %v511
  %v550 = vpack.c.bf16 %v517, %v513
  %v583 = vunpack.c.l.b16 %v519
  %v584 = vunpack.c.l.b16 %v520
  %v585 = vunpack.c.l.b16 %v521
  %v586 = vunpack.c.l.b16 %v522
  %v587 = vunpack.c.h.b16 %v519
  %v588 = vunpack.c.h.b16 %v520
  %v589 = vunpack.c.h.b16 %v521
  %v590 = vunpack.c.h.b16 %v522
  %v591 = vunpack.c.l.b16 %v523
  %v592 = vunpack.c.l.b16 %v524
  %v593 = vunpack.c.l.b16 %v525
  %v594 = vunpack.c.l.b16 %v526
  %v595 = vunpack.c.h.b16 %v523
  %v596 = vunpack.c.h.b16 %v524
  %v597 = vunpack.c.h.b16 %v525
  %v598 = vunpack.c.h.b16 %v526
  %v599 = vunpack.c.l.b16 %v527
  %v600 = vunpack.c.l.b16 %v528
  %v601 = vunpack.c.l.b16 %v529
  %v602 = vunpack.c.l.b16 %v530
  %v603 = vunpack.c.h.b16 %v527
  %v604 = vunpack.c.h.b16 %v528
  %v605 = vunpack.c.h.b16 %v529
  %v606 = vunpack.c.h.b16 %v530
  %v607 = vunpack.c.l.b16 %v531
  %v608 = vunpack.c.l.b16 %v532
  %v609 = vunpack.c.l.b16 %v533
  %v610 = vunpack.c.l.b16 %v534
  %v611 = vunpack.c.h.b16 %v531
  %v612 = vunpack.c.h.b16 %v532
  %v613 = vunpack.c.h.b16 %v533
  %v614 = vunpack.c.h.b16 %v534
  %v615 = vunpack.c.l.b16 %v535
  %v616 = vunpack.c.l.b16 %v536
  %v617 = vunpack.c.l.b16 %v537
  %v618 = vunpack.c.l.b16 %v538
  %v619 = vunpack.c.h.b16 %v535
  %v620 = vunpack.c.h.b16 %v536
  %v621 = vunpack.c.h.b16 %v537
  %v622 = vunpack.c.h.b16 %v538
  %v623 = vunpack.c.l.b16 %v539
  %v624 = vunpack.c.l.b16 %v540
  %v625 = vunpack.c.l.b16 %v541
  %v626 = vunpack.c.l.b16 %v542
  %v627 = vunpack.c.h.b16 %v539
  %v628 = vunpack.c.h.b16 %v540
  %v629 = vunpack.c.h.b16 %v541
  %v630 = vunpack.c.h.b16 %v542
  %v631 = vunpack.c.l.b16 %v543
  %v632 = vunpack.c.l.b16 %v544
  %v633 = vunpack.c.l.b16 %v545
  %v634 = vunpack.c.l.b16 %v546
  %v635 = vunpack.c.h.b16 %v543
  %v636 = vunpack.c.h.b16 %v544
  %v637 = vunpack.c.h.b16 %v545
  %v638 = vunpack.c.h.b16 %v546
  %v639 = vunpack.c.l.b16 %v547
  %v640 = vunpack.c.l.b16 %v548
  %v641 = vunpack.c.l.b16 %v549
  %v642 = vunpack.c.l.b16 %v550
  %v643 = vunpack.c.h.b16 %v547
  %v644 = vunpack.c.h.b16 %v548
  %v645 = vunpack.c.h.b16 %v549
  %v646 = vunpack.c.h.b16 %v550
  %v647 = vpack.c.b16 %v584, %v583
  %v648 = vpack.c.b16 %v586, %v585
  %v649 = vpack.c.b16 %v588, %v587
  %v650 = vpack.c.b16 %v590, %v589
  %v651 = vpack.c.b16 %v592, %v591
  %v652 = vpack.c.b16 %v594, %v593
  %v653 = vpack.c.b16 %v596, %v595
  %v654 = vpack.c.b16 %v598, %v597
  %v655 = vpack.c.b16 %v600, %v599
  %v656 = vpack.c.b16 %v602, %v601
  %v657 = vpack.c.b16 %v604, %v603
  %v658 = vpack.c.b16 %v606, %v605
  %v659 = vpack.c.b16 %v608, %v607
  %v660 = vpack.c.b16 %v610, %v609
  %v661 = vpack.c.b16 %v612, %v611
  %v662 = vpack.c.b16 %v614, %v613
  %v663 = vpack.c.b16 %v616, %v615
  %v664 = vpack.c.b16 %v618, %v617
  %v665 = vpack.c.b16 %v620, %v619
  %v666 = vpack.c.b16 %v622, %v621
  %v667 = vpack.c.b16 %v624, %v623
  %v668 = vpack.c.b16 %v626, %v625
  %v669 = vpack.c.b16 %v628, %v627
  %v670 = vpack.c.b16 %v630, %v629
  %v671 = vpack.c.b16 %v632, %v631
  %v672 = vpack.c.b16 %v634, %v633
  %v673 = vpack.c.b16 %v636, %v635
  %v674 = vpack.c.b16 %v638, %v637
  %v675 = vpack.c.b16 %v640, %v639
  %v676 = vpack.c.b16 %v642, %v641
  %v677 = vpack.c.b16 %v644, %v643
  %v678 = vpack.c.b16 %v646, %v645
  %711 = vst [vmem:[%s3] sm:$0xff] %v647
  %712 = vst [vmem:[%s3 + $0x8] sm:$0xff] %v648
  %713 = vst [vmem:[%s3 + $0x10] sm:$0xff] %v649
  %714 = vst [vmem:[%s3 + $0x18] sm:$0xff] %v650
  %715 = vst [vmem:[%s3 + $0x20] sm:$0xff] %v651
  %716 = vst [vmem:[%s3 + $0x28] sm:$0xff] %v652
  %717 = vst [vmem:[%s3 + $0x30] sm:$0xff] %v653
  %718 = vst [vmem:[%s3 + $0x38] sm:$0xff] %v654
  %719 = vst [vmem:[%s3 + $0x40] sm:$0xff] %v655
  %720 = vst [vmem:[%s3 + $0x48] sm:$0xff] %v656
  %721 = vst [vmem:[%s3 + $0x50] sm:$0xff] %v657
  %722 = vst [vmem:[%s3 + $0x58] sm:$0xff] %v658
  %723 = vst [vmem:[%s3 + $0x60] sm:$0xff] %v659
  %724 = vst [vmem:[%s3 + $0x68] sm:$0xff] %v660
  %725 = vst [vmem:[%s3 + $0x70] sm:$0xff] %v661
  %726 = vst [vmem:[%s3 + $0x78] sm:$0xff] %v662
  %727 = vst [vmem:[%s3 + $0x80] sm:$0xff] %v663
  %728 = vst [vmem:[%s3 + $0x88] sm:$0xff] %v664
  %729 = vst [vmem:[%s3 + $0x90] sm:$0xff] %v665
  %730 = vst [vmem:[%s3 + $0x98] sm:$0xff] %v666
  %731 = vst [vmem:[%s3 + $0xa0] sm:$0xff] %v667
  %732 = vst [vmem:[%s3 + $0xa8] sm:$0xff] %v668
  %733 = vst [vmem:[%s3 + $0xb0] sm:$0xff] %v669
  %734 = vst [vmem:[%s3 + $0xb8] sm:$0xff] %v670
  %735 = vst [vmem:[%s3 + $0xc0] sm:$0xff] %v671
  %736 = vst [vmem:[%s3 + $0xc8] sm:$0xff] %v672
  %737 = vst [vmem:[%s3 + $0xd0] sm:$0xff] %v673
  %738 = vst [vmem:[%s3 + $0xd8] sm:$0xff] %v674
  %739 = vst [vmem:[%s3 + $0xe0] sm:$0xff] %v675
  %740 = vst [vmem:[%s3 + $0xe8] sm:$0xff] %v676
  %741 = vst [vmem:[%s3 + $0xf0] sm:$0xff] %v677
  %742 = vst [vmem:[%s3 + $0xf8] sm:$0xff] %v678
  // Predicated region
  $region14: #{_lambda_.3} parent=0 // pred_check
    _
  $region15: #{_lambda_.3} parent=0 // pred_check_branch
    %744 = sbr.rel (0) target = $region17
  $region16: #{_lambda_.3} parent=0 // pred_region
    _
  $region17: #{_lambda_.3} parent=0 // pred_fallthru
    _
  // Predicated region
  $region18: #{_lambda_.3} parent=0 // pred_check
    _
  $region19: #{_lambda_.3} parent=0 // pred_check_branch
    %746 = sbr.rel (0) target = $region21
  $region20: #{_lambda_.3} parent=0 // pred_region
    _
  $region21: #{_lambda_.3} parent=0 // pred_fallthru
    _

// kernel: _lambda_.4
$region0: #{_lambda_.4}
  #allocation0 [shape = 'u32[]', space=smem, size = 0x4, offset = 0x4, fixed_abs, tag = 'smem constant byte address 0x4 - core index']
  #allocation1 [shape = 'u32[144,128]{1,0:T(1,128)}', space=vmem, size = 0x12000, scoped, tag = 'internal scratch']
  %s0 = inlined_call_operand.vmem [shape: bf16[2,16,16,128], index: 0, kind: input, shape index: {}, may-alias: {0,1,2}]
  %s1 = inlined_call_operand.vmem [shape: bf16[2,16,16,128], index: 1, kind: input, shape index: {}, may-alias: {0,1,2}]
  %s2 = inlined_call_operand.vmem [shape: bf16[2,16,16,128], index: 2, kind: input, shape index: {}, may-alias: {0,1,2}]
  %s3 = inlined_call_operand.vmem [shape: bf16[3,384,128], index: 3, kind: input, shape index: {}]
  %s4 = inlined_call_operand.vmem [shape: f32[1,128], index: 4, kind: input, shape index: {}]
  %s5 = inlined_call_operand.vmem [shape: bf16[2,16,16,128], index: 5, kind: output, shape index: {}]
  %s6 = sld [smem:[#allocation0]]
  $region53: #{_lambda_.4} parent=0
    _
  %s8 = ssub.s32 1, %s6
  %s9 = scalar_select 0, %s8, %s6
  loop: start=0, step=1, limit=6
  $region2: #{_lambda_.4} parent=0 // loop_pre_header
    _
  $region3: #{_lambda_.4} parent=0 // loop_header
    %s11 = sphi 0, %s15
    %p12 = scmp.ge.s32.totalorder %s11, 6
    %s18 = sphi 0, %s30
    %s19 = sphi 0, %s26
    %s20 = sphi 0, %s18
    %s21 = sphi 0, %s19
    %s22 = sphi 0, %s20
    %s23 = sphi 0, %s21
    %s43 = sphi 0, %s45
    %s46 = sphi 0, %s43
    %s47 = sphi 0, %s46
    %s63 = sphi 0, %s47
    %s71 = sphi 0, %s73
    %s74 = sphi 0, %s71
    %s75 = sphi 0, %s74
    %s91 = sphi 0, %s75
    %s107 = sphi 0, %s109
    %s110 = sphi 0, %s107
    %s111 = sphi 0, %s110
    %s127 = sphi 0, %s111
    %s131 = sphi 0, %s131
    %s133 = sphi 0, %s131
    %s134 = sphi 0, %s133
    %s148 = sphi 0, %s134
    %s152 = sphi 0, %s152
    %s154 = sphi 0, %s152
    %s155 = sphi 0, %s154
    %s169 = sphi 0, %s155
    %s177 = sphi 0, %s179
    %s180 = sphi 0, %s177
    %s181 = sphi 0, %s180
    %s197 = sphi 0, %s181
  $region4: #{_lambda_.4} parent=0 // loop_header_branch
    %14 = sbr.rel (%p12) target = $region8
  $region5: #{_lambda_.4} parent=0 // loop_body
    %s16 = ssub.s32 %s11, 1
    %s17 = ssub.s32 %s11, 2
    %s24 = sadd.s32 1, %s19
    %p25 = scmp.ge.s32.totalorder %s24, 2
    %s26 = scalar_select %p25, 0, %s24
    %s27 = sadd.s32 1, %s18
    %s28 = scalar_select %p25, %s27, %s18
    %p29 = scmp.ge.s32.totalorder %s28, 2
    %s30 = scalar_select %p29, 0, %s28
    %s31 = smul.u32 %s19, 8
    %s32 = ssub.s32 %s31, 1
    %p33 = scmp.gt.s32.totalorder %s32, 0
    %s34 = scalar_select %p33, %s32, 0
    %s35 = smul.u32 %s26, 8
    %s36 = ssub.s32 %s35, 1
    %p37 = scmp.gt.s32.totalorder %s36, 0
    %s38 = scalar_select %p37, %s36, 0
    %s39 = ssub.s32 %s18, %s30
    %s40 = ssub.s32 %s34, %s38
    %s41 = sor.u32 %s39, %s40
    %p42 = scmp.eq.s32.totalorder %s41, 0
    %s44 = sadd.s32 %s43, 1
    %s45 = scalar_select %p42, %s43, %s44
    %p48 = pneg %p42
    %p49 = scmp.eq.s32.totalorder %s11, 3
    %p50 = por %p48, %p49
    %p51 = scmp.ne.s32.totalorder %s43, %s46
    %p52 = scmp.eq.s32.totalorder %s11, 0
    %p53 = por %p51, %p52
    %p54 = scmp.ne.s32.totalorder %s43, %s46
    %p55 = scmp.eq.s32.totalorder %s16, 3
    %p56 = por %p54, %p55
    %p57 = scmp.ne.s32.totalorder %s46, %s47
    %p58 = scmp.eq.s32.totalorder %s16, 0
    %p59 = por %p57, %p58
    %p60 = scmp.ne.s32.totalorder %s46, %s47
    %p61 = scmp.eq.s32.totalorder %s17, 3
    %p62 = por %p60, %p61
    %p64 = scmp.ne.s32.totalorder %s47, %s63
    %p65 = scmp.eq.s32.totalorder %s17, 0
    %p66 = por %p64, %p65
    %s67 = ssub.s32 %s18, %s30
    %s68 = ssub.s32 %s19, %s26
    %s69 = sor.u32 %s67, %s68
    %p70 = scmp.eq.s32.totalorder %s69, 0
    %s72 = sadd.s32 %s71, 1
    %s73 = scalar_select %p70, %s71, %s72
    %p76 = pneg %p70
    %p77 = scmp.eq.s32.totalorder %s11, 3
    %p78 = por %p76, %p77
    %p79 = scmp.ne.s32.totalorder %s71, %s74
    %p80 = scmp.eq.s32.totalorder %s11, 0
    %p81 = por %p79, %p80
    %p82 = scmp.ne.s32.totalorder %s71, %s74
    %p83 = scmp.eq.s32.totalorder %s16, 3
    %p84 = por %p82, %p83
    %p85 = scmp.ne.s32.totalorder %s74, %s75
    %p86 = scmp.eq.s32.totalorder %s16, 0
    %p87 = por %p85, %p86
    %p88 = scmp.ne.s32.totalorder %s74, %s75
    %p89 = scmp.eq.s32.totalorder %s17, 3
    %p90 = por %p88, %p89
    %p92 = scmp.ne.s32.totalorder %s75, %s91
    %p93 = scmp.eq.s32.totalorder %s17, 0
    %p94 = por %p92, %p93
    %s95 = sadd.s32 %s19, 1
    %s96 = smul.u32 %s95, 8
    %p97 = scmp.lt.s32.totalorder %s96, 15
    %s98 = scalar_select %p97, %s96, 15
    %s99 = sadd.s32 %s26, 1
    %s100 = smul.u32 %s99, 8
    %p101 = scmp.lt.s32.totalorder %s100, 15
    %s102 = scalar_select %p101, %s100, 15
    %s103 = ssub.s32 %s18, %s30
    %s104 = ssub.s32 %s98, %s102
    %s105 = sor.u32 %s103, %s104
    %p106 = scmp.eq.s32.totalorder %s105, 0
    %s108 = sadd.s32 %s107, 1
    %s109 = scalar_select %p106, %s107, %s108
    %p112 = pneg %p106
    %p113 = scmp.eq.s32.totalorder %s11, 3
    %p114 = por %p112, %p113
    %p115 = scmp.ne.s32.totalorder %s107, %s110
    %p116 = scmp.eq.s32.totalorder %s11, 0
    %p117 = por %p115, %p116
    %p118 = scmp.ne.s32.totalorder %s107, %s110
    %p119 = scmp.eq.s32.totalorder %s16, 3
    %p120 = por %p118, %p119
    %p121 = scmp.ne.s32.totalorder %s110, %s111
    %p122 = scmp.eq.s32.totalorder %s16, 0
    %p123 = por %p121, %p122
    %p124 = scmp.ne.s32.totalorder %s110, %s111
    %p125 = scmp.eq.s32.totalorder %s17, 3
    %p126 = por %p124, %p125
    %p128 = scmp.ne.s32.totalorder %s111, %s127
    %p129 = scmp.eq.s32.totalorder %s17, 0
    %p130 = por %p128, %p129
    %s132 = sadd.s32 %s131, 1
    %p135 = scmp.eq.s32.totalorder %s11, 3
    %p136 = scmp.ne.s32.totalorder %s131, %s133
    %p137 = scmp.eq.s32.totalorder %s11, 0
    %p138 = por %p136, %p137
    %p139 = scmp.ne.s32.totalorder %s131, %s133
    %p140 = scmp.eq.s32.totalorder %s16, 3
    %p141 = por %p139, %p140
    %p142 = scmp.ne.s32.totalorder %s133, %s134
    %p143 = scmp.eq.s32.totalorder %s16, 0
    %p144 = por %p142, %p143
    %p145 = scmp.ne.s32.totalorder %s133, %s134
    %p146 = scmp.eq.s32.totalorder %s17, 3
    %p147 = por %p145, %p146
    %p149 = scmp.ne.s32.totalorder %s134, %s148
    %p150 = scmp.eq.s32.totalorder %s17, 0
    %p151 = por %p149, %p150
    %s153 = sadd.s32 %s152, 1
    %p156 = scmp.eq.s32.totalorder %s11, 3
    %p157 = scmp.ne.s32.totalorder %s152, %s154
    %p158 = scmp.eq.s32.totalorder %s11, 0
    %p159 = por %p157, %p158
    %p160 = scmp.ne.s32.totalorder %s152, %s154
    %p161 = scmp.eq.s32.totalorder %s16, 3
    %p162 = por %p160, %p161
    %p163 = scmp.ne.s32.totalorder %s154, %s155
    %p164 = scmp.eq.s32.totalorder %s16, 0
    %p165 = por %p163, %p164
    %p166 = scmp.ne.s32.totalorder %s154, %s155
    %p167 = scmp.eq.s32.totalorder %s17, 3
    %p168 = por %p166, %p167
    %p170 = scmp.ne.s32.totalorder %s155, %s169
    %p171 = scmp.eq.s32.totalorder %s17, 0
    %p172 = por %p170, %p171
    %s173 = ssub.s32 %s18, %s30
    %s174 = ssub.s32 %s19, %s26
    %s175 = sor.u32 %s173, %s174
    %p176 = scmp.eq.s32.totalorder %s175, 0
    %s178 = sadd.s32 %s177, 1
    %s179 = scalar_select %p176, %s177, %s178
    %p182 = pneg %p176
    %p183 = scmp.eq.s32.totalorder %s11, 3
    %p184 = por %p182, %p183
    %p185 = scmp.ne.s32.totalorder %s177, %s180
    %p186 = scmp.eq.s32.totalorder %s11, 0
    %p187 = por %p185, %p186
    %p188 = scmp.ne.s32.totalorder %s177, %s180
    %p189 = scmp.eq.s32.totalorder %s16, 3
    %p190 = por %p188, %p189
    %p191 = scmp.ne.s32.totalorder %s180, %s181
    %p192 = scmp.eq.s32.totalorder %s16, 0
    %p193 = por %p191, %p192
    %p194 = scmp.ne.s32.totalorder %s180, %s181
    %p195 = scmp.eq.s32.totalorder %s17, 3
    %p196 = por %p194, %p195
    %p198 = scmp.ne.s32.totalorder %s181, %s197
    %p199 = scmp.eq.s32.totalorder %s17, 0
    %p200 = por %p198, %p199
    %p201 = scmp.le.s32.totalorder 1, %s11
    %p202 = scmp.lt.s32.totalorder %s11, 5
    %p203 = pnand %p201, %p202
    %p204 = pneg %p203
    // Predicated region
    $region9: #{_lambda_.4} parent=5 // pred_check
      _
    $region10: #{_lambda_.4} parent=5 // pred_check_branch
      %206 = sbr.rel (%p203) target = $region12
    $region11: #{_lambda_.4} parent=5 // pred_region
      %s207 = ssub.s32 %s11, 1
      // Predicated region
      $region13: #{_lambda_.4} parent=11 // pred_check
        %p208 = pneg %p144
      $region14: #{_lambda_.4} parent=11 // pred_check_branch
        %210 = sbr.rel (%p208) target = $region16
      $region15: #{_lambda_.4} parent=11 // pred_region
        _
      $region16: #{_lambda_.4} parent=11 // pred_fallthru
        _
      // Predicated region
      $region17: #{_lambda_.4} parent=11 // pred_check
        %p211 = pneg %p165
      $region18: #{_lambda_.4} parent=11 // pred_check_branch
        %213 = sbr.rel (%p211) target = $region20
      $region19: #{_lambda_.4} parent=11 // pred_region
        _
      $region20: #{_lambda_.4} parent=11 // pred_fallthru
        _
    $region12: #{_lambda_.4} parent=5 // pred_fallthru
      _
    %p214 = scmp.lt.s32.totalorder %s11, 4
    // Predicated region
    $region21: #{_lambda_.4} parent=5 // pred_check
      %p215 = pneg %p214
    $region22: #{_lambda_.4} parent=5 // pred_check_branch
      %217 = sbr.rel (%p215) target = $region24
    $region23: #{_lambda_.4} parent=5 // pred_region
      // Predicated region
      $region25: #{_lambda_.4} parent=23 // pred_check
        %p218 = pneg %p53
      $region26: #{_lambda_.4} parent=23 // pred_check_branch
        %220 = sbr.rel (%p218) target = $region28
      $region27: #{_lambda_.4} parent=23 // pred_region
        %s221 = smul.u32 %s19, 8
        %s222 = ssub.s32 %s221, 1
        %p223 = scmp.gt.s32.totalorder %s222, 0
        %s224 = scalar_select %p223, %s222, 0
        %p225 = scmp.lt.s32.totalorder %s18, 1
        %s226 = scalar_select %p225, %s18, 1
        %p227 = scmp.lt.s32.totalorder %s224, 15
        %s228 = scalar_select %p227, %s224, 15
        %s229 = smul.addr %s228, 2
        %s230 = smul.addr %s226, 32
        %s231 = sadd.s32 %s229, %s230
        %s232 = smul.addr %s231, 4
        %s233 = scalar_lea.vmem %s0, %s232
        %s234 = smul.u32 %s19, 8
        %s235 = ssub.s32 %s234, 1
        %p236 = scmp.gt.s32.totalorder %s235, 0
        %s237 = scalar_select %p236, %s235, 0
      $region28: #{_lambda_.4} parent=23 // pred_fallthru
        _
      // Predicated region
      $region29: #{_lambda_.4} parent=23 // pred_check
        %p238 = pneg %p81
      $region30: #{_lambda_.4} parent=23 // pred_check_branch
        %240 = sbr.rel (%p238) target = $region32
      $region31: #{_lambda_.4} parent=23 // pred_region
        %s241 = smul.u32 8, %s19
        %p242 = scmp.lt.s32.totalorder %s18, 1
        %s243 = scalar_select %p242, %s18, 1
        %p244 = scmp.lt.s32.totalorder %s241, 15
        %s245 = scalar_select %p244, %s241, 15
        %s246 = smul.addr %s245, 2
        %s247 = smul.addr %s243, 32
        %s248 = sadd.s32 %s246, %s247
        %s249 = smul.addr %s248, 4
        %s250 = scalar_lea.vmem %s1, %s249
        %s251 = smul.u32 8, %s19
      $region32: #{_lambda_.4} parent=23 // pred_fallthru
        _
      // Predicated region
      $region33: #{_lambda_.4} parent=23 // pred_check
        %p252 = pneg %p117
      $region34: #{_lambda_.4} parent=23 // pred_check_branch
        %254 = sbr.rel (%p252) target = $region36
      $region35: #{_lambda_.4} parent=23 // pred_region
        %s255 = sadd.s32 %s19, 1
        %s256 = smul.u32 %s255, 8
        %p257 = scmp.lt.s32.totalorder %s256, 15
        %s258 = scalar_select %p257, %s256, 15
        %p259 = scmp.lt.s32.totalorder %s18, 1
        %s260 = scalar_select %p259, %s18, 1
        %p261 = scmp.lt.s32.totalorder %s258, 15
        %s262 = scalar_select %p261, %s258, 15
        %s263 = smul.addr %s262, 2
        %s264 = smul.addr %s260, 32
        %s265 = sadd.s32 %s263, %s264
        %s266 = smul.addr %s265, 4
        %s267 = scalar_lea.vmem %s2, %s266
        %s268 = sadd.s32 %s19, 1
        %s269 = smul.u32 %s268, 8
        %p270 = scmp.lt.s32.totalorder %s269, 15
        %s271 = scalar_select %p270, %s269, 15
      $region36: #{_lambda_.4} parent=23 // pred_fallthru
        _
    $region24: #{_lambda_.4} parent=5 // pred_fallthru
      _
    %p272 = scmp.le.s32.totalorder 1, %s11
    %p273 = scmp.lt.s32.totalorder %s11, 5
    %p274 = pnand %p272, %p273
    %p275 = pneg %p274
    // Predicated region
    $region37: #{_lambda_.4} parent=5 // pred_check
      _
    $region38: #{_lambda_.4} parent=5 // pred_check_branch
      %277 = sbr.rel (%p274) target = $region40
    $region39: #{_lambda_.4} parent=5 // pred_region
      %s278 = ssub.s32 %s11, 1
      %s279 = smul.u32 %s21, 8
      %s280 = ssub.s32 %s279, 1
      %p281 = scmp.gt.s32.totalorder %s280, 0
      %s282 = scalar_select %p281, %s280, 0
      %p283 = scmp.lt.s32.totalorder %s20, 1
      %s284 = scalar_select %p283, %s20, 1
      %p285 = scmp.lt.s32.totalorder %s282, 15
      %s286 = scalar_select %p285, %s282, 15
      %s287 = smul.addr %s286, 2
      %s288 = smul.addr %s284, 32
      %s289 = sadd.s32 %s287, %s288
      %s290 = smul.addr %s289, 4
      %s291 = scalar_lea.vmem %s0, %s290
      %p292 = pneg %p59
      %p293 = pneg %p56
      %s294 = smul.u32 8, %s21
      %p295 = scmp.lt.s32.totalorder %s20, 1
      %s296 = scalar_select %p295, %s20, 1
      %p297 = scmp.lt.s32.totalorder %s294, 15
      %s298 = scalar_select %p297, %s294, 15
      %s299 = smul.addr %s298, 2
      %s300 = smul.addr %s296, 32
      %s301 = sadd.s32 %s299, %s300
      %s302 = smul.addr %s301, 4
      %s303 = scalar_lea.vmem %s1, %s302
      %p304 = pneg %p87
      %p305 = pneg %p84
      %s306 = sadd.s32 %s21, 1
      %s307 = smul.u32 %s306, 8
      %p308 = scmp.lt.s32.totalorder %s307, 15
      %s309 = scalar_select %p308, %s307, 15
      %p310 = scmp.lt.s32.totalorder %s20, 1
      %s311 = scalar_select %p310, %s20, 1
      %p312 = scmp.lt.s32.totalorder %s309, 15
      %s313 = scalar_select %p312, %s309, 15
      %s314 = smul.addr %s313, 2
      %s315 = smul.addr %s311, 32
      %s316 = sadd.s32 %s314, %s315
      %s317 = smul.addr %s316, 4
      %s318 = scalar_lea.vmem %s2, %s317
      %p319 = pneg %p123
      %p320 = pneg %p120
      %p321 = pneg %p144
      %p322 = pneg %p141
      %p323 = pneg %p165
      %p324 = pneg %p162
      %p325 = pneg %p193
      %p326 = pneg %p190
      %s327 = smul.u32 8, %s21
      %p328 = scmp.lt.s32.totalorder %s20, 1
      %s329 = scalar_select %p328, %s20, 1
      %p330 = scmp.lt.s32.totalorder %s327, 15
      %s331 = scalar_select %p330, %s327, 15
      %s332 = smul.addr %s331, 2
      %s333 = smul.addr %s329, 32
      %s334 = sadd.s32 %s332, %s333
      %s335 = smul.addr %s334, 4
      %s336 = scalar_lea.vmem %s5, %s335
      %s337 = smul.u32 %s21, 8
      %s338 = ssub.s32 %s337, 1
      %p339 = scmp.gt.s32.totalorder %s338, 0
      %s340 = scalar_select %p339, %s338, 0
      %p341 = scmp.lt.s32.totalorder %s20, 1
      %s342 = scalar_select %p341, %s20, 1
      %p343 = scmp.lt.s32.totalorder %s340, 15
      %s344 = scalar_select %p343, %s340, 15
      %s345 = smul.addr %s344, 2
      %s346 = smul.addr %s342, 32
      %s347 = sadd.s32 %s345, %s346
      %s348 = smul.addr %s347, 4
      %s349 = scalar_lea.vmem %s0, %s348
      %s350 = smul.u32 %s21, 8
      %s351 = ssub.s32 %s350, 1
      %p352 = scmp.gt.s32.totalorder %s351, 0
      %s353 = scalar_select %p352, %s351, 0
      %s354 = smul.u32 8, %s21
      %p355 = scmp.lt.s32.totalorder %s20, 1
      %s356 = scalar_select %p355, %s20, 1
      %p357 = scmp.lt.s32.totalorder %s354, 15
      %s358 = scalar_select %p357, %s354, 15
      %s359 = smul.addr %s358, 2
      %s360 = smul.addr %s356, 32
      %s361 = sadd.s32 %s359, %s360
      %s362 = smul.addr %s361, 4
      %s363 = scalar_lea.vmem %s1, %s362
      %s364 = smul.u32 8, %s21
      %s365 = sadd.s32 %s21, 1
      %s366 = smul.u32 %s365, 8
      %p367 = scmp.lt.s32.totalorder %s366, 15
      %s368 = scalar_select %p367, %s366, 15
      %p369 = scmp.lt.s32.totalorder %s20, 1
      %s370 = scalar_select %p369, %s20, 1
      %p371 = scmp.lt.s32.totalorder %s368, 15
      %s372 = scalar_select %p371, %s368, 15
      %s373 = smul.addr %s372, 2
      %s374 = smul.addr %s370, 32
      %s375 = sadd.s32 %s373, %s374
      %s376 = smul.addr %s375, 4
      %s377 = scalar_lea.vmem %s2, %s376
      %s378 = sadd.s32 %s21, 1
      %s379 = smul.u32 %s378, 8
      %p380 = scmp.lt.s32.totalorder %s379, 15
      %s381 = scalar_select %p380, %s379, 15
      %s382 = smul.u32 8, %s21
      %p383 = scmp.lt.s32.totalorder %s20, 1
      %s384 = scalar_select %p383, %s20, 1
      %p385 = scmp.lt.s32.totalorder %s382, 15
      %s386 = scalar_select %p385, %s382, 15
      %s387 = smul.addr %s386, 2
      %s388 = smul.addr %s384, 32
      %s389 = sadd.s32 %s387, %s388
      %s390 = smul.addr %s389, 4
      %s391 = scalar_lea.vmem %s5, %s390
      %s392 = smul.u32 8, %s21
      %p394 = scmp.gt.s32.totalorder %s21, 0
      %s395 = scalar_select %p394, 1.0, 0.0
      %p397 = scmp.ne.f32.partialorder %s395, %s395
      %s398 = sshrl.u32 %s395, 16
      %s399 = sand.u32 %s398, 1
      %s400 = sadd.s32 32767, %s399
      %s401 = sadd.s32 %s395, %s400
      %s402 = sand.u32 %s401, 4294901760
      %s403 = scalar_select %p397, 2143289344, %s402
      %s405 = sshrl.u32 %s403, 16
      %p406 = scmp.lt.s32.totalorder %s21, 1
      %s407 = scalar_select %p406, 1.0, 0.0
      %p409 = scmp.ne.f32.partialorder %s407, %s407
      %s410 = sshrl.u32 %s407, 16
      %s411 = sand.u32 %s410, 1
      %s412 = sadd.s32 32767, %s411
      %s413 = sadd.s32 %s407, %s412
      %s414 = sand.u32 %s413, 4294901760
      %s415 = scalar_select %p409, 2143289344, %s414
      %s417 = sshrl.u32 %s415, 16
      %v418 = vld [vmem:[%s349] sm:$0xf]
      %v419 = vld [vmem:[%s349 + $0x4] sm:$0xf]
      %s420 = sshll.u32 %s405, 16
      %s421 = sor.u32 %s405, %s420
      %v422 = vstv %s421
      %v424 = vmul.bf16 %v418, %v422
      %v425 = vmul.bf16 %v419, %v422
      %v426 = vld [vmem:[%s363] sm:$0xf]
      %v427 = vld [vmem:[%s363 + $0x4] sm:$0xf]
      %v428 = vld [vmem:[%s363 + $0x8] sm:$0xf]
      %v429 = vld [vmem:[%s363 + $0xc] sm:$0xf]
      %v430 = vld [vmem:[%s363 + $0x10] sm:$0xf]
      %v431 = vld [vmem:[%s363 + $0x14] sm:$0xf]
      %v432 = vld [vmem:[%s363 + $0x18] sm:$0xf]
      %v433 = vld [vmem:[%s363 + $0x1c] sm:$0xf]
      %v434 = vld [vmem:[%s363 + $0x20] sm:$0xf]
      %v435 = vld [vmem:[%s363 + $0x24] sm:$0xf]
      %v436 = vld [vmem:[%s363 + $0x28] sm:$0xf]
      %v437 = vld [vmem:[%s363 + $0x2c] sm:$0xf]
      %v438 = vld [vmem:[%s363 + $0x30] sm:$0xf]
      %v439 = vld [vmem:[%s363 + $0x34] sm:$0xf]
      %v440 = vld [vmem:[%s363 + $0x38] sm:$0xf]
      %v441 = vld [vmem:[%s363 + $0x3c] sm:$0xf]
      %v442 = vld [vmem:[%s377] sm:$0xf]
      %v443 = vld [vmem:[%s377 + $0x4] sm:$0xf]
      %s444 = sshll.u32 %s417, 16
      %s445 = sor.u32 %s417, %s444
      %v446 = vstv %s445
      %v448 = vmul.bf16 %v442, %v446
      %v449 = vmul.bf16 %v443, %v446
      %v470 = vunpack.c.l.b16 %v424
      %v471 = vunpack.c.l.b16 %v425
      %v472 = vunpack.c.l.b16 %v426
      %v473 = vunpack.c.l.b16 %v427
      %v474 = vunpack.c.l.b16 %v428
      %v475 = vunpack.c.l.b16 %v429
      %v476 = vunpack.c.l.b16 %v430
      %v477 = vunpack.c.l.b16 %v431
      %v478 = vunpack.c.l.b16 %v432
      %v479 = vunpack.c.l.b16 %v433
      %v480 = vunpack.c.l.b16 %v434
      %v481 = vunpack.c.l.b16 %v435
      %v482 = vunpack.c.l.b16 %v436
      %v483 = vunpack.c.l.b16 %v437
      %v484 = vunpack.c.l.b16 %v438
      %v485 = vunpack.c.l.b16 %v439
      %v486 = vunpack.c.l.b16 %v440
      %v487 = vunpack.c.l.b16 %v441
      %v488 = vunpack.c.l.b16 %v448
      %v489 = vunpack.c.l.b16 %v449
      %v490 = vpack.c.b16 %v471, %v470
      %v491 = vpack.c.b16 %v473, %v472
      %v492 = vpack.c.b16 %v475, %v474
      %v493 = vpack.c.b16 %v477, %v476
      %v494 = vpack.c.b16 %v479, %v478
      %v495 = vpack.c.b16 %v481, %v480
      %v496 = vpack.c.b16 %v483, %v482
      %v497 = vpack.c.b16 %v485, %v484
      %v498 = vpack.c.b16 %v487, %v486
      %v499 = vpack.c.b16 %v489, %v488
      %v501 = vshrl.u32 %v490, 16
      %v503 = vrot.slane %v501, 7
      %v504 = vshll.u32 %v490, 16
      %v506 = vor.u32 %v503, %v504
      %v508 = vshrl.u32 %v491, 16
      %v510 = vrot.slane %v508, 7
      %v511 = vshll.u32 %v491, 16
      %v513 = vor.u32 %v510, %v511
      %v515 = vshrl.u32 %v492, 16
      %v517 = vrot.slane %v515, 7
      %v518 = vshll.u32 %v492, 16
      %v520 = vor.u32 %v517, %v518
      %v522 = vshrl.u32 %v493, 16
      %v524 = vrot.slane %v522, 7
      %v525 = vshll.u32 %v493, 16
      %v527 = vor.u32 %v524, %v525
      %v529 = vshrl.u32 %v494, 16
      %v531 = vrot.slane %v529, 7
      %v532 = vshll.u32 %v494, 16
      %v534 = vor.u32 %v531, %v532
      %v536 = vshrl.u32 %v495, 16
      %v538 = vrot.slane %v536, 7
      %v539 = vshll.u32 %v495, 16
      %v541 = vor.u32 %v538, %v539
      %v543 = vshrl.u32 %v496, 16
      %v545 = vrot.slane %v543, 7
      %v546 = vshll.u32 %v496, 16
      %v548 = vor.u32 %v545, %v546
      %v550 = vshrl.u32 %v497, 16
      %v552 = vrot.slane %v550, 7
      %v553 = vshll.u32 %v497, 16
      %v555 = vor.u32 %v552, %v553
      %v557 = vshrl.u32 %v498, 16
      %v559 = vrot.slane %v557, 7
      %v560 = vshll.u32 %v498, 16
      %v562 = vor.u32 %v559, %v560
      %v564 = vshrl.u32 %v499, 16
      %v566 = vrot.slane %v564, 7
      %v567 = vshll.u32 %v499, 16
      %v569 = vor.u32 %v566, %v567
      %vm580 = vcmask 1040384
      %vm581 = vsmask.f32 256
      %vm582 = vmand %vm580, %vm581
      %v583 = vsel %vm582, 0, %v506
      %v584 = vsel %vm582, 0, %v513
      %v585 = vsel %vm582, 0, %v520
      %v586 = vsel %vm582, 0, %v527
      %v587 = vsel %vm582, 0, %v534
      %v588 = vsel %vm582, 0, %v541
      %v589 = vsel %vm582, 0, %v548
      %v590 = vsel %vm582, 0, %v555
      %v591 = vsel %vm582, 0, %v562
      %v592 = vsel %vm582, 0, %v569
      %v593 = vrot.slane %v504, 1
      %v594 = vor.u32 %v501, %v593
      %v595 = vrot.slane %v511, 1
      %v596 = vor.u32 %v508, %v595
      %v597 = vrot.slane %v518, 1
      %v598 = vor.u32 %v515, %v597
      %v599 = vrot.slane %v525, 1
      %v600 = vor.u32 %v522, %v599
      %v601 = vrot.slane %v532, 1
      %v602 = vor.u32 %v529, %v601
      %v603 = vrot.slane %v539, 1
      %v604 = vor.u32 %v536, %v603
      %v605 = vrot.slane %v546, 1
      %v606 = vor.u32 %v543, %v605
      %v607 = vrot.slane %v553, 1
      %v608 = vor.u32 %v550, %v607
      %v609 = vrot.slane %v560, 1
      %v610 = vor.u32 %v557, %v609
      %v611 = vrot.slane %v567, 1
      %v612 = vor.u32 %v564, %v611
      %vm623 = vcmask 1047552
      %vm624 = vsmask.f32 7424
      %vm625 = vmand %vm623, %vm624
      %v626 = vsel %vm625, %v594, 0
      %v627 = vsel %vm625, %v596, 0
      %v628 = vsel %vm625, %v598, 0
      %v629 = vsel %vm625, %v600, 0
      %v630 = vsel %vm625, %v602, 0
      %v631 = vsel %vm625, %v604, 0
      %v632 = vsel %vm625, %v606, 0
      %v633 = vsel %vm625, %v608, 0
      %v634 = vsel %vm625, %v610, 0
      %v635 = vsel %vm625, %v612, 0
      %v646 = vld [vmem:[%s3] sm:$0xf]
      %v647 = vld [vmem:[%s3 + $0x4] sm:$0xf]
      %v648 = vld [vmem:[%s3 + $0x8] sm:$0xf]
      %v649 = vld [vmem:[%s3 + $0xc] sm:$0xf]
      %v650 = vld [vmem:[%s3 + $0x10] sm:$0xf]
      %v651 = vld [vmem:[%s3 + $0x14] sm:$0xf]
      %v652 = vld [vmem:[%s3 + $0x18] sm:$0xf]
      %v653 = vld [vmem:[%s3 + $0x1c] sm:$0xf]
      %v654 = vld [vmem:[%s3 + $0x20] sm:$0xf]
      %v655 = vld [vmem:[%s3 + $0x24] sm:$0xf]
      %v656 = vld [vmem:[%s3 + $0x28] sm:$0xf]
      %v657 = vld [vmem:[%s3 + $0x2c] sm:$0xf]
      %v658 = vld [vmem:[%s3 + $0x30] sm:$0xf]
      %v659 = vld [vmem:[%s3 + $0x34] sm:$0xf]
      %v660 = vld [vmem:[%s3 + $0x38] sm:$0xf]
      %v661 = vld [vmem:[%s3 + $0x3c] sm:$0xf]
      %v662 = vld [vmem:[%s3 + $0x40] sm:$0xf]
      %v663 = vld [vmem:[%s3 + $0x44] sm:$0xf]
      %v664 = vld [vmem:[%s3 + $0x48] sm:$0xf]
      %v665 = vld [vmem:[%s3 + $0x4c] sm:$0xf]
      %v666 = vld [vmem:[%s3 + $0x50] sm:$0xf]
      %v667 = vld [vmem:[%s3 + $0x54] sm:$0xf]
      %v668 = vld [vmem:[%s3 + $0x58] sm:$0xf]
      %v669 = vld [vmem:[%s3 + $0x5c] sm:$0xf]
      %v670 = vld [vmem:[%s3 + $0x60] sm:$0xf]
      %v671 = vld [vmem:[%s3 + $0x64] sm:$0xf]
      %v672 = vld [vmem:[%s3 + $0x68] sm:$0xf]
      %v673 = vld [vmem:[%s3 + $0x6c] sm:$0xf]
      %v674 = vld [vmem:[%s3 + $0x70] sm:$0xf]
      %v675 = vld [vmem:[%s3 + $0x74] sm:$0xf]
      %v676 = vld [vmem:[%s3 + $0x78] sm:$0xf]
      %v677 = vld [vmem:[%s3 + $0x7c] sm:$0xf]
      %v678 = vld [vmem:[%s3 + $0x80] sm:$0xf]
      %v679 = vld [vmem:[%s3 + $0x84] sm:$0xf]
      %v680 = vld [vmem:[%s3 + $0x88] sm:$0xf]
      %v681 = vld [vmem:[%s3 + $0x8c] sm:$0xf]
      %v682 = vld [vmem:[%s3 + $0x90] sm:$0xf]
      %v683 = vld [vmem:[%s3 + $0x94] sm:$0xf]
      %v684 = vld [vmem:[%s3 + $0x98] sm:$0xf]
      %v685 = vld [vmem:[%s3 + $0x9c] sm:$0xf]
      %v686 = vld [vmem:[%s3 + $0xa0] sm:$0xf]
      %v687 = vld [vmem:[%s3 + $0xa4] sm:$0xf]
      %v688 = vld [vmem:[%s3 + $0xa8] sm:$0xf]
      %v689 = vld [vmem:[%s3 + $0xac] sm:$0xf]
      %v690 = vld [vmem:[%s3 + $0xb0] sm:$0xf]
      %v691 = vld [vmem:[%s3 + $0xb4] sm:$0xf]
      %v692 = vld [vmem:[%s3 + $0xb8] sm:$0xf]
      %v693 = vld [vmem:[%s3 + $0xbc] sm:$0xf]
      %s694 = scalar_lea.vmem %s3, 192
      %v695 = vld [vmem:[%s694] sm:$0xf]
      %v696 = vld [vmem:[%s694 + $0x4] sm:$0xf]
      %v697 = vld [vmem:[%s694 + $0x8] sm:$0xf]
      %v698 = vld [vmem:[%s694 + $0xc] sm:$0xf]
      %v699 = vld [vmem:[%s694 + $0x10] sm:$0xf]
      %v700 = vld [vmem:[%s694 + $0x14] sm:$0xf]
      %v701 = vld [vmem:[%s694 + $0x18] sm:$0xf]
      %v702 = vld [vmem:[%s694 + $0x1c] sm:$0xf]
      %v703 = vld [vmem:[%s694 + $0x20] sm:$0xf]
      %v704 = vld [vmem:[%s694 + $0x24] sm:$0xf]
      %v705 = vld [vmem:[%s694 + $0x28] sm:$0xf]
      %v706 = vld [vmem:[%s694 + $0x2c] sm:$0xf]
      %v707 = vld [vmem:[%s694 + $0x30] sm:$0xf]
      %v708 = vld [vmem:[%s694 + $0x34] sm:$0xf]
      %v709 = vld [vmem:[%s694 + $0x38] sm:$0xf]
      %v710 = vld [vmem:[%s694 + $0x3c] sm:$0xf]
      %v711 = vld [vmem:[%s694 + $0x40] sm:$0xf]
      %v712 = vld [vmem:[%s694 + $0x44] sm:$0xf]
      %v713 = vld [vmem:[%s694 + $0x48] sm:$0xf]
      %v714 = vld [vmem:[%s694 + $0x4c] sm:$0xf]
      %v715 = vld [vmem:[%s694 + $0x50] sm:$0xf]
      %v716 = vld [vmem:[%s694 + $0x54] sm:$0xf]
      %v717 = vld [vmem:[%s694 + $0x58] sm:$0xf]
      %v718 = vld [vmem:[%s694 + $0x5c] sm:$0xf]
      %v719 = vld [vmem:[%s694 + $0x60] sm:$0xf]
      %v720 = vld [vmem:[%s694 + $0x64] sm:$0xf]
      %v721 = vld [vmem:[%s694 + $0x68] sm:$0xf]
      %v722 = vld [vmem:[%s694 + $0x6c] sm:$0xf]
      %v723 = vld [vmem:[%s694 + $0x70] sm:$0xf]
      %v724 = vld [vmem:[%s694 + $0x74] sm:$0xf]
      %v725 = vld [vmem:[%s694 + $0x78] sm:$0xf]
      %v726 = vld [vmem:[%s694 + $0x7c] sm:$0xf]
      %v727 = vld [vmem:[%s694 + $0x80] sm:$0xf]
      %v728 = vld [vmem:[%s694 + $0x84] sm:$0xf]
      %v729 = vld [vmem:[%s694 + $0x88] sm:$0xf]
      %v730 = vld [vmem:[%s694 + $0x8c] sm:$0xf]
      %v731 = vld [vmem:[%s694 + $0x90] sm:$0xf]
      %v732 = vld [vmem:[%s694 + $0x94] sm:$0xf]
      %v733 = vld [vmem:[%s694 + $0x98] sm:$0xf]
      %v734 = vld [vmem:[%s694 + $0x9c] sm:$0xf]
      %v735 = vld [vmem:[%s694 + $0xa0] sm:$0xf]
      %v736 = vld [vmem:[%s694 + $0xa4] sm:$0xf]
      %v737 = vld [vmem:[%s694 + $0xa8] sm:$0xf]
      %v738 = vld [vmem:[%s694 + $0xac] sm:$0xf]
      %v739 = vld [vmem:[%s694 + $0xb0] sm:$0xf]
      %v740 = vld [vmem:[%s694 + $0xb4] sm:$0xf]
      %v741 = vld [vmem:[%s694 + $0xb8] sm:$0xf]
      %v742 = vld [vmem:[%s694 + $0xbc] sm:$0xf]
      %v791 = vunpack.c.l.b16 %v695
      %v792 = vunpack.c.l.b16 %v696
      %v793 = vunpack.c.l.b16 %v697
      %v794 = vunpack.c.l.b16 %v698
      %v795 = vunpack.c.l.b16 %v699
      %v796 = vunpack.c.l.b16 %v700
      %v797 = vunpack.c.l.b16 %v701
      %v798 = vunpack.c.l.b16 %v702
      %v799 = vunpack.c.l.b16 %v703
      %v800 = vunpack.c.l.b16 %v704
      %v801 = vunpack.c.l.b16 %v705
      %v802 = vunpack.c.l.b16 %v706
      %v803 = vunpack.c.l.b16 %v707
      %v804 = vunpack.c.l.b16 %v708
      %v805 = vunpack.c.l.b16 %v709
      %v806 = vunpack.c.l.b16 %v710
      %v807 = vunpack.c.l.b16 %v711
      %v808 = vunpack.c.l.b16 %v712
      %v809 = vunpack.c.l.b16 %v713
      %v810 = vunpack.c.l.b16 %v714
      %v811 = vunpack.c.l.b16 %v715
      %v812 = vunpack.c.l.b16 %v716
      %v813 = vunpack.c.l.b16 %v717
      %v814 = vunpack.c.l.b16 %v718
      %v815 = vunpack.c.l.b16 %v719
      %v816 = vunpack.c.l.b16 %v720
      %v817 = vunpack.c.l.b16 %v721
      %v818 = vunpack.c.l.b16 %v722
      %v819 = vunpack.c.l.b16 %v723
      %v820 = vunpack.c.l.b16 %v724
      %v821 = vunpack.c.l.b16 %v725
      %v822 = vunpack.c.l.b16 %v726
      %v823 = vunpack.c.l.b16 %v727
      %v824 = vunpack.c.l.b16 %v728
      %v825 = vunpack.c.l.b16 %v729
      %v826 = vunpack.c.l.b16 %v730
      %v827 = vunpack.c.l.b16 %v731
      %v828 = vunpack.c.l.b16 %v732
      %v829 = vunpack.c.l.b16 %v733
      %v830 = vunpack.c.l.b16 %v734
      %v831 = vunpack.c.l.b16 %v735
      %v832 = vunpack.c.l.b16 %v736
      %v833 = vunpack.c.l.b16 %v737
      %v834 = vunpack.c.l.b16 %v738
      %v835 = vunpack.c.l.b16 %v739
      %v836 = vunpack.c.l.b16 %v740
      %v837 = vunpack.c.l.b16 %v741
      %v838 = vunpack.c.l.b16 %v742
      %v839 = vpack.c.b16 %v792, %v791
      %v840 = vpack.c.b16 %v794, %v793
      %v841 = vpack.c.b16 %v796, %v795
      %v842 = vpack.c.b16 %v798, %v797
      %v843 = vpack.c.b16 %v800, %v799
      %v844 = vpack.c.b16 %v802, %v801
      %v845 = vpack.c.b16 %v804, %v803
      %v846 = vpack.c.b16 %v806, %v805
      %v847 = vpack.c.b16 %v808, %v807
      %v848 = vpack.c.b16 %v810, %v809
      %v849 = vpack.c.b16 %v812, %v811
      %v850 = vpack.c.b16 %v814, %v813
      %v851 = vpack.c.b16 %v816, %v815
      %v852 = vpack.c.b16 %v818, %v817
      %v853 = vpack.c.b16 %v820, %v819
      %v854 = vpack.c.b16 %v822, %v821
      %v855 = vpack.c.b16 %v824, %v823
      %v856 = vpack.c.b16 %v826, %v825
      %v857 = vpack.c.b16 %v828, %v827
      %v858 = vpack.c.b16 %v830, %v829
      %v859 = vpack.c.b16 %v832, %v831
      %v860 = vpack.c.b16 %v834, %v833
      %v861 = vpack.c.b16 %v836, %v835
      %v862 = vpack.c.b16 %v838, %v837
      %887 = vmatprep.subr.bf16.mxu0 0
      %888 = vmatpush1.bf16.msra.mxu0 %v846
      %889 = vmatprep.subr.bf16.mxu0 0
      %890 = vmatpush1.bf16.msra.mxu0 %v845
      %891 = vmatprep.subr.bf16.mxu0 0
      %892 = vmatpush1.bf16.msra.mxu0 %v844
      %893 = vmatprep.subr.bf16.mxu0 0
      %894 = vmatpush1.bf16.msra.mxu0 %v843
      %895 = vmatprep.subr.bf16.mxu0 0
      %896 = vmatpush1.bf16.msra.mxu0 %v842
      %897 = vmatprep.subr.bf16.mxu0 0
      %898 = vmatpush1.bf16.msra.mxu0 %v841
      %899 = vmatprep.subr.bf16.mxu0 0
      %900 = vmatpush1.bf16.msra.mxu0 %v840
      %901 = vmatprep.subr.bf16.mxu0 0
      %902 = vmatpush1.bf16.msra.mxu0 %v839
      %903 = vmatprep.subr.bf16.mxu0 0
      %904 = vmatpush2.bf16.msra.mxu0 %v854
      %905 = vmatprep.subr.bf16.mxu0 0
      %906 = vmatpush2.bf16.msra.mxu0 %v853
      %907 = vmatprep.subr.bf16.mxu0 0
      %908 = vmatpush2.bf16.msra.mxu0 %v852
      %909 = vmatprep.subr.bf16.mxu0 0
      %910 = vmatpush2.bf16.msra.mxu0 %v851
      %911 = vmatprep.subr.bf16.mxu0 0
      %912 = vmatpush2.bf16.msra.mxu0 %v850
      %913 = vmatprep.subr.bf16.mxu0 0
      %914 = vmatpush2.bf16.msra.mxu0 %v849
      %915 = vmatprep.subr.bf16.mxu0 0
      %916 = vmatpush2.bf16.msra.mxu0 %v848
      %917 = vmatprep.subr.bf16.mxu0 0
      %918 = vmatpush2.bf16.msra.mxu0 %v847
      %919 = vmatprep.mubr.bf16.mxu0 %v491
      %920 = vmatmul.mubr.bf16.gmra.mxu0 %v584
      %v921 = vpop.f32.mrf.mxu0
      %v922 = vadd.f32 0.0, %v921
      %v923 = vpop.f32.mrf.mxu0
      %v924 = vpop.f32.mrf.mxu0
      %v925 = vadd.f32 0.0, %v924
      %v926 = vpop.f32.mrf.mxu0
      %927 = vmatprep.mubr.bf16.mxu0 %v492
      %928 = vmatmul.mubr.bf16.gmra.mxu0 %v585
      %v929 = vpop.f32.mrf.mxu0
      %v930 = vadd.f32 0.0, %v929
      %v931 = vpop.f32.mrf.mxu0
      %v932 = vpop.f32.mrf.mxu0
      %v933 = vadd.f32 0.0, %v932
      %v934 = vpop.f32.mrf.mxu0
      %935 = vmatprep.mubr.bf16.mxu0 %v493
      %936 = vmatmul.mubr.bf16.gmra.mxu0 %v586
      %v937 = vpop.f32.mrf.mxu0
      %v938 = vadd.f32 0.0, %v937
      %v939 = vpop.f32.mrf.mxu0
      %v940 = vpop.f32.mrf.mxu0
      %v941 = vadd.f32 0.0, %v940
      %v942 = vpop.f32.mrf.mxu0
      %943 = vmatprep.mubr.bf16.mxu0 %v494
      %944 = vmatmul.mubr.bf16.gmra.mxu0 %v587
      %v945 = vpop.f32.mrf.mxu0
      %v946 = vadd.f32 0.0, %v945
      %v947 = vpop.f32.mrf.mxu0
      %v948 = vpop.f32.mrf.mxu0
      %v949 = vadd.f32 0.0, %v948
      %v950 = vpop.f32.mrf.mxu0
      %951 = vmatprep.mubr.bf16.mxu0 %v495
      %952 = vmatmul.mubr.bf16.gmra.mxu0 %v588
      %v953 = vpop.f32.mrf.mxu0
      %v954 = vadd.f32 0.0, %v953
      %v955 = vpop.f32.mrf.mxu0
      %v956 = vpop.f32.mrf.mxu0
      %v957 = vadd.f32 0.0, %v956
      %v958 = vpop.f32.mrf.mxu0
      %959 = vmatprep.mubr.bf16.mxu0 %v496
      %960 = vmatmul.mubr.bf16.gmra.mxu0 %v589
      %v961 = vpop.f32.mrf.mxu0
      %v962 = vadd.f32 0.0, %v961
      %v963 = vpop.f32.mrf.mxu0
      %v964 = vpop.f32.mrf.mxu0
      %v965 = vadd.f32 0.0, %v964
      %v966 = vpop.f32.mrf.mxu0
      %967 = vmatprep.mubr.bf16.mxu0 %v497
      %968 = vmatmul.mubr.bf16.gmra.mxu0 %v590
      %v969 = vpop.f32.mrf.mxu0
      %v970 = vadd.f32 0.0, %v969
      %v971 = vpop.f32.mrf.mxu0
      %v972 = vpop.f32.mrf.mxu0
      %v973 = vadd.f32 0.0, %v972
      %v974 = vpop.f32.mrf.mxu0
      %975 = vmatprep.mubr.bf16.mxu0 %v498
      %976 = vmatmul.mubr.bf16.gmra.mxu0 %v591
      %v977 = vpop.f32.mrf.mxu0
      %v978 = vadd.f32 0.0, %v977
      %v979 = vpop.f32.mrf.mxu0
      %v980 = vpop.f32.mrf.mxu0
      %v981 = vadd.f32 0.0, %v980
      %v982 = vpop.f32.mrf.mxu0
      %983 = vdwg.mxu0
      %984 = vmatprep.subr.bf16.mxu0 0
      %985 = vmatpush1.bf16.msra.mxu0 %v862
      %986 = vmatprep.subr.bf16.mxu0 0
      %987 = vmatpush1.bf16.msra.mxu0 %v861
      %988 = vmatprep.subr.bf16.mxu0 0
      %989 = vmatpush1.bf16.msra.mxu0 %v860
      %990 = vmatprep.subr.bf16.mxu0 0
      %991 = vmatpush1.bf16.msra.mxu0 %v859
      %992 = vmatprep.subr.bf16.mxu0 0
      %993 = vmatpush1.bf16.msra.mxu0 %v858
      %994 = vmatprep.subr.bf16.mxu0 0
      %995 = vmatpush1.bf16.msra.mxu0 %v857
      %996 = vmatprep.subr.bf16.mxu0 0
      %997 = vmatpush1.bf16.msra.mxu0 %v856
      %998 = vmatprep.subr.bf16.mxu0 0
      %999 = vmatpush1.bf16.msra.mxu0 %v855
      %1000 = vmatprep.subr.bf16.mxu0 0
      %1001 = vmatpush2.bf16.msra.mxu0 0
      %1002 = vmatprep.subr.bf16.mxu0 0
      %1003 = vmatpush2.bf16.msra.mxu0 0
      %1004 = vmatprep.subr.bf16.mxu0 0
      %1005 = vmatpush2.bf16.msra.mxu0 0
      %1006 = vmatprep.subr.bf16.mxu0 0
      %1007 = vmatpush2.bf16.msra.mxu0 0
      %1008 = vmatprep.subr.bf16.mxu0 0
      %1009 = vmatpush2.bf16.msra.mxu0 0
      %1010 = vmatprep.subr.bf16.mxu0 0
      %1011 = vmatpush2.bf16.msra.mxu0 0
      %1012 = vmatprep.subr.bf16.mxu0 0
      %1013 = vmatpush2.bf16.msra.mxu0 0
      %1014 = vmatprep.subr.bf16.mxu0 0
      %1015 = vmatpush2.bf16.msra.mxu0 0
      %1016 = vmatprep.mubr.bf16.mxu0 0
      %1017 = vmatmul.mubr.bf16.gmra.mxu0 %v627
      %v1018 = vpop.f32.mrf.mxu0
      %v1019 = vadd.f32 %v922, %v1018
      %v1020 = vpop.f32.mrf.mxu0
      %v1021 = vpop.f32.mrf.mxu0
      %v1022 = vadd.f32 %v925, %v1021
      %v1023 = vpop.f32.mrf.mxu0
      %1024 = vmatprep.mubr.bf16.mxu0 0
      %1025 = vmatmul.mubr.bf16.gmra.mxu0 %v628
      %v1026 = vpop.f32.mrf.mxu0
      %v1027 = vadd.f32 %v930, %v1026
      %v1028 = vpop.f32.mrf.mxu0
      %v1029 = vpop.f32.mrf.mxu0
      %v1030 = vadd.f32 %v933, %v1029
      %v1031 = vpop.f32.mrf.mxu0
      %1032 = vmatprep.mubr.bf16.mxu0 0
      %1033 = vmatmul.mubr.bf16.gmra.mxu0 %v629
      %v1034 = vpop.f32.mrf.mxu0
      %v1035 = vadd.f32 %v938, %v1034
      %v1036 = vpop.f32.mrf.mxu0
      %v1037 = vpop.f32.mrf.mxu0
      %v1038 = vadd.f32 %v941, %v1037
      %v1039 = vpop.f32.mrf.mxu0
      %1040 = vmatprep.mubr.bf16.mxu0 0
      %1041 = vmatmul.mubr.bf16.gmra.mxu0 %v630
      %v1042 = vpop.f32.mrf.mxu0
      %v1043 = vadd.f32 %v946, %v1042
      %v1044 = vpop.f32.mrf.mxu0
      %v1045 = vpop.f32.mrf.mxu0
      %v1046 = vadd.f32 %v949, %v1045
      %v1047 = vpop.f32.mrf.mxu0
      %1048 = vmatprep.mubr.bf16.mxu0 0
      %1049 = vmatmul.mubr.bf16.gmra.mxu0 %v631
      %v1050 = vpop.f32.mrf.mxu0
      %v1051 = vadd.f32 %v954, %v1050
      %v1052 = vpop.f32.mrf.mxu0
      %v1053 = vpop.f32.mrf.mxu0
      %v1054 = vadd.f32 %v957, %v1053
      %v1055 = vpop.f32.mrf.mxu0
      %1056 = vmatprep.mubr.bf16.mxu0 0
      %1057 = vmatmul.mubr.bf16.gmra.mxu0 %v632
      %v1058 = vpop.f32.mrf.mxu0
      %v1059 = vadd.f32 %v962, %v1058
      %v1060 = vpop.f32.mrf.mxu0
      %v1061 = vpop.f32.mrf.mxu0
      %v1062 = vadd.f32 %v965, %v1061
      %v1063 = vpop.f32.mrf.mxu0
      %1064 = vmatprep.mubr.bf16.mxu0 0
      %1065 = vmatmul.mubr.bf16.gmra.mxu0 %v633
      %v1066 = vpop.f32.mrf.mxu0
      %v1067 = vadd.f32 %v970, %v1066
      %v1068 = vpop.f32.mrf.mxu0
      %v1069 = vpop.f32.mrf.mxu0
      %v1070 = vadd.f32 %v973, %v1069
      %v1071 = vpop.f32.mrf.mxu0
      %1072 = vmatprep.mubr.bf16.mxu0 0
      %1073 = vmatmul.mubr.bf16.gmra.mxu0 %v634
      %v1074 = vpop.f32.mrf.mxu0
      %v1075 = vadd.f32 %v978, %v1074
      %v1076 = vpop.f32.mrf.mxu0
      %v1077 = vpop.f32.mrf.mxu0
      %v1078 = vadd.f32 %v981, %v1077
      %v1079 = vpop.f32.mrf.mxu0
      %1080 = vdwg.mxu0
      %v1129 = vunpack.c.l.b16 %v646
      %v1130 = vunpack.c.l.b16 %v647
      %v1131 = vunpack.c.l.b16 %v648
      %v1132 = vunpack.c.l.b16 %v649
      %v1133 = vunpack.c.l.b16 %v650
      %v1134 = vunpack.c.l.b16 %v651
      %v1135 = vunpack.c.l.b16 %v652
      %v1136 = vunpack.c.l.b16 %v653
      %v1137 = vunpack.c.l.b16 %v654
      %v1138 = vunpack.c.l.b16 %v655
      %v1139 = vunpack.c.l.b16 %v656
      %v1140 = vunpack.c.l.b16 %v657
      %v1141 = vunpack.c.l.b16 %v658
      %v1142 = vunpack.c.l.b16 %v659
      %v1143 = vunpack.c.l.b16 %v660
      %v1144 = vunpack.c.l.b16 %v661
      %v1145 = vunpack.c.l.b16 %v662
      %v1146 = vunpack.c.l.b16 %v663
      %v1147 = vunpack.c.l.b16 %v664
      %v1148 = vunpack.c.l.b16 %v665
      %v1149 = vunpack.c.l.b16 %v666
      %v1150 = vunpack.c.l.b16 %v667
      %v1151 = vunpack.c.l.b16 %v668
      %v1152 = vunpack.c.l.b16 %v669
      %v1153 = vunpack.c.l.b16 %v670
      %v1154 = vunpack.c.l.b16 %v671
      %v1155 = vunpack.c.l.b16 %v672
      %v1156 = vunpack.c.l.b16 %v673
      %v1157 = vunpack.c.l.b16 %v674
      %v1158 = vunpack.c.l.b16 %v675
      %v1159 = vunpack.c.l.b16 %v676
      %v1160 = vunpack.c.l.b16 %v677
      %v1161 = vunpack.c.l.b16 %v678
      %v1162 = vunpack.c.l.b16 %v679
      %v1163 = vunpack.c.l.b16 %v680
      %v1164 = vunpack.c.l.b16 %v681
      %v1165 = vunpack.c.l.b16 %v682
      %v1166 = vunpack.c.l.b16 %v683
      %v1167 = vunpack.c.l.b16 %v684
      %v1168 = vunpack.c.l.b16 %v685
      %v1169 = vunpack.c.l.b16 %v686
      %v1170 = vunpack.c.l.b16 %v687
      %v1171 = vunpack.c.l.b16 %v688
      %v1172 = vunpack.c.l.b16 %v689
      %v1173 = vunpack.c.l.b16 %v690
      %v1174 = vunpack.c.l.b16 %v691
      %v1175 = vunpack.c.l.b16 %v692
      %v1176 = vunpack.c.l.b16 %v693
      %v1177 = vpack.c.b16 %v1130, %v1129
      %v1178 = vpack.c.b16 %v1132, %v1131
      %v1179 = vpack.c.b16 %v1134, %v1133
      %v1180 = vpack.c.b16 %v1136, %v1135
      %v1181 = vpack.c.b16 %v1138, %v1137
      %v1182 = vpack.c.b16 %v1140, %v1139
      %v1183 = vpack.c.b16 %v1142, %v1141
      %v1184 = vpack.c.b16 %v1144, %v1143
      %v1185 = vpack.c.b16 %v1146, %v1145
      %v1186 = vpack.c.b16 %v1148, %v1147
      %v1187 = vpack.c.b16 %v1150, %v1149
      %v1188 = vpack.c.b16 %v1152, %v1151
      %v1189 = vpack.c.b16 %v1154, %v1153
      %v1190 = vpack.c.b16 %v1156, %v1155
      %v1191 = vpack.c.b16 %v1158, %v1157
      %v1192 = vpack.c.b16 %v1160, %v1159
      %v1193 = vpack.c.b16 %v1162, %v1161
      %v1194 = vpack.c.b16 %v1164, %v1163
      %v1195 = vpack.c.b16 %v1166, %v1165
      %v1196 = vpack.c.b16 %v1168, %v1167
      %v1197 = vpack.c.b16 %v1170, %v1169
      %v1198 = vpack.c.b16 %v1172, %v1171
      %v1199 = vpack.c.b16 %v1174, %v1173
      %v1200 = vpack.c.b16 %v1176, %v1175
      %1225 = vmatprep.subr.bf16.mxu0 0
      %1226 = vmatpush1.bf16.msra.mxu0 %v1184
      %1227 = vmatprep.subr.bf16.mxu0 0
      %1228 = vmatpush1.bf16.msra.mxu0 %v1183
      %1229 = vmatprep.subr.bf16.mxu0 0
      %1230 = vmatpush1.bf16.msra.mxu0 %v1182
      %1231 = vmatprep.subr.bf16.mxu0 0
      %1232 = vmatpush1.bf16.msra.mxu0 %v1181
      %1233 = vmatprep.subr.bf16.mxu0 0
      %1234 = vmatpush1.bf16.msra.mxu0 %v1180
      %1235 = vmatprep.subr.bf16.mxu0 0
      %1236 = vmatpush1.bf16.msra.mxu0 %v1179
      %1237 = vmatprep.subr.bf16.mxu0 0
      %1238 = vmatpush1.bf16.msra.mxu0 %v1178
      %1239 = vmatprep.subr.bf16.mxu0 0
      %1240 = vmatpush1.bf16.msra.mxu0 %v1177
      %1241 = vmatprep.subr.bf16.mxu0 0
      %1242 = vmatpush2.bf16.msra.mxu0 %v1192
      %1243 = vmatprep.subr.bf16.mxu0 0
      %1244 = vmatpush2.bf16.msra.mxu0 %v1191
      %1245 = vmatprep.subr.bf16.mxu0 0
      %1246 = vmatpush2.bf16.msra.mxu0 %v1190
      %1247 = vmatprep.subr.bf16.mxu0 0
      %1248 = vmatpush2.bf16.msra.mxu0 %v1189
      %1249 = vmatprep.subr.bf16.mxu0 0
      %1250 = vmatpush2.bf16.msra.mxu0 %v1188
      %1251 = vmatprep.subr.bf16.mxu0 0
      %1252 = vmatpush2.bf16.msra.mxu0 %v1187
      %1253 = vmatprep.subr.bf16.mxu0 0
      %1254 = vmatpush2.bf16.msra.mxu0 %v1186
      %1255 = vmatprep.subr.bf16.mxu0 0
      %1256 = vmatpush2.bf16.msra.mxu0 %v1185
      %1257 = vmatprep.mubr.bf16.mxu0 %v490
      %1258 = vmatmul.mubr.bf16.gmra.mxu0 %v583
      %v1259 = vpop.f32.mrf.mxu0
      %v1260 = vadd.f32 %v1019, %v1259
      %v1261 = vpop.f32.mrf.mxu0
      %v1262 = vpop.f32.mrf.mxu0
      %v1263 = vadd.f32 %v1022, %v1262
      %v1264 = vpop.f32.mrf.mxu0
      %1265 = vmatprep.mubr.bf16.mxu0 %v491
      %1266 = vmatmul.mubr.bf16.gmra.mxu0 %v584
      %v1267 = vpop.f32.mrf.mxu0
      %v1268 = vadd.f32 %v1027, %v1267
      %v1269 = vpop.f32.mrf.mxu0
      %v1270 = vpop.f32.mrf.mxu0
      %v1271 = vadd.f32 %v1030, %v1270
      %v1272 = vpop.f32.mrf.mxu0
      %1273 = vmatprep.mubr.bf16.mxu0 %v492
      %1274 = vmatmul.mubr.bf16.gmra.mxu0 %v585
      %v1275 = vpop.f32.mrf.mxu0
      %v1276 = vadd.f32 %v1035, %v1275
      %v1277 = vpop.f32.mrf.mxu0
      %v1278 = vpop.f32.mrf.mxu0
      %v1279 = vadd.f32 %v1038, %v1278
      %v1280 = vpop.f32.mrf.mxu0
      %1281 = vmatprep.mubr.bf16.mxu0 %v493
      %1282 = vmatmul.mubr.bf16.gmra.mxu0 %v586
      %v1283 = vpop.f32.mrf.mxu0
      %v1284 = vadd.f32 %v1043, %v1283
      %v1285 = vpop.f32.mrf.mxu0
      %v1286 = vpop.f32.mrf.mxu0
      %v1287 = vadd.f32 %v1046, %v1286
      %v1288 = vpop.f32.mrf.mxu0
      %1289 = vmatprep.mubr.bf16.mxu0 %v494
      %1290 = vmatmul.mubr.bf16.gmra.mxu0 %v587
      %v1291 = vpop.f32.mrf.mxu0
      %v1292 = vadd.f32 %v1051, %v1291
      %v1293 = vpop.f32.mrf.mxu0
      %v1294 = vpop.f32.mrf.mxu0
      %v1295 = vadd.f32 %v1054, %v1294
      %v1296 = vpop.f32.mrf.mxu0
      %1297 = vmatprep.mubr.bf16.mxu0 %v495
      %1298 = vmatmul.mubr.bf16.gmra.mxu0 %v588
      %v1299 = vpop.f32.mrf.mxu0
      %v1300 = vadd.f32 %v1059, %v1299
      %v1301 = vpop.f32.mrf.mxu0
      %v1302 = vpop.f32.mrf.mxu0
      %v1303 = vadd.f32 %v1062, %v1302
      %v1304 = vpop.f32.mrf.mxu0
      %1305 = vmatprep.mubr.bf16.mxu0 %v496
      %1306 = vmatmul.mubr.bf16.gmra.mxu0 %v589
      %v1307 = vpop.f32.mrf.mxu0
      %v1308 = vadd.f32 %v1067, %v1307
      %v1309 = vpop.f32.mrf.mxu0
      %v1310 = vpop.f32.mrf.mxu0
      %v1311 = vadd.f32 %v1070, %v1310
      %v1312 = vpop.f32.mrf.mxu0
      %1313 = vmatprep.mubr.bf16.mxu0 %v497
      %1314 = vmatmul.mubr.bf16.gmra.mxu0 %v590
      %v1315 = vpop.f32.mrf.mxu0
      %v1316 = vadd.f32 %v1075, %v1315
      %v1317 = vpop.f32.mrf.mxu0
      %v1318 = vpop.f32.mrf.mxu0
      %v1319 = vadd.f32 %v1078, %v1318
      %v1320 = vpop.f32.mrf.mxu0
      %1321 = vdwg.mxu0
      %1322 = vmatprep.subr.bf16.mxu0 0
      %1323 = vmatpush1.bf16.msra.mxu0 %v1200
      %1324 = vmatprep.subr.bf16.mxu0 0
      %1325 = vmatpush1.bf16.msra.mxu0 %v1199
      %1326 = vmatprep.subr.bf16.mxu0 0
      %1327 = vmatpush1.bf16.msra.mxu0 %v1198
      %1328 = vmatprep.subr.bf16.mxu0 0
      %1329 = vmatpush1.bf16.msra.mxu0 %v1197
      %1330 = vmatprep.subr.bf16.mxu0 0
      %1331 = vmatpush1.bf16.msra.mxu0 %v1196
      %1332 = vmatprep.subr.bf16.mxu0 0
      %1333 = vmatpush1.bf16.msra.mxu0 %v1195
      %1334 = vmatprep.subr.bf16.mxu0 0
      %1335 = vmatpush1.bf16.msra.mxu0 %v1194
      %1336 = vmatprep.subr.bf16.mxu0 0
      %1337 = vmatpush1.bf16.msra.mxu0 %v1193
      %1338 = vmatprep.subr.bf16.mxu0 0
      %1339 = vmatpush2.bf16.msra.mxu0 0
      %1340 = vmatprep.subr.bf16.mxu0 0
      %1341 = vmatpush2.bf16.msra.mxu0 0
      %1342 = vmatprep.subr.bf16.mxu0 0
      %1343 = vmatpush2.bf16.msra.mxu0 0
      %1344 = vmatprep.subr.bf16.mxu0 0
      %1345 = vmatpush2.bf16.msra.mxu0 0
      %1346 = vmatprep.subr.bf16.mxu0 0
      %1347 = vmatpush2.bf16.msra.mxu0 0
      %1348 = vmatprep.subr.bf16.mxu0 0
      %1349 = vmatpush2.bf16.msra.mxu0 0
      %1350 = vmatprep.subr.bf16.mxu0 0
      %1351 = vmatpush2.bf16.msra.mxu0 0
      %1352 = vmatprep.subr.bf16.mxu0 0
      %1353 = vmatpush2.bf16.msra.mxu0 0
      %1354 = vmatprep.mubr.bf16.mxu0 0
      %1355 = vmatmul.mubr.bf16.gmra.mxu0 %v626
      %v1356 = vpop.f32.mrf.mxu0
      %v1357 = vadd.f32 %v1260, %v1356
      %v1358 = vpop.f32.mrf.mxu0
      %v1359 = vpop.f32.mrf.mxu0
      %v1360 = vadd.f32 %v1263, %v1359
      %v1361 = vpop.f32.mrf.mxu0
      %1362 = vmatprep.mubr.bf16.mxu0 0
      %1363 = vmatmul.mubr.bf16.gmra.mxu0 %v627
      %v1364 = vpop.f32.mrf.mxu0
      %v1365 = vadd.f32 %v1268, %v1364
      %v1366 = vpop.f32.mrf.mxu0
      %v1367 = vpop.f32.mrf.mxu0
      %v1368 = vadd.f32 %v1271, %v1367
      %v1369 = vpop.f32.mrf.mxu0
      %1370 = vmatprep.mubr.bf16.mxu0 0
      %1371 = vmatmul.mubr.bf16.gmra.mxu0 %v628
      %v1372 = vpop.f32.mrf.mxu0
      %v1373 = vadd.f32 %v1276, %v1372
      %v1374 = vpop.f32.mrf.mxu0
      %v1375 = vpop.f32.mrf.mxu0
      %v1376 = vadd.f32 %v1279, %v1375
      %v1377 = vpop.f32.mrf.mxu0
      %1378 = vmatprep.mubr.bf16.mxu0 0
      %1379 = vmatmul.mubr.bf16.gmra.mxu0 %v629
      %v1380 = vpop.f32.mrf.mxu0
      %v1381 = vadd.f32 %v1284, %v1380
      %v1382 = vpop.f32.mrf.mxu0
      %v1383 = vpop.f32.mrf.mxu0
      %v1384 = vadd.f32 %v1287, %v1383
      %v1385 = vpop.f32.mrf.mxu0
      %1386 = vmatprep.mubr.bf16.mxu0 0
      %1387 = vmatmul.mubr.bf16.gmra.mxu0 %v630
      %v1388 = vpop.f32.mrf.mxu0
      %v1389 = vadd.f32 %v1292, %v1388
      %v1390 = vpop.f32.mrf.mxu0
      %v1391 = vpop.f32.mrf.mxu0
      %v1392 = vadd.f32 %v1295, %v1391
      %v1393 = vpop.f32.mrf.mxu0
      %1394 = vmatprep.mubr.bf16.mxu0 0
      %1395 = vmatmul.mubr.bf16.gmra.mxu0 %v631
      %v1396 = vpop.f32.mrf.mxu0
      %v1397 = vadd.f32 %v1300, %v1396
      %v1398 = vpop.f32.mrf.mxu0
      %v1399 = vpop.f32.mrf.mxu0
      %v1400 = vadd.f32 %v1303, %v1399
      %v1401 = vpop.f32.mrf.mxu0
      %1402 = vmatprep.mubr.bf16.mxu0 0
      %1403 = vmatmul.mubr.bf16.gmra.mxu0 %v632
      %v1404 = vpop.f32.mrf.mxu0
      %v1405 = vadd.f32 %v1308, %v1404
      %v1406 = vpop.f32.mrf.mxu0
      %v1407 = vpop.f32.mrf.mxu0
      %v1408 = vadd.f32 %v1311, %v1407
      %v1409 = vpop.f32.mrf.mxu0
      %1410 = vmatprep.mubr.bf16.mxu0 0
      %1411 = vmatmul.mubr.bf16.gmra.mxu0 %v633
      %v1412 = vpop.f32.mrf.mxu0
      %v1413 = vadd.f32 %v1316, %v1412
      %v1414 = vpop.f32.mrf.mxu0
      %v1415 = vpop.f32.mrf.mxu0
      %v1416 = vadd.f32 %v1319, %v1415
      %v1417 = vpop.f32.mrf.mxu0
      %1418 = vdwg.mxu0
      %s1419 = scalar_lea.vmem %s3, 384
      %v1420 = vld [vmem:[%s1419] sm:$0xf]
      %v1421 = vld [vmem:[%s1419 + $0x4] sm:$0xf]
      %v1422 = vld [vmem:[%s1419 + $0x8] sm:$0xf]
      %v1423 = vld [vmem:[%s1419 + $0xc] sm:$0xf]
      %v1424 = vld [vmem:[%s1419 + $0x10] sm:$0xf]
      %v1425 = vld [vmem:[%s1419 + $0x14] sm:$0xf]
      %v1426 = vld [vmem:[%s1419 + $0x18] sm:$0xf]
      %v1427 = vld [vmem:[%s1419 + $0x1c] sm:$0xf]
      %v1428 = vld [vmem:[%s1419 + $0x20] sm:$0xf]
      %v1429 = vld [vmem:[%s1419 + $0x24] sm:$0xf]
      %v1430 = vld [vmem:[%s1419 + $0x28] sm:$0xf]
      %v1431 = vld [vmem:[%s1419 + $0x2c] sm:$0xf]
      %v1432 = vld [vmem:[%s1419 + $0x30] sm:$0xf]
      %v1433 = vld [vmem:[%s1419 + $0x34] sm:$0xf]
      %v1434 = vld [vmem:[%s1419 + $0x38] sm:$0xf]
      %v1435 = vld [vmem:[%s1419 + $0x3c] sm:$0xf]
      %v1436 = vld [vmem:[%s1419 + $0x40] sm:$0xf]
      %v1437 = vld [vmem:[%s1419 + $0x44] sm:$0xf]
      %v1438 = vld [vmem:[%s1419 + $0x48] sm:$0xf]
      %v1439 = vld [vmem:[%s1419 + $0x4c] sm:$0xf]
      %v1440 = vld [vmem:[%s1419 + $0x50] sm:$0xf]
      %v1441 = vld [vmem:[%s1419 + $0x54] sm:$0xf]
      %v1442 = vld [vmem:[%s1419 + $0x58] sm:$0xf]
      %v1443 = vld [vmem:[%s1419 + $0x5c] sm:$0xf]
      %v1444 = vld [vmem:[%s1419 + $0x60] sm:$0xf]
      %v1445 = vld [vmem:[%s1419 + $0x64] sm:$0xf]
      %v1446 = vld [vmem:[%s1419 + $0x68] sm:$0xf]
      %v1447 = vld [vmem:[%s1419 + $0x6c] sm:$0xf]
      %v1448 = vld [vmem:[%s1419 + $0x70] sm:$0xf]
      %v1449 = vld [vmem:[%s1419 + $0x74] sm:$0xf]
      %v1450 = vld [vmem:[%s1419 + $0x78] sm:$0xf]
      %v1451 = vld [vmem:[%s1419 + $0x7c] sm:$0xf]
      %v1452 = vld [vmem:[%s1419 + $0x80] sm:$0xf]
      %v1453 = vld [vmem:[%s1419 + $0x84] sm:$0xf]
      %v1454 = vld [vmem:[%s1419 + $0x88] sm:$0xf]
      %v1455 = vld [vmem:[%s1419 + $0x8c] sm:$0xf]
      %v1456 = vld [vmem:[%s1419 + $0x90] sm:$0xf]
      %v1457 = vld [vmem:[%s1419 + $0x94] sm:$0xf]
      %v1458 = vld [vmem:[%s1419 + $0x98] sm:$0xf]
      %v1459 = vld [vmem:[%s1419 + $0x9c] sm:$0xf]
      %v1460 = vld [vmem:[%s1419 + $0xa0] sm:$0xf]
      %v1461 = vld [vmem:[%s1419 + $0xa4] sm:$0xf]
      %v1462 = vld [vmem:[%s1419 + $0xa8] sm:$0xf]
      %v1463 = vld [vmem:[%s1419 + $0xac] sm:$0xf]
      %v1464 = vld [vmem:[%s1419 + $0xb0] sm:$0xf]
      %v1465 = vld [vmem:[%s1419 + $0xb4] sm:$0xf]
      %v1466 = vld [vmem:[%s1419 + $0xb8] sm:$0xf]
      %v1467 = vld [vmem:[%s1419 + $0xbc] sm:$0xf]
      %v1516 = vunpack.c.l.b16 %v1420
      %v1517 = vunpack.c.l.b16 %v1421
      %v1518 = vunpack.c.l.b16 %v1422
      %v1519 = vunpack.c.l.b16 %v1423
      %v1520 = vunpack.c.l.b16 %v1424
      %v1521 = vunpack.c.l.b16 %v1425
      %v1522 = vunpack.c.l.b16 %v1426
      %v1523 = vunpack.c.l.b16 %v1427
      %v1524 = vunpack.c.l.b16 %v1428
      %v1525 = vunpack.c.l.b16 %v1429
      %v1526 = vunpack.c.l.b16 %v1430
      %v1527 = vunpack.c.l.b16 %v1431
      %v1528 = vunpack.c.l.b16 %v1432
      %v1529 = vunpack.c.l.b16 %v1433
      %v1530 = vunpack.c.l.b16 %v1434
      %v1531 = vunpack.c.l.b16 %v1435
      %v1532 = vunpack.c.l.b16 %v1436
      %v1533 = vunpack.c.l.b16 %v1437
      %v1534 = vunpack.c.l.b16 %v1438
      %v1535 = vunpack.c.l.b16 %v1439
      %v1536 = vunpack.c.l.b16 %v1440
      %v1537 = vunpack.c.l.b16 %v1441
      %v1538 = vunpack.c.l.b16 %v1442
      %v1539 = vunpack.c.l.b16 %v1443
      %v1540 = vunpack.c.l.b16 %v1444
      %v1541 = vunpack.c.l.b16 %v1445
      %v1542 = vunpack.c.l.b16 %v1446
      %v1543 = vunpack.c.l.b16 %v1447
      %v1544 = vunpack.c.l.b16 %v1448
      %v1545 = vunpack.c.l.b16 %v1449
      %v1546 = vunpack.c.l.b16 %v1450
      %v1547 = vunpack.c.l.b16 %v1451
      %v1548 = vunpack.c.l.b16 %v1452
      %v1549 = vunpack.c.l.b16 %v1453
      %v1550 = vunpack.c.l.b16 %v1454
      %v1551 = vunpack.c.l.b16 %v1455
      %v1552 = vunpack.c.l.b16 %v1456
      %v1553 = vunpack.c.l.b16 %v1457
      %v1554 = vunpack.c.l.b16 %v1458
      %v1555 = vunpack.c.l.b16 %v1459
      %v1556 = vunpack.c.l.b16 %v1460
      %v1557 = vunpack.c.l.b16 %v1461
      %v1558 = vunpack.c.l.b16 %v1462
      %v1559 = vunpack.c.l.b16 %v1463
      %v1560 = vunpack.c.l.b16 %v1464
      %v1561 = vunpack.c.l.b16 %v1465
      %v1562 = vunpack.c.l.b16 %v1466
      %v1563 = vunpack.c.l.b16 %v1467
      %v1564 = vpack.c.b16 %v1517, %v1516
      %v1565 = vpack.c.b16 %v1519, %v1518
      %v1566 = vpack.c.b16 %v1521, %v1520
      %v1567 = vpack.c.b16 %v1523, %v1522
      %v1568 = vpack.c.b16 %v1525, %v1524
      %v1569 = vpack.c.b16 %v1527, %v1526
      %v1570 = vpack.c.b16 %v1529, %v1528
      %v1571 = vpack.c.b16 %v1531, %v1530
      %v1572 = vpack.c.b16 %v1533, %v1532
      %v1573 = vpack.c.b16 %v1535, %v1534
      %v1574 = vpack.c.b16 %v1537, %v1536
      %v1575 = vpack.c.b16 %v1539, %v1538
      %v1576 = vpack.c.b16 %v1541, %v1540
      %v1577 = vpack.c.b16 %v1543, %v1542
      %v1578 = vpack.c.b16 %v1545, %v1544
      %v1579 = vpack.c.b16 %v1547, %v1546
      %v1580 = vpack.c.b16 %v1549, %v1548
      %v1581 = vpack.c.b16 %v1551, %v1550
      %v1582 = vpack.c.b16 %v1553, %v1552
      %v1583 = vpack.c.b16 %v1555, %v1554
      %v1584 = vpack.c.b16 %v1557, %v1556
      %v1585 = vpack.c.b16 %v1559, %v1558
      %v1586 = vpack.c.b16 %v1561, %v1560
      %v1587 = vpack.c.b16 %v1563, %v1562
      %1612 = vmatprep.subr.bf16.mxu0 0
      %1613 = vmatpush1.bf16.msra.mxu0 %v1571
      %1614 = vmatprep.subr.bf16.mxu0 0
      %1615 = vmatpush1.bf16.msra.mxu0 %v1570
      %1616 = vmatprep.subr.bf16.mxu0 0
      %1617 = vmatpush1.bf16.msra.mxu0 %v1569
      %1618 = vmatprep.subr.bf16.mxu0 0
      %1619 = vmatpush1.bf16.msra.mxu0 %v1568
      %1620 = vmatprep.subr.bf16.mxu0 0
      %1621 = vmatpush1.bf16.msra.mxu0 %v1567
      %1622 = vmatprep.subr.bf16.mxu0 0
      %1623 = vmatpush1.bf16.msra.mxu0 %v1566
      %1624 = vmatprep.subr.bf16.mxu0 0
      %1625 = vmatpush1.bf16.msra.mxu0 %v1565
      %1626 = vmatprep.subr.bf16.mxu0 0
      %1627 = vmatpush1.bf16.msra.mxu0 %v1564
      %1628 = vmatprep.subr.bf16.mxu0 0
      %1629 = vmatpush2.bf16.msra.mxu0 %v1579
      %1630 = vmatprep.subr.bf16.mxu0 0
      %1631 = vmatpush2.bf16.msra.mxu0 %v1578
      %1632 = vmatprep.subr.bf16.mxu0 0
      %1633 = vmatpush2.bf16.msra.mxu0 %v1577
      %1634 = vmatprep.subr.bf16.mxu0 0
      %1635 = vmatpush2.bf16.msra.mxu0 %v1576
      %1636 = vmatprep.subr.bf16.mxu0 0
      %1637 = vmatpush2.bf16.msra.mxu0 %v1575
      %1638 = vmatprep.subr.bf16.mxu0 0
      %1639 = vmatpush2.bf16.msra.mxu0 %v1574
      %1640 = vmatprep.subr.bf16.mxu0 0
      %1641 = vmatpush2.bf16.msra.mxu0 %v1573
      %1642 = vmatprep.subr.bf16.mxu0 0
      %1643 = vmatpush2.bf16.msra.mxu0 %v1572
      %1644 = vmatprep.mubr.bf16.mxu0 %v492
      %1645 = vmatmul.mubr.bf16.gmra.mxu0 %v585
      %v1646 = vpop.f32.mrf.mxu0
      %v1647 = vadd.f32 0.0, %v1646
      %v1648 = vpop.f32.mrf.mxu0
      %v1649 = vpop.f32.mrf.mxu0
      %v1650 = vadd.f32 0.0, %v1649
      %v1651 = vpop.f32.mrf.mxu0
      %1652 = vmatprep.mubr.bf16.mxu0 %v493
      %1653 = vmatmul.mubr.bf16.gmra.mxu0 %v586
      %v1654 = vpop.f32.mrf.mxu0
      %v1655 = vadd.f32 0.0, %v1654
      %v1656 = vpop.f32.mrf.mxu0
      %v1657 = vpop.f32.mrf.mxu0
      %v1658 = vadd.f32 0.0, %v1657
      %v1659 = vpop.f32.mrf.mxu0
      %1660 = vmatprep.mubr.bf16.mxu0 %v494
      %1661 = vmatmul.mubr.bf16.gmra.mxu0 %v587
      %v1662 = vpop.f32.mrf.mxu0
      %v1663 = vadd.f32 0.0, %v1662
      %v1664 = vpop.f32.mrf.mxu0
      %v1665 = vpop.f32.mrf.mxu0
      %v1666 = vadd.f32 0.0, %v1665
      %v1667 = vpop.f32.mrf.mxu0
      %1668 = vmatprep.mubr.bf16.mxu0 %v495
      %1669 = vmatmul.mubr.bf16.gmra.mxu0 %v588
      %v1670 = vpop.f32.mrf.mxu0
      %v1671 = vadd.f32 0.0, %v1670
      %v1672 = vpop.f32.mrf.mxu0
      %v1673 = vpop.f32.mrf.mxu0
      %v1674 = vadd.f32 0.0, %v1673
      %v1675 = vpop.f32.mrf.mxu0
      %1676 = vmatprep.mubr.bf16.mxu0 %v496
      %1677 = vmatmul.mubr.bf16.gmra.mxu0 %v589
      %v1678 = vpop.f32.mrf.mxu0
      %v1679 = vadd.f32 0.0, %v1678
      %v1680 = vpop.f32.mrf.mxu0
      %v1681 = vpop.f32.mrf.mxu0
      %v1682 = vadd.f32 0.0, %v1681
      %v1683 = vpop.f32.mrf.mxu0
      %1684 = vmatprep.mubr.bf16.mxu0 %v497
      %1685 = vmatmul.mubr.bf16.gmra.mxu0 %v590
      %v1686 = vpop.f32.mrf.mxu0
      %v1687 = vadd.f32 0.0, %v1686
      %v1688 = vpop.f32.mrf.mxu0
      %v1689 = vpop.f32.mrf.mxu0
      %v1690 = vadd.f32 0.0, %v1689
      %v1691 = vpop.f32.mrf.mxu0
      %1692 = vmatprep.mubr.bf16.mxu0 %v498
      %1693 = vmatmul.mubr.bf16.gmra.mxu0 %v591
      %v1694 = vpop.f32.mrf.mxu0
      %v1695 = vadd.f32 0.0, %v1694
      %v1696 = vpop.f32.mrf.mxu0
      %v1697 = vpop.f32.mrf.mxu0
      %v1698 = vadd.f32 0.0, %v1697
      %v1699 = vpop.f32.mrf.mxu0
      %1700 = vmatprep.mubr.bf16.mxu0 %v499
      %1701 = vmatmul.mubr.bf16.gmra.mxu0 %v592
      %v1702 = vpop.f32.mrf.mxu0
      %v1703 = vadd.f32 0.0, %v1702
      %v1704 = vpop.f32.mrf.mxu0
      %v1705 = vpop.f32.mrf.mxu0
      %v1706 = vadd.f32 0.0, %v1705
      %v1707 = vpop.f32.mrf.mxu0
      %1708 = vdwg.mxu0
      %1709 = vmatprep.subr.bf16.mxu0 0
      %1710 = vmatpush1.bf16.msra.mxu0 %v1587
      %1711 = vmatprep.subr.bf16.mxu0 0
      %1712 = vmatpush1.bf16.msra.mxu0 %v1586
      %1713 = vmatprep.subr.bf16.mxu0 0
      %1714 = vmatpush1.bf16.msra.mxu0 %v1585
      %1715 = vmatprep.subr.bf16.mxu0 0
      %1716 = vmatpush1.bf16.msra.mxu0 %v1584
      %1717 = vmatprep.subr.bf16.mxu0 0
      %1718 = vmatpush1.bf16.msra.mxu0 %v1583
      %1719 = vmatprep.subr.bf16.mxu0 0
      %1720 = vmatpush1.bf16.msra.mxu0 %v1582
      %1721 = vmatprep.subr.bf16.mxu0 0
      %1722 = vmatpush1.bf16.msra.mxu0 %v1581
      %1723 = vmatprep.subr.bf16.mxu0 0
      %1724 = vmatpush1.bf16.msra.mxu0 %v1580
      %1725 = vmatprep.subr.bf16.mxu0 0
      %1726 = vmatpush2.bf16.msra.mxu0 0
      %1727 = vmatprep.subr.bf16.mxu0 0
      %1728 = vmatpush2.bf16.msra.mxu0 0
      %1729 = vmatprep.subr.bf16.mxu0 0
      %1730 = vmatpush2.bf16.msra.mxu0 0
      %1731 = vmatprep.subr.bf16.mxu0 0
      %1732 = vmatpush2.bf16.msra.mxu0 0
      %1733 = vmatprep.subr.bf16.mxu0 0
      %1734 = vmatpush2.bf16.msra.mxu0 0
      %1735 = vmatprep.subr.bf16.mxu0 0
      %1736 = vmatpush2.bf16.msra.mxu0 0
      %1737 = vmatprep.subr.bf16.mxu0 0
      %1738 = vmatpush2.bf16.msra.mxu0 0
      %1739 = vmatprep.subr.bf16.mxu0 0
      %1740 = vmatpush2.bf16.msra.mxu0 0
      %1741 = vmatprep.mubr.bf16.mxu0 0
      %1742 = vmatmul.mubr.bf16.gmra.mxu0 %v628
      %v1743 = vpop.f32.mrf.mxu0
      %v1744 = vadd.f32 %v1647, %v1743
      %v1745 = vpop.f32.mrf.mxu0
      %v1746 = vpop.f32.mrf.mxu0
      %v1747 = vadd.f32 %v1650, %v1746
      %v1748 = vpop.f32.mrf.mxu0
      %1749 = vmatprep.mubr.bf16.mxu0 0
      %1750 = vmatmul.mubr.bf16.gmra.mxu0 %v629
      %v1751 = vpop.f32.mrf.mxu0
      %v1752 = vadd.f32 %v1655, %v1751
      %v1753 = vpop.f32.mrf.mxu0
      %v1754 = vpop.f32.mrf.mxu0
      %v1755 = vadd.f32 %v1658, %v1754
      %v1756 = vpop.f32.mrf.mxu0
      %1757 = vmatprep.mubr.bf16.mxu0 0
      %1758 = vmatmul.mubr.bf16.gmra.mxu0 %v630
      %v1759 = vpop.f32.mrf.mxu0
      %v1760 = vadd.f32 %v1663, %v1759
      %v1761 = vpop.f32.mrf.mxu0
      %v1762 = vpop.f32.mrf.mxu0
      %v1763 = vadd.f32 %v1666, %v1762
      %v1764 = vpop.f32.mrf.mxu0
      %1765 = vmatprep.mubr.bf16.mxu0 0
      %1766 = vmatmul.mubr.bf16.gmra.mxu0 %v631
      %v1767 = vpop.f32.mrf.mxu0
      %v1768 = vadd.f32 %v1671, %v1767
      %v1769 = vpop.f32.mrf.mxu0
      %v1770 = vpop.f32.mrf.mxu0
      %v1771 = vadd.f32 %v1674, %v1770
      %v1772 = vpop.f32.mrf.mxu0
      %1773 = vmatprep.mubr.bf16.mxu0 0
      %1774 = vmatmul.mubr.bf16.gmra.mxu0 %v632
      %v1775 = vpop.f32.mrf.mxu0
      %v1776 = vadd.f32 %v1679, %v1775
      %v1777 = vpop.f32.mrf.mxu0
      %v1778 = vpop.f32.mrf.mxu0
      %v1779 = vadd.f32 %v1682, %v1778
      %v1780 = vpop.f32.mrf.mxu0
      %1781 = vmatprep.mubr.bf16.mxu0 0
      %1782 = vmatmul.mubr.bf16.gmra.mxu0 %v633
      %v1783 = vpop.f32.mrf.mxu0
      %v1784 = vadd.f32 %v1687, %v1783
      %v1785 = vpop.f32.mrf.mxu0
      %v1786 = vpop.f32.mrf.mxu0
      %v1787 = vadd.f32 %v1690, %v1786
      %v1788 = vpop.f32.mrf.mxu0
      %1789 = vmatprep.mubr.bf16.mxu0 0
      %1790 = vmatmul.mubr.bf16.gmra.mxu0 %v634
      %v1791 = vpop.f32.mrf.mxu0
      %v1792 = vadd.f32 %v1695, %v1791
      %v1793 = vpop.f32.mrf.mxu0
      %v1794 = vpop.f32.mrf.mxu0
      %v1795 = vadd.f32 %v1698, %v1794
      %v1796 = vpop.f32.mrf.mxu0
      %1797 = vmatprep.mubr.bf16.mxu0 0
      %1798 = vmatmul.mubr.bf16.gmra.mxu0 %v635
      %v1799 = vpop.f32.mrf.mxu0
      %v1800 = vadd.f32 %v1703, %v1799
      %v1801 = vpop.f32.mrf.mxu0
      %v1802 = vpop.f32.mrf.mxu0
      %v1803 = vadd.f32 %v1706, %v1802
      %v1804 = vpop.f32.mrf.mxu0
      %1805 = vdwg.mxu0
      %v1806 = vadd.f32 %v1357, %v1744
      %v1807 = vadd.f32 %v1360, %v1747
      %v1808 = vadd.f32 %v1365, %v1752
      %v1809 = vadd.f32 %v1368, %v1755
      %v1810 = vadd.f32 %v1373, %v1760
      %v1811 = vadd.f32 %v1376, %v1763
      %v1812 = vadd.f32 %v1381, %v1768
      %v1813 = vadd.f32 %v1384, %v1771
      %v1814 = vadd.f32 %v1389, %v1776
      %v1815 = vadd.f32 %v1392, %v1779
      %v1816 = vadd.f32 %v1397, %v1784
      %v1817 = vadd.f32 %v1400, %v1787
      %v1818 = vadd.f32 %v1405, %v1792
      %v1819 = vadd.f32 %v1408, %v1795
      %v1820 = vadd.f32 %v1413, %v1800
      %v1821 = vadd.f32 %v1416, %v1803
      %v1822 = vld [vmem:[%s4] sm:$0x1]
      %v1824 = vlaneseq
      %v1825 = vshrl.u32 %v1824, 7
      %v1826 = vsub.s32 0, %v1825
      %v1827 = vrot.slane %v1822, %v1826
      %v1829 = vadd.f32 %v1806, %v1827
      %v1830 = vadd.f32 %v1807, %v1827
      %v1831 = vadd.f32 %v1808, %v1827
      %v1832 = vadd.f32 %v1809, %v1827
      %v1833 = vadd.f32 %v1810, %v1827
      %v1834 = vadd.f32 %v1811, %v1827
      %v1835 = vadd.f32 %v1812, %v1827
      %v1836 = vadd.f32 %v1813, %v1827
      %v1837 = vadd.f32 %v1814, %v1827
      %v1838 = vadd.f32 %v1815, %v1827
      %v1839 = vadd.f32 %v1816, %v1827
      %v1840 = vadd.f32 %v1817, %v1827
      %v1841 = vadd.f32 %v1818, %v1827
      %v1842 = vadd.f32 %v1819, %v1827
      %v1843 = vadd.f32 %v1820, %v1827
      %v1844 = vadd.f32 %v1821, %v1827
      %v1845 = vmax.f32 %v1829, 0.0
      %v1846 = vmax.f32 %v1830, 0.0
      %v1847 = vmax.f32 %v1831, 0.0
      %v1848 = vmax.f32 %v1832, 0.0
      %v1849 = vmax.f32 %v1833, 0.0
      %v1850 = vmax.f32 %v1834, 0.0
      %v1851 = vmax.f32 %v1835, 0.0
      %v1852 = vmax.f32 %v1836, 0.0
      %v1853 = vmax.f32 %v1837, 0.0
      %v1854 = vmax.f32 %v1838, 0.0
      %v1855 = vmax.f32 %v1839, 0.0
      %v1856 = vmax.f32 %v1840, 0.0
      %v1857 = vmax.f32 %v1841, 0.0
      %v1858 = vmax.f32 %v1842, 0.0
      %v1859 = vmax.f32 %v1843, 0.0
      %v1860 = vmax.f32 %v1844, 0.0
      %v1861 = vpack.c.bf16 %v1846, %v1845
      %v1862 = vpack.c.bf16 %v1848, %v1847
      %v1863 = vpack.c.bf16 %v1850, %v1849
      %v1864 = vpack.c.bf16 %v1852, %v1851
      %v1865 = vpack.c.bf16 %v1854, %v1853
      %v1866 = vpack.c.bf16 %v1856, %v1855
      %v1867 = vpack.c.bf16 %v1858, %v1857
      %v1868 = vpack.c.bf16 %v1860, %v1859
      %v1877 = vunpack.c.l.b16 %v1861
      %v1878 = vunpack.c.h.b16 %v1861
      %v1879 = vunpack.c.l.b16 %v1862
      %v1880 = vunpack.c.h.b16 %v1862
      %v1881 = vunpack.c.l.b16 %v1863
      %v1882 = vunpack.c.h.b16 %v1863
      %v1883 = vunpack.c.l.b16 %v1864
      %v1884 = vunpack.c.h.b16 %v1864
      %v1885 = vunpack.c.l.b16 %v1865
      %v1886 = vunpack.c.h.b16 %v1865
      %v1887 = vunpack.c.l.b16 %v1866
      %v1888 = vunpack.c.h.b16 %v1866
      %v1889 = vunpack.c.l.b16 %v1867
      %v1890 = vunpack.c.h.b16 %v1867
      %v1891 = vunpack.c.l.b16 %v1868
      %v1892 = vunpack.c.h.b16 %v1868
      %v1893 = vpack.c.b16 %v1877, %v1877
      %v1894 = vpack.c.b16 %v1878, %v1878
      %v1895 = vpack.c.b16 %v1879, %v1879
      %v1896 = vpack.c.b16 %v1880, %v1880
      %v1897 = vpack.c.b16 %v1881, %v1881
      %v1898 = vpack.c.b16 %v1882, %v1882
      %v1899 = vpack.c.b16 %v1883, %v1883
      %v1900 = vpack.c.b16 %v1884, %v1884
      %v1901 = vpack.c.b16 %v1885, %v1885
      %v1902 = vpack.c.b16 %v1886, %v1886
      %v1903 = vpack.c.b16 %v1887, %v1887
      %v1904 = vpack.c.b16 %v1888, %v1888
      %v1905 = vpack.c.b16 %v1889, %v1889
      %v1906 = vpack.c.b16 %v1890, %v1890
      %v1907 = vpack.c.b16 %v1891, %v1891
      %v1908 = vpack.c.b16 %v1892, %v1892
      %1925 = vst [vmem:[%s391] sm:$0xf] %v1893
      %1926 = vst [vmem:[%s391 + $0x4] sm:$0xf] %v1894
      %1927 = vst [vmem:[%s391 + $0x8] sm:$0xf] %v1895
      %1928 = vst [vmem:[%s391 + $0xc] sm:$0xf] %v1896
      %1929 = vst [vmem:[%s391 + $0x10] sm:$0xf] %v1897
      %1930 = vst [vmem:[%s391 + $0x14] sm:$0xf] %v1898
      %1931 = vst [vmem:[%s391 + $0x18] sm:$0xf] %v1899
      %1932 = vst [vmem:[%s391 + $0x1c] sm:$0xf] %v1900
      %1933 = vst [vmem:[%s391 + $0x20] sm:$0xf] %v1901
      %1934 = vst [vmem:[%s391 + $0x24] sm:$0xf] %v1902
      %1935 = vst [vmem:[%s391 + $0x28] sm:$0xf] %v1903
      %1936 = vst [vmem:[%s391 + $0x2c] sm:$0xf] %v1904
      %1937 = vst [vmem:[%s391 + $0x30] sm:$0xf] %v1905
      %1938 = vst [vmem:[%s391 + $0x34] sm:$0xf] %v1906
      %1939 = vst [vmem:[%s391 + $0x38] sm:$0xf] %v1907
      %1940 = vst [vmem:[%s391 + $0x3c] sm:$0xf] %v1908
      %s1941 = smul.u32 8, %s21
      %p1942 = scmp.lt.s32.totalorder %s20, 1
      %s1943 = scalar_select %p1942, %s20, 1
      %p1944 = scmp.lt.s32.totalorder %s1941, 15
      %s1945 = scalar_select %p1944, %s1941, 15
      %s1946 = smul.addr %s1945, 2
      %s1947 = smul.addr %s1943, 32
      %s1948 = sadd.s32 %s1946, %s1947
      %s1949 = smul.addr %s1948, 4
      %s1950 = scalar_lea.vmem %s5, %s1949
      // Predicated region
      $region41: #{_lambda_.4} parent=39 // pred_check
        %p1951 = pneg %p190
      $region42: #{_lambda_.4} parent=39 // pred_check_branch
        %1953 = sbr.rel (%p1951) target = $region44
      $region43: #{_lambda_.4} parent=39 // pred_region
        %s1954 = smul.u32 8, %s21
      $region44: #{_lambda_.4} parent=39 // pred_fallthru
        _
    $region40: #{_lambda_.4} parent=5 // pred_fallthru
      _
    %p1955 = scmp.le.s32.totalorder 2, %s11
    // Predicated region
    $region45: #{_lambda_.4} parent=5 // pred_check
      %p1956 = pneg %p1955
    $region46: #{_lambda_.4} parent=5 // pred_check_branch
      %1958 = sbr.rel (%p1956) target = $region48
    $region47: #{_lambda_.4} parent=5 // pred_region
      %s1959 = ssub.s32 %s11, 2
      // Predicated region
      $region49: #{_lambda_.4} parent=47 // pred_check
        %p1960 = pneg %p196
      $region50: #{_lambda_.4} parent=47 // pred_check_branch
        %1962 = sbr.rel (%p1960) target = $region52
      $region51: #{_lambda_.4} parent=47 // pred_region
        %s1963 = smul.u32 8, %s23
        %p1964 = scmp.lt.s32.totalorder %s22, 1
        %s1965 = scalar_select %p1964, %s22, 1
        %p1966 = scmp.lt.s32.totalorder %s1963, 15
        %s1967 = scalar_select %p1966, %s1963, 15
        %s1968 = smul.addr %s1967, 2
        %s1969 = smul.addr %s1965, 32
        %s1970 = sadd.s32 %s1968, %s1969
        %s1971 = smul.addr %s1970, 4
        %s1972 = scalar_lea.vmem %s5, %s1971
      $region52: #{_lambda_.4} parent=47 // pred_fallthru
        _
    $region48: #{_lambda_.4} parent=5 // pred_fallthru
      _
  $region6: #{_lambda_.4} parent=0 // loop_footer
    %s15 = sadd.s32 1, %s11
  $region7: #{_lambda_.4} parent=0 // loop_footer_branch
    %10 = sbr.rel target = $region3
  $region8: #{_lambda_.4} parent=0 // loop_exit
    _

// kernel: _lambda_.5
$region0: #{_lambda_.5}
  #allocation0 [shape = 'u32[]', space=smem, size = 0x4, offset = 0x4, fixed_abs, tag = 'smem constant byte address 0x4 - core index']
  #allocation1 [shape = 'u32[144,128]{1,0:T(1,128)}', space=vmem, size = 0x12000, scoped, tag = 'internal scratch']
  %s0 = inlined_call_operand.vmem [shape: bf16[2,16,16,128], index: 0, kind: input, shape index: {}, may-alias: {0,1,2}]
  %s1 = inlined_call_operand.vmem [shape: bf16[2,16,16,128], index: 1, kind: input, shape index: {}, may-alias: {0,1,2}]
  %s2 = inlined_call_operand.vmem [shape: bf16[2,16,16,128], index: 2, kind: input, shape index: {}, may-alias: {0,1,2}]
  %s3 = inlined_call_operand.vmem [shape: bf16[3,384,128], index: 3, kind: input, shape index: {}]
  %s4 = inlined_call_operand.vmem [shape: f32[1,128], index: 4, kind: input, shape index: {}]
  %s5 = inlined_call_operand.vmem [shape: f32[2,16,16,128], index: 5, kind: output, shape index: {}]
  %s6 = sld [smem:[#allocation0]]
  $region53: #{_lambda_.5} parent=0
    _
  %s8 = ssub.s32 1, %s6
  %s9 = scalar_select 0, %s8, %s6
  loop: start=0, step=1, limit=6
  $region2: #{_lambda_.5} parent=0 // loop_pre_header
    _
  $region3: #{_lambda_.5} parent=0 // loop_header
    %s11 = sphi 0, %s15
    %p12 = scmp.ge.s32.totalorder %s11, 6
    %s18 = sphi 0, %s30
    %s19 = sphi 0, %s26
    %s20 = sphi 0, %s18
    %s21 = sphi 0, %s19
    %s22 = sphi 0, %s20
    %s23 = sphi 0, %s21
    %s43 = sphi 0, %s45
    %s46 = sphi 0, %s43
    %s47 = sphi 0, %s46
    %s63 = sphi 0, %s47
    %s71 = sphi 0, %s73
    %s74 = sphi 0, %s71
    %s75 = sphi 0, %s74
    %s91 = sphi 0, %s75
    %s107 = sphi 0, %s109
    %s110 = sphi 0, %s107
    %s111 = sphi 0, %s110
    %s127 = sphi 0, %s111
    %s131 = sphi 0, %s131
    %s133 = sphi 0, %s131
    %s134 = sphi 0, %s133
    %s148 = sphi 0, %s134
    %s152 = sphi 0, %s152
    %s154 = sphi 0, %s152
    %s155 = sphi 0, %s154
    %s169 = sphi 0, %s155
    %s177 = sphi 0, %s179
    %s180 = sphi 0, %s177
    %s181 = sphi 0, %s180
    %s197 = sphi 0, %s181
  $region4: #{_lambda_.5} parent=0 // loop_header_branch
    %14 = sbr.rel (%p12) target = $region8
  $region5: #{_lambda_.5} parent=0 // loop_body
    %s16 = ssub.s32 %s11, 1
    %s17 = ssub.s32 %s11, 2
    %s24 = sadd.s32 1, %s19
    %p25 = scmp.ge.s32.totalorder %s24, 2
    %s26 = scalar_select %p25, 0, %s24
    %s27 = sadd.s32 1, %s18
    %s28 = scalar_select %p25, %s27, %s18
    %p29 = scmp.ge.s32.totalorder %s28, 2
    %s30 = scalar_select %p29, 0, %s28
    %s31 = smul.u32 %s19, 8
    %s32 = ssub.s32 %s31, 1
    %p33 = scmp.gt.s32.totalorder %s32, 0
    %s34 = scalar_select %p33, %s32, 0
    %s35 = smul.u32 %s26, 8
    %s36 = ssub.s32 %s35, 1
    %p37 = scmp.gt.s32.totalorder %s36, 0
    %s38 = scalar_select %p37, %s36, 0
    %s39 = ssub.s32 %s18, %s30
    %s40 = ssub.s32 %s34, %s38
    %s41 = sor.u32 %s39, %s40
    %p42 = scmp.eq.s32.totalorder %s41, 0
    %s44 = sadd.s32 %s43, 1
    %s45 = scalar_select %p42, %s43, %s44
    %p48 = pneg %p42
    %p49 = scmp.eq.s32.totalorder %s11, 3
    %p50 = por %p48, %p49
    %p51 = scmp.ne.s32.totalorder %s43, %s46
    %p52 = scmp.eq.s32.totalorder %s11, 0
    %p53 = por %p51, %p52
    %p54 = scmp.ne.s32.totalorder %s43, %s46
    %p55 = scmp.eq.s32.totalorder %s16, 3
    %p56 = por %p54, %p55
    %p57 = scmp.ne.s32.totalorder %s46, %s47
    %p58 = scmp.eq.s32.totalorder %s16, 0
    %p59 = por %p57, %p58
    %p60 = scmp.ne.s32.totalorder %s46, %s47
    %p61 = scmp.eq.s32.totalorder %s17, 3
    %p62 = por %p60, %p61
    %p64 = scmp.ne.s32.totalorder %s47, %s63
    %p65 = scmp.eq.s32.totalorder %s17, 0
    %p66 = por %p64, %p65
    %s67 = ssub.s32 %s18, %s30
    %s68 = ssub.s32 %s19, %s26
    %s69 = sor.u32 %s67, %s68
    %p70 = scmp.eq.s32.totalorder %s69, 0
    %s72 = sadd.s32 %s71, 1
    %s73 = scalar_select %p70, %s71, %s72
    %p76 = pneg %p70
    %p77 = scmp.eq.s32.totalorder %s11, 3
    %p78 = por %p76, %p77
    %p79 = scmp.ne.s32.totalorder %s71, %s74
    %p80 = scmp.eq.s32.totalorder %s11, 0
    %p81 = por %p79, %p80
    %p82 = scmp.ne.s32.totalorder %s71, %s74
    %p83 = scmp.eq.s32.totalorder %s16, 3
    %p84 = por %p82, %p83
    %p85 = scmp.ne.s32.totalorder %s74, %s75
    %p86 = scmp.eq.s32.totalorder %s16, 0
    %p87 = por %p85, %p86
    %p88 = scmp.ne.s32.totalorder %s74, %s75
    %p89 = scmp.eq.s32.totalorder %s17, 3
    %p90 = por %p88, %p89
    %p92 = scmp.ne.s32.totalorder %s75, %s91
    %p93 = scmp.eq.s32.totalorder %s17, 0
    %p94 = por %p92, %p93
    %s95 = sadd.s32 %s19, 1
    %s96 = smul.u32 %s95, 8
    %p97 = scmp.lt.s32.totalorder %s96, 15
    %s98 = scalar_select %p97, %s96, 15
    %s99 = sadd.s32 %s26, 1
    %s100 = smul.u32 %s99, 8
    %p101 = scmp.lt.s32.totalorder %s100, 15
    %s102 = scalar_select %p101, %s100, 15
    %s103 = ssub.s32 %s18, %s30
    %s104 = ssub.s32 %s98, %s102
    %s105 = sor.u32 %s103, %s104
    %p106 = scmp.eq.s32.totalorder %s105, 0
    %s108 = sadd.s32 %s107, 1
    %s109 = scalar_select %p106, %s107, %s108
    %p112 = pneg %p106
    %p113 = scmp.eq.s32.totalorder %s11, 3
    %p114 = por %p112, %p113
    %p115 = scmp.ne.s32.totalorder %s107, %s110
    %p116 = scmp.eq.s32.totalorder %s11, 0
    %p117 = por %p115, %p116
    %p118 = scmp.ne.s32.totalorder %s107, %s110
    %p119 = scmp.eq.s32.totalorder %s16, 3
    %p120 = por %p118, %p119
    %p121 = scmp.ne.s32.totalorder %s110, %s111
    %p122 = scmp.eq.s32.totalorder %s16, 0
    %p123 = por %p121, %p122
    %p124 = scmp.ne.s32.totalorder %s110, %s111
    %p125 = scmp.eq.s32.totalorder %s17, 3
    %p126 = por %p124, %p125
    %p128 = scmp.ne.s32.totalorder %s111, %s127
    %p129 = scmp.eq.s32.totalorder %s17, 0
    %p130 = por %p128, %p129
    %s132 = sadd.s32 %s131, 1
    %p135 = scmp.eq.s32.totalorder %s11, 3
    %p136 = scmp.ne.s32.totalorder %s131, %s133
    %p137 = scmp.eq.s32.totalorder %s11, 0
    %p138 = por %p136, %p137
    %p139 = scmp.ne.s32.totalorder %s131, %s133
    %p140 = scmp.eq.s32.totalorder %s16, 3
    %p141 = por %p139, %p140
    %p142 = scmp.ne.s32.totalorder %s133, %s134
    %p143 = scmp.eq.s32.totalorder %s16, 0
    %p144 = por %p142, %p143
    %p145 = scmp.ne.s32.totalorder %s133, %s134
    %p146 = scmp.eq.s32.totalorder %s17, 3
    %p147 = por %p145, %p146
    %p149 = scmp.ne.s32.totalorder %s134, %s148
    %p150 = scmp.eq.s32.totalorder %s17, 0
    %p151 = por %p149, %p150
    %s153 = sadd.s32 %s152, 1
    %p156 = scmp.eq.s32.totalorder %s11, 3
    %p157 = scmp.ne.s32.totalorder %s152, %s154
    %p158 = scmp.eq.s32.totalorder %s11, 0
    %p159 = por %p157, %p158
    %p160 = scmp.ne.s32.totalorder %s152, %s154
    %p161 = scmp.eq.s32.totalorder %s16, 3
    %p162 = por %p160, %p161
    %p163 = scmp.ne.s32.totalorder %s154, %s155
    %p164 = scmp.eq.s32.totalorder %s16, 0
    %p165 = por %p163, %p164
    %p166 = scmp.ne.s32.totalorder %s154, %s155
    %p167 = scmp.eq.s32.totalorder %s17, 3
    %p168 = por %p166, %p167
    %p170 = scmp.ne.s32.totalorder %s155, %s169
    %p171 = scmp.eq.s32.totalorder %s17, 0
    %p172 = por %p170, %p171
    %s173 = ssub.s32 %s18, %s30
    %s174 = ssub.s32 %s19, %s26
    %s175 = sor.u32 %s173, %s174
    %p176 = scmp.eq.s32.totalorder %s175, 0
    %s178 = sadd.s32 %s177, 1
    %s179 = scalar_select %p176, %s177, %s178
    %p182 = pneg %p176
    %p183 = scmp.eq.s32.totalorder %s11, 3
    %p184 = por %p182, %p183
    %p185 = scmp.ne.s32.totalorder %s177, %s180
    %p186 = scmp.eq.s32.totalorder %s11, 0
    %p187 = por %p185, %p186
    %p188 = scmp.ne.s32.totalorder %s177, %s180
    %p189 = scmp.eq.s32.totalorder %s16, 3
    %p190 = por %p188, %p189
    %p191 = scmp.ne.s32.totalorder %s180, %s181
    %p192 = scmp.eq.s32.totalorder %s16, 0
    %p193 = por %p191, %p192
    %p194 = scmp.ne.s32.totalorder %s180, %s181
    %p195 = scmp.eq.s32.totalorder %s17, 3
    %p196 = por %p194, %p195
    %p198 = scmp.ne.s32.totalorder %s181, %s197
    %p199 = scmp.eq.s32.totalorder %s17, 0
    %p200 = por %p198, %p199
    %p201 = scmp.le.s32.totalorder 1, %s11
    %p202 = scmp.lt.s32.totalorder %s11, 5
    %p203 = pnand %p201, %p202
    %p204 = pneg %p203
    // Predicated region
    $region9: #{_lambda_.5} parent=5 // pred_check
      _
    $region10: #{_lambda_.5} parent=5 // pred_check_branch
      %206 = sbr.rel (%p203) target = $region12
    $region11: #{_lambda_.5} parent=5 // pred_region
      %s207 = ssub.s32 %s11, 1
      // Predicated region
      $region13: #{_lambda_.5} parent=11 // pred_check
        %p208 = pneg %p144
      $region14: #{_lambda_.5} parent=11 // pred_check_branch
        %210 = sbr.rel (%p208) target = $region16
      $region15: #{_lambda_.5} parent=11 // pred_region
        _
      $region16: #{_lambda_.5} parent=11 // pred_fallthru
        _
      // Predicated region
      $region17: #{_lambda_.5} parent=11 // pred_check
        %p211 = pneg %p165
      $region18: #{_lambda_.5} parent=11 // pred_check_branch
        %213 = sbr.rel (%p211) target = $region20
      $region19: #{_lambda_.5} parent=11 // pred_region
        _
      $region20: #{_lambda_.5} parent=11 // pred_fallthru
        _
    $region12: #{_lambda_.5} parent=5 // pred_fallthru
      _
    %p214 = scmp.lt.s32.totalorder %s11, 4
    // Predicated region
    $region21: #{_lambda_.5} parent=5 // pred_check
      %p215 = pneg %p214
    $region22: #{_lambda_.5} parent=5 // pred_check_branch
      %217 = sbr.rel (%p215) target = $region24
    $region23: #{_lambda_.5} parent=5 // pred_region
      // Predicated region
      $region25: #{_lambda_.5} parent=23 // pred_check
        %p218 = pneg %p53
      $region26: #{_lambda_.5} parent=23 // pred_check_branch
        %220 = sbr.rel (%p218) target = $region28
      $region27: #{_lambda_.5} parent=23 // pred_region
        %s221 = smul.u32 %s19, 8
        %s222 = ssub.s32 %s221, 1
        %p223 = scmp.gt.s32.totalorder %s222, 0
        %s224 = scalar_select %p223, %s222, 0
        %p225 = scmp.lt.s32.totalorder %s18, 1
        %s226 = scalar_select %p225, %s18, 1
        %p227 = scmp.lt.s32.totalorder %s224, 15
        %s228 = scalar_select %p227, %s224, 15
        %s229 = smul.addr %s228, 2
        %s230 = smul.addr %s226, 32
        %s231 = sadd.s32 %s229, %s230
        %s232 = smul.addr %s231, 4
        %s233 = scalar_lea.vmem %s0, %s232
        %s234 = smul.u32 %s19, 8
        %s235 = ssub.s32 %s234, 1
        %p236 = scmp.gt.s32.totalorder %s235, 0
        %s237 = scalar_select %p236, %s235, 0
      $region28: #{_lambda_.5} parent=23 // pred_fallthru
        _
      // Predicated region
      $region29: #{_lambda_.5} parent=23 // pred_check
        %p238 = pneg %p81
      $region30: #{_lambda_.5} parent=23 // pred_check_branch
        %240 = sbr.rel (%p238) target = $region32
      $region31: #{_lambda_.5} parent=23 // pred_region
        %s241 = smul.u32 8, %s19
        %p242 = scmp.lt.s32.totalorder %s18, 1
        %s243 = scalar_select %p242, %s18, 1
        %p244 = scmp.lt.s32.totalorder %s241, 15
        %s245 = scalar_select %p244, %s241, 15
        %s246 = smul.addr %s245, 2
        %s247 = smul.addr %s243, 32
        %s248 = sadd.s32 %s246, %s247
        %s249 = smul.addr %s248, 4
        %s250 = scalar_lea.vmem %s1, %s249
        %s251 = smul.u32 8, %s19
      $region32: #{_lambda_.5} parent=23 // pred_fallthru
        _
      // Predicated region
      $region33: #{_lambda_.5} parent=23 // pred_check
        %p252 = pneg %p117
      $region34: #{_lambda_.5} parent=23 // pred_check_branch
        %254 = sbr.rel (%p252) target = $region36
      $region35: #{_lambda_.5} parent=23 // pred_region
        %s255 = sadd.s32 %s19, 1
        %s256 = smul.u32 %s255, 8
        %p257 = scmp.lt.s32.totalorder %s256, 15
        %s258 = scalar_select %p257, %s256, 15
        %p259 = scmp.lt.s32.totalorder %s18, 1
        %s260 = scalar_select %p259, %s18, 1
        %p261 = scmp.lt.s32.totalorder %s258, 15
        %s262 = scalar_select %p261, %s258, 15
        %s263 = smul.addr %s262, 2
        %s264 = smul.addr %s260, 32
        %s265 = sadd.s32 %s263, %s264
        %s266 = smul.addr %s265, 4
        %s267 = scalar_lea.vmem %s2, %s266
        %s268 = sadd.s32 %s19, 1
        %s269 = smul.u32 %s268, 8
        %p270 = scmp.lt.s32.totalorder %s269, 15
        %s271 = scalar_select %p270, %s269, 15
      $region36: #{_lambda_.5} parent=23 // pred_fallthru
        _
    $region24: #{_lambda_.5} parent=5 // pred_fallthru
      _
    %p272 = scmp.le.s32.totalorder 1, %s11
    %p273 = scmp.lt.s32.totalorder %s11, 5
    %p274 = pnand %p272, %p273
    %p275 = pneg %p274
    // Predicated region
    $region37: #{_lambda_.5} parent=5 // pred_check
      _
    $region38: #{_lambda_.5} parent=5 // pred_check_branch
      %277 = sbr.rel (%p274) target = $region40
    $region39: #{_lambda_.5} parent=5 // pred_region
      %s278 = ssub.s32 %s11, 1
      %s279 = smul.u32 %s21, 8
      %s280 = ssub.s32 %s279, 1
      %p281 = scmp.gt.s32.totalorder %s280, 0
      %s282 = scalar_select %p281, %s280, 0
      %p283 = scmp.lt.s32.totalorder %s20, 1
      %s284 = scalar_select %p283, %s20, 1
      %p285 = scmp.lt.s32.totalorder %s282, 15
      %s286 = scalar_select %p285, %s282, 15
      %s287 = smul.addr %s286, 2
      %s288 = smul.addr %s284, 32
      %s289 = sadd.s32 %s287, %s288
      %s290 = smul.addr %s289, 4
      %s291 = scalar_lea.vmem %s0, %s290
      %p292 = pneg %p59
      %p293 = pneg %p56
      %s294 = smul.u32 8, %s21
      %p295 = scmp.lt.s32.totalorder %s20, 1
      %s296 = scalar_select %p295, %s20, 1
      %p297 = scmp.lt.s32.totalorder %s294, 15
      %s298 = scalar_select %p297, %s294, 15
      %s299 = smul.addr %s298, 2
      %s300 = smul.addr %s296, 32
      %s301 = sadd.s32 %s299, %s300
      %s302 = smul.addr %s301, 4
      %s303 = scalar_lea.vmem %s1, %s302
      %p304 = pneg %p87
      %p305 = pneg %p84
      %s306 = sadd.s32 %s21, 1
      %s307 = smul.u32 %s306, 8
      %p308 = scmp.lt.s32.totalorder %s307, 15
      %s309 = scalar_select %p308, %s307, 15
      %p310 = scmp.lt.s32.totalorder %s20, 1
      %s311 = scalar_select %p310, %s20, 1
      %p312 = scmp.lt.s32.totalorder %s309, 15
      %s313 = scalar_select %p312, %s309, 15
      %s314 = smul.addr %s313, 2
      %s315 = smul.addr %s311, 32
      %s316 = sadd.s32 %s314, %s315
      %s317 = smul.addr %s316, 4
      %s318 = scalar_lea.vmem %s2, %s317
      %p319 = pneg %p123
      %p320 = pneg %p120
      %p321 = pneg %p144
      %p322 = pneg %p141
      %p323 = pneg %p165
      %p324 = pneg %p162
      %p325 = pneg %p193
      %p326 = pneg %p190
      %s327 = smul.u32 8, %s21
      %p328 = scmp.lt.s32.totalorder %s20, 1
      %s329 = scalar_select %p328, %s20, 1
      %p330 = scmp.lt.s32.totalorder %s327, 15
      %s331 = scalar_select %p330, %s327, 15
      %s332 = smul.addr %s331, 2
      %s333 = smul.addr %s329, 32
      %s334 = sadd.s32 %s332, %s333
      %s335 = smul.addr %s334, 8
      %s336 = scalar_lea.vmem %s5, %s335
      %s337 = smul.u32 %s21, 8
      %s338 = ssub.s32 %s337, 1
      %p339 = scmp.gt.s32.totalorder %s338, 0
      %s340 = scalar_select %p339, %s338, 0
      %p341 = scmp.lt.s32.totalorder %s20, 1
      %s342 = scalar_select %p341, %s20, 1
      %p343 = scmp.lt.s32.totalorder %s340, 15
      %s344 = scalar_select %p343, %s340, 15
      %s345 = smul.addr %s344, 2
      %s346 = smul.addr %s342, 32
      %s347 = sadd.s32 %s345, %s346
      %s348 = smul.addr %s347, 4
      %s349 = scalar_lea.vmem %s0, %s348
      %s350 = smul.u32 %s21, 8
      %s351 = ssub.s32 %s350, 1
      %p352 = scmp.gt.s32.totalorder %s351, 0
      %s353 = scalar_select %p352, %s351, 0
      %s354 = smul.u32 8, %s21
      %p355 = scmp.lt.s32.totalorder %s20, 1
      %s356 = scalar_select %p355, %s20, 1
      %p357 = scmp.lt.s32.totalorder %s354, 15
      %s358 = scalar_select %p357, %s354, 15
      %s359 = smul.addr %s358, 2
      %s360 = smul.addr %s356, 32
      %s361 = sadd.s32 %s359, %s360
      %s362 = smul.addr %s361, 4
      %s363 = scalar_lea.vmem %s1, %s362
      %s364 = smul.u32 8, %s21
      %s365 = sadd.s32 %s21, 1
      %s366 = smul.u32 %s365, 8
      %p367 = scmp.lt.s32.totalorder %s366, 15
      %s368 = scalar_select %p367, %s366, 15
      %p369 = scmp.lt.s32.totalorder %s20, 1
      %s370 = scalar_select %p369, %s20, 1
      %p371 = scmp.lt.s32.totalorder %s368, 15
      %s372 = scalar_select %p371, %s368, 15
      %s373 = smul.addr %s372, 2
      %s374 = smul.addr %s370, 32
      %s375 = sadd.s32 %s373, %s374
      %s376 = smul.addr %s375, 4
      %s377 = scalar_lea.vmem %s2, %s376
      %s378 = sadd.s32 %s21, 1
      %s379 = smul.u32 %s378, 8
      %p380 = scmp.lt.s32.totalorder %s379, 15
      %s381 = scalar_select %p380, %s379, 15
      %s382 = smul.u32 8, %s21
      %p383 = scmp.lt.s32.totalorder %s20, 1
      %s384 = scalar_select %p383, %s20, 1
      %p385 = scmp.lt.s32.totalorder %s382, 15
      %s386 = scalar_select %p385, %s382, 15
      %s387 = smul.addr %s386, 2
      %s388 = smul.addr %s384, 32
      %s389 = sadd.s32 %s387, %s388
      %s390 = smul.addr %s389, 8
      %s391 = scalar_lea.vmem %s5, %s390
      %s392 = smul.u32 8, %s21
      %p394 = scmp.gt.s32.totalorder %s21, 0
      %s395 = scalar_select %p394, 1.0, 0.0
      %p397 = scmp.ne.f32.partialorder %s395, %s395
      %s398 = sshrl.u32 %s395, 16
      %s399 = sand.u32 %s398, 1
      %s400 = sadd.s32 32767, %s399
      %s401 = sadd.s32 %s395, %s400
      %s402 = sand.u32 %s401, 4294901760
      %s403 = scalar_select %p397, 2143289344, %s402
      %s405 = sshrl.u32 %s403, 16
      %p406 = scmp.lt.s32.totalorder %s21, 1
      %s407 = scalar_select %p406, 1.0, 0.0
      %p409 = scmp.ne.f32.partialorder %s407, %s407
      %s410 = sshrl.u32 %s407, 16
      %s411 = sand.u32 %s410, 1
      %s412 = sadd.s32 32767, %s411
      %s413 = sadd.s32 %s407, %s412
      %s414 = sand.u32 %s413, 4294901760
      %s415 = scalar_select %p409, 2143289344, %s414
      %s417 = sshrl.u32 %s415, 16
      %v418 = vld [vmem:[%s349] sm:$0xf]
      %v419 = vld [vmem:[%s349 + $0x4] sm:$0xf]
      %s420 = sshll.u32 %s405, 16
      %s421 = sor.u32 %s405, %s420
      %v422 = vstv %s421
      %v424 = vmul.bf16 %v418, %v422
      %v425 = vmul.bf16 %v419, %v422
      %v426 = vld [vmem:[%s363] sm:$0xf]
      %v427 = vld [vmem:[%s363 + $0x4] sm:$0xf]
      %v428 = vld [vmem:[%s363 + $0x8] sm:$0xf]
      %v429 = vld [vmem:[%s363 + $0xc] sm:$0xf]
      %v430 = vld [vmem:[%s363 + $0x10] sm:$0xf]
      %v431 = vld [vmem:[%s363 + $0x14] sm:$0xf]
      %v432 = vld [vmem:[%s363 + $0x18] sm:$0xf]
      %v433 = vld [vmem:[%s363 + $0x1c] sm:$0xf]
      %v434 = vld [vmem:[%s363 + $0x20] sm:$0xf]
      %v435 = vld [vmem:[%s363 + $0x24] sm:$0xf]
      %v436 = vld [vmem:[%s363 + $0x28] sm:$0xf]
      %v437 = vld [vmem:[%s363 + $0x2c] sm:$0xf]
      %v438 = vld [vmem:[%s363 + $0x30] sm:$0xf]
      %v439 = vld [vmem:[%s363 + $0x34] sm:$0xf]
      %v440 = vld [vmem:[%s363 + $0x38] sm:$0xf]
      %v441 = vld [vmem:[%s363 + $0x3c] sm:$0xf]
      %v442 = vld [vmem:[%s377] sm:$0xf]
      %v443 = vld [vmem:[%s377 + $0x4] sm:$0xf]
      %s444 = sshll.u32 %s417, 16
      %s445 = sor.u32 %s417, %s444
      %v446 = vstv %s445
      %v448 = vmul.bf16 %v442, %v446
      %v449 = vmul.bf16 %v443, %v446
      %v470 = vunpack.c.l.b16 %v424
      %v471 = vunpack.c.l.b16 %v425
      %v472 = vunpack.c.l.b16 %v426
      %v473 = vunpack.c.l.b16 %v427
      %v474 = vunpack.c.l.b16 %v428
      %v475 = vunpack.c.l.b16 %v429
      %v476 = vunpack.c.l.b16 %v430
      %v477 = vunpack.c.l.b16 %v431
      %v478 = vunpack.c.l.b16 %v432
      %v479 = vunpack.c.l.b16 %v433
      %v480 = vunpack.c.l.b16 %v434
      %v481 = vunpack.c.l.b16 %v435
      %v482 = vunpack.c.l.b16 %v436
      %v483 = vunpack.c.l.b16 %v437
      %v484 = vunpack.c.l.b16 %v438
      %v485 = vunpack.c.l.b16 %v439
      %v486 = vunpack.c.l.b16 %v440
      %v487 = vunpack.c.l.b16 %v441
      %v488 = vunpack.c.l.b16 %v448
      %v489 = vunpack.c.l.b16 %v449
      %v490 = vpack.c.b16 %v471, %v470
      %v491 = vpack.c.b16 %v473, %v472
      %v492 = vpack.c.b16 %v475, %v474
      %v493 = vpack.c.b16 %v477, %v476
      %v494 = vpack.c.b16 %v479, %v478
      %v495 = vpack.c.b16 %v481, %v480
      %v496 = vpack.c.b16 %v483, %v482
      %v497 = vpack.c.b16 %v485, %v484
      %v498 = vpack.c.b16 %v487, %v486
      %v499 = vpack.c.b16 %v489, %v488
      %v501 = vshrl.u32 %v490, 16
      %v503 = vrot.slane %v501, 7
      %v504 = vshll.u32 %v490, 16
      %v506 = vor.u32 %v503, %v504
      %v508 = vshrl.u32 %v491, 16
      %v510 = vrot.slane %v508, 7
      %v511 = vshll.u32 %v491, 16
      %v513 = vor.u32 %v510, %v511
      %v515 = vshrl.u32 %v492, 16
      %v517 = vrot.slane %v515, 7
      %v518 = vshll.u32 %v492, 16
      %v520 = vor.u32 %v517, %v518
      %v522 = vshrl.u32 %v493, 16
      %v524 = vrot.slane %v522, 7
      %v525 = vshll.u32 %v493, 16
      %v527 = vor.u32 %v524, %v525
      %v529 = vshrl.u32 %v494, 16
      %v531 = vrot.slane %v529, 7
      %v532 = vshll.u32 %v494, 16
      %v534 = vor.u32 %v531, %v532
      %v536 = vshrl.u32 %v495, 16
      %v538 = vrot.slane %v536, 7
      %v539 = vshll.u32 %v495, 16
      %v541 = vor.u32 %v538, %v539
      %v543 = vshrl.u32 %v496, 16
      %v545 = vrot.slane %v543, 7
      %v546 = vshll.u32 %v496, 16
      %v548 = vor.u32 %v545, %v546
      %v550 = vshrl.u32 %v497, 16
      %v552 = vrot.slane %v550, 7
      %v553 = vshll.u32 %v497, 16
      %v555 = vor.u32 %v552, %v553
      %v557 = vshrl.u32 %v498, 16
      %v559 = vrot.slane %v557, 7
      %v560 = vshll.u32 %v498, 16
      %v562 = vor.u32 %v559, %v560
      %v564 = vshrl.u32 %v499, 16
      %v566 = vrot.slane %v564, 7
      %v567 = vshll.u32 %v499, 16
      %v569 = vor.u32 %v566, %v567
      %vm580 = vcmask 1040384
      %vm581 = vsmask.f32 256
      %vm582 = vmand %vm580, %vm581
      %v583 = vsel %vm582, 0, %v506
      %v584 = vsel %vm582, 0, %v513
      %v585 = vsel %vm582, 0, %v520
      %v586 = vsel %vm582, 0, %v527
      %v587 = vsel %vm582, 0, %v534
      %v588 = vsel %vm582, 0, %v541
      %v589 = vsel %vm582, 0, %v548
      %v590 = vsel %vm582, 0, %v555
      %v591 = vsel %vm582, 0, %v562
      %v592 = vsel %vm582, 0, %v569
      %v593 = vrot.slane %v504, 1
      %v594 = vor.u32 %v501, %v593
      %v595 = vrot.slane %v511, 1
      %v596 = vor.u32 %v508, %v595
      %v597 = vrot.slane %v518, 1
      %v598 = vor.u32 %v515, %v597
      %v599 = vrot.slane %v525, 1
      %v600 = vor.u32 %v522, %v599
      %v601 = vrot.slane %v532, 1
      %v602 = vor.u32 %v529, %v601
      %v603 = vrot.slane %v539, 1
      %v604 = vor.u32 %v536, %v603
      %v605 = vrot.slane %v546, 1
      %v606 = vor.u32 %v543, %v605
      %v607 = vrot.slane %v553, 1
      %v608 = vor.u32 %v550, %v607
      %v609 = vrot.slane %v560, 1
      %v610 = vor.u32 %v557, %v609
      %v611 = vrot.slane %v567, 1
      %v612 = vor.u32 %v564, %v611
      %vm623 = vcmask 1047552
      %vm624 = vsmask.f32 7424
      %vm625 = vmand %vm623, %vm624
      %v626 = vsel %vm625, %v594, 0
      %v627 = vsel %vm625, %v596, 0
      %v628 = vsel %vm625, %v598, 0
      %v629 = vsel %vm625, %v600, 0
      %v630 = vsel %vm625, %v602, 0
      %v631 = vsel %vm625, %v604, 0
      %v632 = vsel %vm625, %v606, 0
      %v633 = vsel %vm625, %v608, 0
      %v634 = vsel %vm625, %v610, 0
      %v635 = vsel %vm625, %v612, 0
      %v646 = vld [vmem:[%s3] sm:$0xf]
      %v647 = vld [vmem:[%s3 + $0x4] sm:$0xf]
      %v648 = vld [vmem:[%s3 + $0x8] sm:$0xf]
      %v649 = vld [vmem:[%s3 + $0xc] sm:$0xf]
      %v650 = vld [vmem:[%s3 + $0x10] sm:$0xf]
      %v651 = vld [vmem:[%s3 + $0x14] sm:$0xf]
      %v652 = vld [vmem:[%s3 + $0x18] sm:$0xf]
      %v653 = vld [vmem:[%s3 + $0x1c] sm:$0xf]
      %v654 = vld [vmem:[%s3 + $0x20] sm:$0xf]
      %v655 = vld [vmem:[%s3 + $0x24] sm:$0xf]
      %v656 = vld [vmem:[%s3 + $0x28] sm:$0xf]
      %v657 = vld [vmem:[%s3 + $0x2c] sm:$0xf]
      %v658 = vld [vmem:[%s3 + $0x30] sm:$0xf]
      %v659 = vld [vmem:[%s3 + $0x34] sm:$0xf]
      %v660 = vld [vmem:[%s3 + $0x38] sm:$0xf]
      %v661 = vld [vmem:[%s3 + $0x3c] sm:$0xf]
      %v662 = vld [vmem:[%s3 + $0x40] sm:$0xf]
      %v663 = vld [vmem:[%s3 + $0x44] sm:$0xf]
      %v664 = vld [vmem:[%s3 + $0x48] sm:$0xf]
      %v665 = vld [vmem:[%s3 + $0x4c] sm:$0xf]
      %v666 = vld [vmem:[%s3 + $0x50] sm:$0xf]
      %v667 = vld [vmem:[%s3 + $0x54] sm:$0xf]
      %v668 = vld [vmem:[%s3 + $0x58] sm:$0xf]
      %v669 = vld [vmem:[%s3 + $0x5c] sm:$0xf]
      %v670 = vld [vmem:[%s3 + $0x60] sm:$0xf]
      %v671 = vld [vmem:[%s3 + $0x64] sm:$0xf]
      %v672 = vld [vmem:[%s3 + $0x68] sm:$0xf]
      %v673 = vld [vmem:[%s3 + $0x6c] sm:$0xf]
      %v674 = vld [vmem:[%s3 + $0x70] sm:$0xf]
      %v675 = vld [vmem:[%s3 + $0x74] sm:$0xf]
      %v676 = vld [vmem:[%s3 + $0x78] sm:$0xf]
      %v677 = vld [vmem:[%s3 + $0x7c] sm:$0xf]
      %v678 = vld [vmem:[%s3 + $0x80] sm:$0xf]
      %v679 = vld [vmem:[%s3 + $0x84] sm:$0xf]
      %v680 = vld [vmem:[%s3 + $0x88] sm:$0xf]
      %v681 = vld [vmem:[%s3 + $0x8c] sm:$0xf]
      %v682 = vld [vmem:[%s3 + $0x90] sm:$0xf]
      %v683 = vld [vmem:[%s3 + $0x94] sm:$0xf]
      %v684 = vld [vmem:[%s3 + $0x98] sm:$0xf]
      %v685 = vld [vmem:[%s3 + $0x9c] sm:$0xf]
      %v686 = vld [vmem:[%s3 + $0xa0] sm:$0xf]
      %v687 = vld [vmem:[%s3 + $0xa4] sm:$0xf]
      %v688 = vld [vmem:[%s3 + $0xa8] sm:$0xf]
      %v689 = vld [vmem:[%s3 + $0xac] sm:$0xf]
      %v690 = vld [vmem:[%s3 + $0xb0] sm:$0xf]
      %v691 = vld [vmem:[%s3 + $0xb4] sm:$0xf]
      %v692 = vld [vmem:[%s3 + $0xb8] sm:$0xf]
      %v693 = vld [vmem:[%s3 + $0xbc] sm:$0xf]
      %s694 = scalar_lea.vmem %s3, 192
      %v695 = vld [vmem:[%s694] sm:$0xf]
      %v696 = vld [vmem:[%s694 + $0x4] sm:$0xf]
      %v697 = vld [vmem:[%s694 + $0x8] sm:$0xf]
      %v698 = vld [vmem:[%s694 + $0xc] sm:$0xf]
      %v699 = vld [vmem:[%s694 + $0x10] sm:$0xf]
      %v700 = vld [vmem:[%s694 + $0x14] sm:$0xf]
      %v701 = vld [vmem:[%s694 + $0x18] sm:$0xf]
      %v702 = vld [vmem:[%s694 + $0x1c] sm:$0xf]
      %v703 = vld [vmem:[%s694 + $0x20] sm:$0xf]
      %v704 = vld [vmem:[%s694 + $0x24] sm:$0xf]
      %v705 = vld [vmem:[%s694 + $0x28] sm:$0xf]
      %v706 = vld [vmem:[%s694 + $0x2c] sm:$0xf]
      %v707 = vld [vmem:[%s694 + $0x30] sm:$0xf]
      %v708 = vld [vmem:[%s694 + $0x34] sm:$0xf]
      %v709 = vld [vmem:[%s694 + $0x38] sm:$0xf]
      %v710 = vld [vmem:[%s694 + $0x3c] sm:$0xf]
      %v711 = vld [vmem:[%s694 + $0x40] sm:$0xf]
      %v712 = vld [vmem:[%s694 + $0x44] sm:$0xf]
      %v713 = vld [vmem:[%s694 + $0x48] sm:$0xf]
      %v714 = vld [vmem:[%s694 + $0x4c] sm:$0xf]
      %v715 = vld [vmem:[%s694 + $0x50] sm:$0xf]
      %v716 = vld [vmem:[%s694 + $0x54] sm:$0xf]
      %v717 = vld [vmem:[%s694 + $0x58] sm:$0xf]
      %v718 = vld [vmem:[%s694 + $0x5c] sm:$0xf]
      %v719 = vld [vmem:[%s694 + $0x60] sm:$0xf]
      %v720 = vld [vmem:[%s694 + $0x64] sm:$0xf]
      %v721 = vld [vmem:[%s694 + $0x68] sm:$0xf]
      %v722 = vld [vmem:[%s694 + $0x6c] sm:$0xf]
      %v723 = vld [vmem:[%s694 + $0x70] sm:$0xf]
      %v724 = vld [vmem:[%s694 + $0x74] sm:$0xf]
      %v725 = vld [vmem:[%s694 + $0x78] sm:$0xf]
      %v726 = vld [vmem:[%s694 + $0x7c] sm:$0xf]
      %v727 = vld [vmem:[%s694 + $0x80] sm:$0xf]
      %v728 = vld [vmem:[%s694 + $0x84] sm:$0xf]
      %v729 = vld [vmem:[%s694 + $0x88] sm:$0xf]
      %v730 = vld [vmem:[%s694 + $0x8c] sm:$0xf]
      %v731 = vld [vmem:[%s694 + $0x90] sm:$0xf]
      %v732 = vld [vmem:[%s694 + $0x94] sm:$0xf]
      %v733 = vld [vmem:[%s694 + $0x98] sm:$0xf]
      %v734 = vld [vmem:[%s694 + $0x9c] sm:$0xf]
      %v735 = vld [vmem:[%s694 + $0xa0] sm:$0xf]
      %v736 = vld [vmem:[%s694 + $0xa4] sm:$0xf]
      %v737 = vld [vmem:[%s694 + $0xa8] sm:$0xf]
      %v738 = vld [vmem:[%s694 + $0xac] sm:$0xf]
      %v739 = vld [vmem:[%s694 + $0xb0] sm:$0xf]
      %v740 = vld [vmem:[%s694 + $0xb4] sm:$0xf]
      %v741 = vld [vmem:[%s694 + $0xb8] sm:$0xf]
      %v742 = vld [vmem:[%s694 + $0xbc] sm:$0xf]
      %v791 = vunpack.c.l.b16 %v695
      %v792 = vunpack.c.l.b16 %v696
      %v793 = vunpack.c.l.b16 %v697
      %v794 = vunpack.c.l.b16 %v698
      %v795 = vunpack.c.l.b16 %v699
      %v796 = vunpack.c.l.b16 %v700
      %v797 = vunpack.c.l.b16 %v701
      %v798 = vunpack.c.l.b16 %v702
      %v799 = vunpack.c.l.b16 %v703
      %v800 = vunpack.c.l.b16 %v704
      %v801 = vunpack.c.l.b16 %v705
      %v802 = vunpack.c.l.b16 %v706
      %v803 = vunpack.c.l.b16 %v707
      %v804 = vunpack.c.l.b16 %v708
      %v805 = vunpack.c.l.b16 %v709
      %v806 = vunpack.c.l.b16 %v710
      %v807 = vunpack.c.l.b16 %v711
      %v808 = vunpack.c.l.b16 %v712
      %v809 = vunpack.c.l.b16 %v713
      %v810 = vunpack.c.l.b16 %v714
      %v811 = vunpack.c.l.b16 %v715
      %v812 = vunpack.c.l.b16 %v716
      %v813 = vunpack.c.l.b16 %v717
      %v814 = vunpack.c.l.b16 %v718
      %v815 = vunpack.c.l.b16 %v719
      %v816 = vunpack.c.l.b16 %v720
      %v817 = vunpack.c.l.b16 %v721
      %v818 = vunpack.c.l.b16 %v722
      %v819 = vunpack.c.l.b16 %v723
      %v820 = vunpack.c.l.b16 %v724
      %v821 = vunpack.c.l.b16 %v725
      %v822 = vunpack.c.l.b16 %v726
      %v823 = vunpack.c.l.b16 %v727
      %v824 = vunpack.c.l.b16 %v728
      %v825 = vunpack.c.l.b16 %v729
      %v826 = vunpack.c.l.b16 %v730
      %v827 = vunpack.c.l.b16 %v731
      %v828 = vunpack.c.l.b16 %v732
      %v829 = vunpack.c.l.b16 %v733
      %v830 = vunpack.c.l.b16 %v734
      %v831 = vunpack.c.l.b16 %v735
      %v832 = vunpack.c.l.b16 %v736
      %v833 = vunpack.c.l.b16 %v737
      %v834 = vunpack.c.l.b16 %v738
      %v835 = vunpack.c.l.b16 %v739
      %v836 = vunpack.c.l.b16 %v740
      %v837 = vunpack.c.l.b16 %v741
      %v838 = vunpack.c.l.b16 %v742
      %v839 = vpack.c.b16 %v792, %v791
      %v840 = vpack.c.b16 %v794, %v793
      %v841 = vpack.c.b16 %v796, %v795
      %v842 = vpack.c.b16 %v798, %v797
      %v843 = vpack.c.b16 %v800, %v799
      %v844 = vpack.c.b16 %v802, %v801
      %v845 = vpack.c.b16 %v804, %v803
      %v846 = vpack.c.b16 %v806, %v805
      %v847 = vpack.c.b16 %v808, %v807
      %v848 = vpack.c.b16 %v810, %v809
      %v849 = vpack.c.b16 %v812, %v811
      %v850 = vpack.c.b16 %v814, %v813
      %v851 = vpack.c.b16 %v816, %v815
      %v852 = vpack.c.b16 %v818, %v817
      %v853 = vpack.c.b16 %v820, %v819
      %v854 = vpack.c.b16 %v822, %v821
      %v855 = vpack.c.b16 %v824, %v823
      %v856 = vpack.c.b16 %v826, %v825
      %v857 = vpack.c.b16 %v828, %v827
      %v858 = vpack.c.b16 %v830, %v829
      %v859 = vpack.c.b16 %v832, %v831
      %v860 = vpack.c.b16 %v834, %v833
      %v861 = vpack.c.b16 %v836, %v835
      %v862 = vpack.c.b16 %v838, %v837
      %887 = vmatprep.subr.bf16.mxu0 0
      %888 = vmatpush1.bf16.msra.mxu0 %v846
      %889 = vmatprep.subr.bf16.mxu0 0
      %890 = vmatpush1.bf16.msra.mxu0 %v845
      %891 = vmatprep.subr.bf16.mxu0 0
      %892 = vmatpush1.bf16.msra.mxu0 %v844
      %893 = vmatprep.subr.bf16.mxu0 0
      %894 = vmatpush1.bf16.msra.mxu0 %v843
      %895 = vmatprep.subr.bf16.mxu0 0
      %896 = vmatpush1.bf16.msra.mxu0 %v842
      %897 = vmatprep.subr.bf16.mxu0 0
      %898 = vmatpush1.bf16.msra.mxu0 %v841
      %899 = vmatprep.subr.bf16.mxu0 0
      %900 = vmatpush1.bf16.msra.mxu0 %v840
      %901 = vmatprep.subr.bf16.mxu0 0
      %902 = vmatpush1.bf16.msra.mxu0 %v839
      %903 = vmatprep.subr.bf16.mxu0 0
      %904 = vmatpush2.bf16.msra.mxu0 %v854
      %905 = vmatprep.subr.bf16.mxu0 0
      %906 = vmatpush2.bf16.msra.mxu0 %v853
      %907 = vmatprep.subr.bf16.mxu0 0
      %908 = vmatpush2.bf16.msra.mxu0 %v852
      %909 = vmatprep.subr.bf16.mxu0 0
      %910 = vmatpush2.bf16.msra.mxu0 %v851
      %911 = vmatprep.subr.bf16.mxu0 0
      %912 = vmatpush2.bf16.msra.mxu0 %v850
      %913 = vmatprep.subr.bf16.mxu0 0
      %914 = vmatpush2.bf16.msra.mxu0 %v849
      %915 = vmatprep.subr.bf16.mxu0 0
      %916 = vmatpush2.bf16.msra.mxu0 %v848
      %917 = vmatprep.subr.bf16.mxu0 0
      %918 = vmatpush2.bf16.msra.mxu0 %v847
      %919 = vmatprep.mubr.bf16.mxu0 %v491
      %920 = vmatmul.mubr.bf16.gmra.mxu0 %v584
      %v921 = vpop.f32.mrf.mxu0
      %v922 = vadd.f32 0.0, %v921
      %v923 = vpop.f32.mrf.mxu0
      %v924 = vpop.f32.mrf.mxu0
      %v925 = vadd.f32 0.0, %v924
      %v926 = vpop.f32.mrf.mxu0
      %927 = vmatprep.mubr.bf16.mxu0 %v492
      %928 = vmatmul.mubr.bf16.gmra.mxu0 %v585
      %v929 = vpop.f32.mrf.mxu0
      %v930 = vadd.f32 0.0, %v929
      %v931 = vpop.f32.mrf.mxu0
      %v932 = vpop.f32.mrf.mxu0
      %v933 = vadd.f32 0.0, %v932
      %v934 = vpop.f32.mrf.mxu0
      %935 = vmatprep.mubr.bf16.mxu0 %v493
      %936 = vmatmul.mubr.bf16.gmra.mxu0 %v586
      %v937 = vpop.f32.mrf.mxu0
      %v938 = vadd.f32 0.0, %v937
      %v939 = vpop.f32.mrf.mxu0
      %v940 = vpop.f32.mrf.mxu0
      %v941 = vadd.f32 0.0, %v940
      %v942 = vpop.f32.mrf.mxu0
      %943 = vmatprep.mubr.bf16.mxu0 %v494
      %944 = vmatmul.mubr.bf16.gmra.mxu0 %v587
      %v945 = vpop.f32.mrf.mxu0
      %v946 = vadd.f32 0.0, %v945
      %v947 = vpop.f32.mrf.mxu0
      %v948 = vpop.f32.mrf.mxu0
      %v949 = vadd.f32 0.0, %v948
      %v950 = vpop.f32.mrf.mxu0
      %951 = vmatprep.mubr.bf16.mxu0 %v495
      %952 = vmatmul.mubr.bf16.gmra.mxu0 %v588
      %v953 = vpop.f32.mrf.mxu0
      %v954 = vadd.f32 0.0, %v953
      %v955 = vpop.f32.mrf.mxu0
      %v956 = vpop.f32.mrf.mxu0
      %v957 = vadd.f32 0.0, %v956
      %v958 = vpop.f32.mrf.mxu0
      %959 = vmatprep.mubr.bf16.mxu0 %v496
      %960 = vmatmul.mubr.bf16.gmra.mxu0 %v589
      %v961 = vpop.f32.mrf.mxu0
      %v962 = vadd.f32 0.0, %v961
      %v963 = vpop.f32.mrf.mxu0
      %v964 = vpop.f32.mrf.mxu0
      %v965 = vadd.f32 0.0, %v964
      %v966 = vpop.f32.mrf.mxu0
      %967 = vmatprep.mubr.bf16.mxu0 %v497
      %968 = vmatmul.mubr.bf16.gmra.mxu0 %v590
      %v969 = vpop.f32.mrf.mxu0
      %v970 = vadd.f32 0.0, %v969
      %v971 = vpop.f32.mrf.mxu0
      %v972 = vpop.f32.mrf.mxu0
      %v973 = vadd.f32 0.0, %v972
      %v974 = vpop.f32.mrf.mxu0
      %975 = vmatprep.mubr.bf16.mxu0 %v498
      %976 = vmatmul.mubr.bf16.gmra.mxu0 %v591
      %v977 = vpop.f32.mrf.mxu0
      %v978 = vadd.f32 0.0, %v977
      %v979 = vpop.f32.mrf.mxu0
      %v980 = vpop.f32.mrf.mxu0
      %v981 = vadd.f32 0.0, %v980
      %v982 = vpop.f32.mrf.mxu0
      %983 = vdwg.mxu0
      %984 = vmatprep.subr.bf16.mxu0 0
      %985 = vmatpush1.bf16.msra.mxu0 %v862
      %986 = vmatprep.subr.bf16.mxu0 0
      %987 = vmatpush1.bf16.msra.mxu0 %v861
      %988 = vmatprep.subr.bf16.mxu0 0
      %989 = vmatpush1.bf16.msra.mxu0 %v860
      %990 = vmatprep.subr.bf16.mxu0 0
      %991 = vmatpush1.bf16.msra.mxu0 %v859
      %992 = vmatprep.subr.bf16.mxu0 0
      %993 = vmatpush1.bf16.msra.mxu0 %v858
      %994 = vmatprep.subr.bf16.mxu0 0
      %995 = vmatpush1.bf16.msra.mxu0 %v857
      %996 = vmatprep.subr.bf16.mxu0 0
      %997 = vmatpush1.bf16.msra.mxu0 %v856
      %998 = vmatprep.subr.bf16.mxu0 0
      %999 = vmatpush1.bf16.msra.mxu0 %v855
      %1000 = vmatprep.subr.bf16.mxu0 0
      %1001 = vmatpush2.bf16.msra.mxu0 0
      %1002 = vmatprep.subr.bf16.mxu0 0
      %1003 = vmatpush2.bf16.msra.mxu0 0
      %1004 = vmatprep.subr.bf16.mxu0 0
      %1005 = vmatpush2.bf16.msra.mxu0 0
      %1006 = vmatprep.subr.bf16.mxu0 0
      %1007 = vmatpush2.bf16.msra.mxu0 0
      %1008 = vmatprep.subr.bf16.mxu0 0
      %1009 = vmatpush2.bf16.msra.mxu0 0
      %1010 = vmatprep.subr.bf16.mxu0 0
      %1011 = vmatpush2.bf16.msra.mxu0 0
      %1012 = vmatprep.subr.bf16.mxu0 0
      %1013 = vmatpush2.bf16.msra.mxu0 0
      %1014 = vmatprep.subr.bf16.mxu0 0
      %1015 = vmatpush2.bf16.msra.mxu0 0
      %1016 = vmatprep.mubr.bf16.mxu0 0
      %1017 = vmatmul.mubr.bf16.gmra.mxu0 %v627
      %v1018 = vpop.f32.mrf.mxu0
      %v1019 = vadd.f32 %v922, %v1018
      %v1020 = vpop.f32.mrf.mxu0
      %v1021 = vpop.f32.mrf.mxu0
      %v1022 = vadd.f32 %v925, %v1021
      %v1023 = vpop.f32.mrf.mxu0
      %1024 = vmatprep.mubr.bf16.mxu0 0
      %1025 = vmatmul.mubr.bf16.gmra.mxu0 %v628
      %v1026 = vpop.f32.mrf.mxu0
      %v1027 = vadd.f32 %v930, %v1026
      %v1028 = vpop.f32.mrf.mxu0
      %v1029 = vpop.f32.mrf.mxu0
      %v1030 = vadd.f32 %v933, %v1029
      %v1031 = vpop.f32.mrf.mxu0
      %1032 = vmatprep.mubr.bf16.mxu0 0
      %1033 = vmatmul.mubr.bf16.gmra.mxu0 %v629
      %v1034 = vpop.f32.mrf.mxu0
      %v1035 = vadd.f32 %v938, %v1034
      %v1036 = vpop.f32.mrf.mxu0
      %v1037 = vpop.f32.mrf.mxu0
      %v1038 = vadd.f32 %v941, %v1037
      %v1039 = vpop.f32.mrf.mxu0
      %1040 = vmatprep.mubr.bf16.mxu0 0
      %1041 = vmatmul.mubr.bf16.gmra.mxu0 %v630
      %v1042 = vpop.f32.mrf.mxu0
      %v1043 = vadd.f32 %v946, %v1042
      %v1044 = vpop.f32.mrf.mxu0
      %v1045 = vpop.f32.mrf.mxu0
      %v1046 = vadd.f32 %v949, %v1045
      %v1047 = vpop.f32.mrf.mxu0
      %1048 = vmatprep.mubr.bf16.mxu0 0
      %1049 = vmatmul.mubr.bf16.gmra.mxu0 %v631
      %v1050 = vpop.f32.mrf.mxu0
      %v1051 = vadd.f32 %v954, %v1050
      %v1052 = vpop.f32.mrf.mxu0
      %v1053 = vpop.f32.mrf.mxu0
      %v1054 = vadd.f32 %v957, %v1053
      %v1055 = vpop.f32.mrf.mxu0
      %1056 = vmatprep.mubr.bf16.mxu0 0
      %1057 = vmatmul.mubr.bf16.gmra.mxu0 %v632
      %v1058 = vpop.f32.mrf.mxu0
      %v1059 = vadd.f32 %v962, %v1058
      %v1060 = vpop.f32.mrf.mxu0
      %v1061 = vpop.f32.mrf.mxu0
      %v1062 = vadd.f32 %v965, %v1061
      %v1063 = vpop.f32.mrf.mxu0
      %1064 = vmatprep.mubr.bf16.mxu0 0
      %1065 = vmatmul.mubr.bf16.gmra.mxu0 %v633
      %v1066 = vpop.f32.mrf.mxu0
      %v1067 = vadd.f32 %v970, %v1066
      %v1068 = vpop.f32.mrf.mxu0
      %v1069 = vpop.f32.mrf.mxu0
      %v1070 = vadd.f32 %v973, %v1069
      %v1071 = vpop.f32.mrf.mxu0
      %1072 = vmatprep.mubr.bf16.mxu0 0
      %1073 = vmatmul.mubr.bf16.gmra.mxu0 %v634
      %v1074 = vpop.f32.mrf.mxu0
      %v1075 = vadd.f32 %v978, %v1074
      %v1076 = vpop.f32.mrf.mxu0
      %v1077 = vpop.f32.mrf.mxu0
      %v1078 = vadd.f32 %v981, %v1077
      %v1079 = vpop.f32.mrf.mxu0
      %1080 = vdwg.mxu0
      %v1129 = vunpack.c.l.b16 %v646
      %v1130 = vunpack.c.l.b16 %v647
      %v1131 = vunpack.c.l.b16 %v648
      %v1132 = vunpack.c.l.b16 %v649
      %v1133 = vunpack.c.l.b16 %v650
      %v1134 = vunpack.c.l.b16 %v651
      %v1135 = vunpack.c.l.b16 %v652
      %v1136 = vunpack.c.l.b16 %v653
      %v1137 = vunpack.c.l.b16 %v654
      %v1138 = vunpack.c.l.b16 %v655
      %v1139 = vunpack.c.l.b16 %v656
      %v1140 = vunpack.c.l.b16 %v657
      %v1141 = vunpack.c.l.b16 %v658
      %v1142 = vunpack.c.l.b16 %v659
      %v1143 = vunpack.c.l.b16 %v660
      %v1144 = vunpack.c.l.b16 %v661
      %v1145 = vunpack.c.l.b16 %v662
      %v1146 = vunpack.c.l.b16 %v663
      %v1147 = vunpack.c.l.b16 %v664
      %v1148 = vunpack.c.l.b16 %v665
      %v1149 = vunpack.c.l.b16 %v666
      %v1150 = vunpack.c.l.b16 %v667
      %v1151 = vunpack.c.l.b16 %v668
      %v1152 = vunpack.c.l.b16 %v669
      %v1153 = vunpack.c.l.b16 %v670
      %v1154 = vunpack.c.l.b16 %v671
      %v1155 = vunpack.c.l.b16 %v672
      %v1156 = vunpack.c.l.b16 %v673
      %v1157 = vunpack.c.l.b16 %v674
      %v1158 = vunpack.c.l.b16 %v675
      %v1159 = vunpack.c.l.b16 %v676
      %v1160 = vunpack.c.l.b16 %v677
      %v1161 = vunpack.c.l.b16 %v678
      %v1162 = vunpack.c.l.b16 %v679
      %v1163 = vunpack.c.l.b16 %v680
      %v1164 = vunpack.c.l.b16 %v681
      %v1165 = vunpack.c.l.b16 %v682
      %v1166 = vunpack.c.l.b16 %v683
      %v1167 = vunpack.c.l.b16 %v684
      %v1168 = vunpack.c.l.b16 %v685
      %v1169 = vunpack.c.l.b16 %v686
      %v1170 = vunpack.c.l.b16 %v687
      %v1171 = vunpack.c.l.b16 %v688
      %v1172 = vunpack.c.l.b16 %v689
      %v1173 = vunpack.c.l.b16 %v690
      %v1174 = vunpack.c.l.b16 %v691
      %v1175 = vunpack.c.l.b16 %v692
      %v1176 = vunpack.c.l.b16 %v693
      %v1177 = vpack.c.b16 %v1130, %v1129
      %v1178 = vpack.c.b16 %v1132, %v1131
      %v1179 = vpack.c.b16 %v1134, %v1133
      %v1180 = vpack.c.b16 %v1136, %v1135
      %v1181 = vpack.c.b16 %v1138, %v1137
      %v1182 = vpack.c.b16 %v1140, %v1139
      %v1183 = vpack.c.b16 %v1142, %v1141
      %v1184 = vpack.c.b16 %v1144, %v1143
      %v1185 = vpack.c.b16 %v1146, %v1145
      %v1186 = vpack.c.b16 %v1148, %v1147
      %v1187 = vpack.c.b16 %v1150, %v1149
      %v1188 = vpack.c.b16 %v1152, %v1151
      %v1189 = vpack.c.b16 %v1154, %v1153
      %v1190 = vpack.c.b16 %v1156, %v1155
      %v1191 = vpack.c.b16 %v1158, %v1157
      %v1192 = vpack.c.b16 %v1160, %v1159
      %v1193 = vpack.c.b16 %v1162, %v1161
      %v1194 = vpack.c.b16 %v1164, %v1163
      %v1195 = vpack.c.b16 %v1166, %v1165
      %v1196 = vpack.c.b16 %v1168, %v1167
      %v1197 = vpack.c.b16 %v1170, %v1169
      %v1198 = vpack.c.b16 %v1172, %v1171
      %v1199 = vpack.c.b16 %v1174, %v1173
      %v1200 = vpack.c.b16 %v1176, %v1175
      %1225 = vmatprep.subr.bf16.mxu0 0
      %1226 = vmatpush1.bf16.msra.mxu0 %v1184
      %1227 = vmatprep.subr.bf16.mxu0 0
      %1228 = vmatpush1.bf16.msra.mxu0 %v1183
      %1229 = vmatprep.subr.bf16.mxu0 0
      %1230 = vmatpush1.bf16.msra.mxu0 %v1182
      %1231 = vmatprep.subr.bf16.mxu0 0
      %1232 = vmatpush1.bf16.msra.mxu0 %v1181
      %1233 = vmatprep.subr.bf16.mxu0 0
      %1234 = vmatpush1.bf16.msra.mxu0 %v1180
      %1235 = vmatprep.subr.bf16.mxu0 0
      %1236 = vmatpush1.bf16.msra.mxu0 %v1179
      %1237 = vmatprep.subr.bf16.mxu0 0
      %1238 = vmatpush1.bf16.msra.mxu0 %v1178
      %1239 = vmatprep.subr.bf16.mxu0 0
      %1240 = vmatpush1.bf16.msra.mxu0 %v1177
      %1241 = vmatprep.subr.bf16.mxu0 0
      %1242 = vmatpush2.bf16.msra.mxu0 %v1192
      %1243 = vmatprep.subr.bf16.mxu0 0
      %1244 = vmatpush2.bf16.msra.mxu0 %v1191
      %1245 = vmatprep.subr.bf16.mxu0 0
      %1246 = vmatpush2.bf16.msra.mxu0 %v1190
      %1247 = vmatprep.subr.bf16.mxu0 0
      %1248 = vmatpush2.bf16.msra.mxu0 %v1189
      %1249 = vmatprep.subr.bf16.mxu0 0
      %1250 = vmatpush2.bf16.msra.mxu0 %v1188
      %1251 = vmatprep.subr.bf16.mxu0 0
      %1252 = vmatpush2.bf16.msra.mxu0 %v1187
      %1253 = vmatprep.subr.bf16.mxu0 0
      %1254 = vmatpush2.bf16.msra.mxu0 %v1186
      %1255 = vmatprep.subr.bf16.mxu0 0
      %1256 = vmatpush2.bf16.msra.mxu0 %v1185
      %1257 = vmatprep.mubr.bf16.mxu0 %v490
      %1258 = vmatmul.mubr.bf16.gmra.mxu0 %v583
      %v1259 = vpop.f32.mrf.mxu0
      %v1260 = vadd.f32 %v1019, %v1259
      %v1261 = vpop.f32.mrf.mxu0
      %v1262 = vpop.f32.mrf.mxu0
      %v1263 = vadd.f32 %v1022, %v1262
      %v1264 = vpop.f32.mrf.mxu0
      %1265 = vmatprep.mubr.bf16.mxu0 %v491
      %1266 = vmatmul.mubr.bf16.gmra.mxu0 %v584
      %v1267 = vpop.f32.mrf.mxu0
      %v1268 = vadd.f32 %v1027, %v1267
      %v1269 = vpop.f32.mrf.mxu0
      %v1270 = vpop.f32.mrf.mxu0
      %v1271 = vadd.f32 %v1030, %v1270
      %v1272 = vpop.f32.mrf.mxu0
      %1273 = vmatprep.mubr.bf16.mxu0 %v492
      %1274 = vmatmul.mubr.bf16.gmra.mxu0 %v585
      %v1275 = vpop.f32.mrf.mxu0
      %v1276 = vadd.f32 %v1035, %v1275
      %v1277 = vpop.f32.mrf.mxu0
      %v1278 = vpop.f32.mrf.mxu0
      %v1279 = vadd.f32 %v1038, %v1278
      %v1280 = vpop.f32.mrf.mxu0
      %1281 = vmatprep.mubr.bf16.mxu0 %v493
      %1282 = vmatmul.mubr.bf16.gmra.mxu0 %v586
      %v1283 = vpop.f32.mrf.mxu0
      %v1284 = vadd.f32 %v1043, %v1283
      %v1285 = vpop.f32.mrf.mxu0
      %v1286 = vpop.f32.mrf.mxu0
      %v1287 = vadd.f32 %v1046, %v1286
      %v1288 = vpop.f32.mrf.mxu0
      %1289 = vmatprep.mubr.bf16.mxu0 %v494
      %1290 = vmatmul.mubr.bf16.gmra.mxu0 %v587
      %v1291 = vpop.f32.mrf.mxu0
      %v1292 = vadd.f32 %v1051, %v1291
      %v1293 = vpop.f32.mrf.mxu0
      %v1294 = vpop.f32.mrf.mxu0
      %v1295 = vadd.f32 %v1054, %v1294
      %v1296 = vpop.f32.mrf.mxu0
      %1297 = vmatprep.mubr.bf16.mxu0 %v495
      %1298 = vmatmul.mubr.bf16.gmra.mxu0 %v588
      %v1299 = vpop.f32.mrf.mxu0
      %v1300 = vadd.f32 %v1059, %v1299
      %v1301 = vpop.f32.mrf.mxu0
      %v1302 = vpop.f32.mrf.mxu0
      %v1303 = vadd.f32 %v1062, %v1302
      %v1304 = vpop.f32.mrf.mxu0
      %1305 = vmatprep.mubr.bf16.mxu0 %v496
      %1306 = vmatmul.mubr.bf16.gmra.mxu0 %v589
      %v1307 = vpop.f32.mrf.mxu0
      %v1308 = vadd.f32 %v1067, %v1307
      %v1309 = vpop.f32.mrf.mxu0
      %v1310 = vpop.f32.mrf.mxu0
      %v1311 = vadd.f32 %v1070, %v1310
      %v1312 = vpop.f32.mrf.mxu0
      %1313 = vmatprep.mubr.bf16.mxu0 %v497
      %1314 = vmatmul.mubr.bf16.gmra.mxu0 %v590
      %v1315 = vpop.f32.mrf.mxu0
      %v1316 = vadd.f32 %v1075, %v1315
      %v1317 = vpop.f32.mrf.mxu0
      %v1318 = vpop.f32.mrf.mxu0
      %v1319 = vadd.f32 %v1078, %v1318
      %v1320 = vpop.f32.mrf.mxu0
      %1321 = vdwg.mxu0
      %1322 = vmatprep.subr.bf16.mxu0 0
      %1323 = vmatpush1.bf16.msra.mxu0 %v1200
      %1324 = vmatprep.subr.bf16.mxu0 0
      %1325 = vmatpush1.bf16.msra.mxu0 %v1199
      %1326 = vmatprep.subr.bf16.mxu0 0
      %1327 = vmatpush1.bf16.msra.mxu0 %v1198
      %1328 = vmatprep.subr.bf16.mxu0 0
      %1329 = vmatpush1.bf16.msra.mxu0 %v1197
      %1330 = vmatprep.subr.bf16.mxu0 0
      %1331 = vmatpush1.bf16.msra.mxu0 %v1196
      %1332 = vmatprep.subr.bf16.mxu0 0
      %1333 = vmatpush1.bf16.msra.mxu0 %v1195
      %1334 = vmatprep.subr.bf16.mxu0 0
      %1335 = vmatpush1.bf16.msra.mxu0 %v1194
      %1336 = vmatprep.subr.bf16.mxu0 0
      %1337 = vmatpush1.bf16.msra.mxu0 %v1193
      %1338 = vmatprep.subr.bf16.mxu0 0
      %1339 = vmatpush2.bf16.msra.mxu0 0
      %1340 = vmatprep.subr.bf16.mxu0 0
      %1341 = vmatpush2.bf16.msra.mxu0 0
      %1342 = vmatprep.subr.bf16.mxu0 0
      %1343 = vmatpush2.bf16.msra.mxu0 0
      %1344 = vmatprep.subr.bf16.mxu0 0
      %1345 = vmatpush2.bf16.msra.mxu0 0
      %1346 = vmatprep.subr.bf16.mxu0 0
      %1347 = vmatpush2.bf16.msra.mxu0 0
      %1348 = vmatprep.subr.bf16.mxu0 0
      %1349 = vmatpush2.bf16.msra.mxu0 0
      %1350 = vmatprep.subr.bf16.mxu0 0
      %1351 = vmatpush2.bf16.msra.mxu0 0
      %1352 = vmatprep.subr.bf16.mxu0 0
      %1353 = vmatpush2.bf16.msra.mxu0 0
      %1354 = vmatprep.mubr.bf16.mxu0 0
      %1355 = vmatmul.mubr.bf16.gmra.mxu0 %v626
      %v1356 = vpop.f32.mrf.mxu0
      %v1357 = vadd.f32 %v1260, %v1356
      %v1358 = vpop.f32.mrf.mxu0
      %v1359 = vpop.f32.mrf.mxu0
      %v1360 = vadd.f32 %v1263, %v1359
      %v1361 = vpop.f32.mrf.mxu0
      %1362 = vmatprep.mubr.bf16.mxu0 0
      %1363 = vmatmul.mubr.bf16.gmra.mxu0 %v627
      %v1364 = vpop.f32.mrf.mxu0
      %v1365 = vadd.f32 %v1268, %v1364
      %v1366 = vpop.f32.mrf.mxu0
      %v1367 = vpop.f32.mrf.mxu0
      %v1368 = vadd.f32 %v1271, %v1367
      %v1369 = vpop.f32.mrf.mxu0
      %1370 = vmatprep.mubr.bf16.mxu0 0
      %1371 = vmatmul.mubr.bf16.gmra.mxu0 %v628
      %v1372 = vpop.f32.mrf.mxu0
      %v1373 = vadd.f32 %v1276, %v1372
      %v1374 = vpop.f32.mrf.mxu0
      %v1375 = vpop.f32.mrf.mxu0
      %v1376 = vadd.f32 %v1279, %v1375
      %v1377 = vpop.f32.mrf.mxu0
      %1378 = vmatprep.mubr.bf16.mxu0 0
      %1379 = vmatmul.mubr.bf16.gmra.mxu0 %v629
      %v1380 = vpop.f32.mrf.mxu0
      %v1381 = vadd.f32 %v1284, %v1380
      %v1382 = vpop.f32.mrf.mxu0
      %v1383 = vpop.f32.mrf.mxu0
      %v1384 = vadd.f32 %v1287, %v1383
      %v1385 = vpop.f32.mrf.mxu0
      %1386 = vmatprep.mubr.bf16.mxu0 0
      %1387 = vmatmul.mubr.bf16.gmra.mxu0 %v630
      %v1388 = vpop.f32.mrf.mxu0
      %v1389 = vadd.f32 %v1292, %v1388
      %v1390 = vpop.f32.mrf.mxu0
      %v1391 = vpop.f32.mrf.mxu0
      %v1392 = vadd.f32 %v1295, %v1391
      %v1393 = vpop.f32.mrf.mxu0
      %1394 = vmatprep.mubr.bf16.mxu0 0
      %1395 = vmatmul.mubr.bf16.gmra.mxu0 %v631
      %v1396 = vpop.f32.mrf.mxu0
      %v1397 = vadd.f32 %v1300, %v1396
      %v1398 = vpop.f32.mrf.mxu0
      %v1399 = vpop.f32.mrf.mxu0
      %v1400 = vadd.f32 %v1303, %v1399
      %v1401 = vpop.f32.mrf.mxu0
      %1402 = vmatprep.mubr.bf16.mxu0 0
      %1403 = vmatmul.mubr.bf16.gmra.mxu0 %v632
      %v1404 = vpop.f32.mrf.mxu0
      %v1405 = vadd.f32 %v1308, %v1404
      %v1406 = vpop.f32.mrf.mxu0
      %v1407 = vpop.f32.mrf.mxu0
      %v1408 = vadd.f32 %v1311, %v1407
      %v1409 = vpop.f32.mrf.mxu0
      %1410 = vmatprep.mubr.bf16.mxu0 0
      %1411 = vmatmul.mubr.bf16.gmra.mxu0 %v633
      %v1412 = vpop.f32.mrf.mxu0
      %v1413 = vadd.f32 %v1316, %v1412
      %v1414 = vpop.f32.mrf.mxu0
      %v1415 = vpop.f32.mrf.mxu0
      %v1416 = vadd.f32 %v1319, %v1415
      %v1417 = vpop.f32.mrf.mxu0
      %1418 = vdwg.mxu0
      %s1419 = scalar_lea.vmem %s3, 384
      %v1420 = vld [vmem:[%s1419] sm:$0xf]
      %v1421 = vld [vmem:[%s1419 + $0x4] sm:$0xf]
      %v1422 = vld [vmem:[%s1419 + $0x8] sm:$0xf]
      %v1423 = vld [vmem:[%s1419 + $0xc] sm:$0xf]
      %v1424 = vld [vmem:[%s1419 + $0x10] sm:$0xf]
      %v1425 = vld [vmem:[%s1419 + $0x14] sm:$0xf]
      %v1426 = vld [vmem:[%s1419 + $0x18] sm:$0xf]
      %v1427 = vld [vmem:[%s1419 + $0x1c] sm:$0xf]
      %v1428 = vld [vmem:[%s1419 + $0x20] sm:$0xf]
      %v1429 = vld [vmem:[%s1419 + $0x24] sm:$0xf]
      %v1430 = vld [vmem:[%s1419 + $0x28] sm:$0xf]
      %v1431 = vld [vmem:[%s1419 + $0x2c] sm:$0xf]
      %v1432 = vld [vmem:[%s1419 + $0x30] sm:$0xf]
      %v1433 = vld [vmem:[%s1419 + $0x34] sm:$0xf]
      %v1434 = vld [vmem:[%s1419 + $0x38] sm:$0xf]
      %v1435 = vld [vmem:[%s1419 + $0x3c] sm:$0xf]
      %v1436 = vld [vmem:[%s1419 + $0x40] sm:$0xf]
      %v1437 = vld [vmem:[%s1419 + $0x44] sm:$0xf]
      %v1438 = vld [vmem:[%s1419 + $0x48] sm:$0xf]
      %v1439 = vld [vmem:[%s1419 + $0x4c] sm:$0xf]
      %v1440 = vld [vmem:[%s1419 + $0x50] sm:$0xf]
      %v1441 = vld [vmem:[%s1419 + $0x54] sm:$0xf]
      %v1442 = vld [vmem:[%s1419 + $0x58] sm:$0xf]
      %v1443 = vld [vmem:[%s1419 + $0x5c] sm:$0xf]
      %v1444 = vld [vmem:[%s1419 + $0x60] sm:$0xf]
      %v1445 = vld [vmem:[%s1419 + $0x64] sm:$0xf]
      %v1446 = vld [vmem:[%s1419 + $0x68] sm:$0xf]
      %v1447 = vld [vmem:[%s1419 + $0x6c] sm:$0xf]
      %v1448 = vld [vmem:[%s1419 + $0x70] sm:$0xf]
      %v1449 = vld [vmem:[%s1419 + $0x74] sm:$0xf]
      %v1450 = vld [vmem:[%s1419 + $0x78] sm:$0xf]
      %v1451 = vld [vmem:[%s1419 + $0x7c] sm:$0xf]
      %v1452 = vld [vmem:[%s1419 + $0x80] sm:$0xf]
      %v1453 = vld [vmem:[%s1419 + $0x84] sm:$0xf]
      %v1454 = vld [vmem:[%s1419 + $0x88] sm:$0xf]
      %v1455 = vld [vmem:[%s1419 + $0x8c] sm:$0xf]
      %v1456 = vld [vmem:[%s1419 + $0x90] sm:$0xf]
      %v1457 = vld [vmem:[%s1419 + $0x94] sm:$0xf]
      %v1458 = vld [vmem:[%s1419 + $0x98] sm:$0xf]
      %v1459 = vld [vmem:[%s1419 + $0x9c] sm:$0xf]
      %v1460 = vld [vmem:[%s1419 + $0xa0] sm:$0xf]
      %v1461 = vld [vmem:[%s1419 + $0xa4] sm:$0xf]
      %v1462 = vld [vmem:[%s1419 + $0xa8] sm:$0xf]
      %v1463 = vld [vmem:[%s1419 + $0xac] sm:$0xf]
      %v1464 = vld [vmem:[%s1419 + $0xb0] sm:$0xf]
      %v1465 = vld [vmem:[%s1419 + $0xb4] sm:$0xf]
      %v1466 = vld [vmem:[%s1419 + $0xb8] sm:$0xf]
      %v1467 = vld [vmem:[%s1419 + $0xbc] sm:$0xf]
      %v1516 = vunpack.c.l.b16 %v1420
      %v1517 = vunpack.c.l.b16 %v1421
      %v1518 = vunpack.c.l.b16 %v1422
      %v1519 = vunpack.c.l.b16 %v1423
      %v1520 = vunpack.c.l.b16 %v1424
      %v1521 = vunpack.c.l.b16 %v1425
      %v1522 = vunpack.c.l.b16 %v1426
      %v1523 = vunpack.c.l.b16 %v1427
      %v1524 = vunpack.c.l.b16 %v1428
      %v1525 = vunpack.c.l.b16 %v1429
      %v1526 = vunpack.c.l.b16 %v1430
      %v1527 = vunpack.c.l.b16 %v1431
      %v1528 = vunpack.c.l.b16 %v1432
      %v1529 = vunpack.c.l.b16 %v1433
      %v1530 = vunpack.c.l.b16 %v1434
      %v1531 = vunpack.c.l.b16 %v1435
      %v1532 = vunpack.c.l.b16 %v1436
      %v1533 = vunpack.c.l.b16 %v1437
      %v1534 = vunpack.c.l.b16 %v1438
      %v1535 = vunpack.c.l.b16 %v1439
      %v1536 = vunpack.c.l.b16 %v1440
      %v1537 = vunpack.c.l.b16 %v1441
      %v1538 = vunpack.c.l.b16 %v1442
      %v1539 = vunpack.c.l.b16 %v1443
      %v1540 = vunpack.c.l.b16 %v1444
      %v1541 = vunpack.c.l.b16 %v1445
      %v1542 = vunpack.c.l.b16 %v1446
      %v1543 = vunpack.c.l.b16 %v1447
      %v1544 = vunpack.c.l.b16 %v1448
      %v1545 = vunpack.c.l.b16 %v1449
      %v1546 = vunpack.c.l.b16 %v1450
      %v1547 = vunpack.c.l.b16 %v1451
      %v1548 = vunpack.c.l.b16 %v1452
      %v1549 = vunpack.c.l.b16 %v1453
      %v1550 = vunpack.c.l.b16 %v1454
      %v1551 = vunpack.c.l.b16 %v1455
      %v1552 = vunpack.c.l.b16 %v1456
      %v1553 = vunpack.c.l.b16 %v1457
      %v1554 = vunpack.c.l.b16 %v1458
      %v1555 = vunpack.c.l.b16 %v1459
      %v1556 = vunpack.c.l.b16 %v1460
      %v1557 = vunpack.c.l.b16 %v1461
      %v1558 = vunpack.c.l.b16 %v1462
      %v1559 = vunpack.c.l.b16 %v1463
      %v1560 = vunpack.c.l.b16 %v1464
      %v1561 = vunpack.c.l.b16 %v1465
      %v1562 = vunpack.c.l.b16 %v1466
      %v1563 = vunpack.c.l.b16 %v1467
      %v1564 = vpack.c.b16 %v1517, %v1516
      %v1565 = vpack.c.b16 %v1519, %v1518
      %v1566 = vpack.c.b16 %v1521, %v1520
      %v1567 = vpack.c.b16 %v1523, %v1522
      %v1568 = vpack.c.b16 %v1525, %v1524
      %v1569 = vpack.c.b16 %v1527, %v1526
      %v1570 = vpack.c.b16 %v1529, %v1528
      %v1571 = vpack.c.b16 %v1531, %v1530
      %v1572 = vpack.c.b16 %v1533, %v1532
      %v1573 = vpack.c.b16 %v1535, %v1534
      %v1574 = vpack.c.b16 %v1537, %v1536
      %v1575 = vpack.c.b16 %v1539, %v1538
      %v1576 = vpack.c.b16 %v1541, %v1540
      %v1577 = vpack.c.b16 %v1543, %v1542
      %v1578 = vpack.c.b16 %v1545, %v1544
      %v1579 = vpack.c.b16 %v1547, %v1546
      %v1580 = vpack.c.b16 %v1549, %v1548
      %v1581 = vpack.c.b16 %v1551, %v1550
      %v1582 = vpack.c.b16 %v1553, %v1552
      %v1583 = vpack.c.b16 %v1555, %v1554
      %v1584 = vpack.c.b16 %v1557, %v1556
      %v1585 = vpack.c.b16 %v1559, %v1558
      %v1586 = vpack.c.b16 %v1561, %v1560
      %v1587 = vpack.c.b16 %v1563, %v1562
      %1612 = vmatprep.subr.bf16.mxu0 0
      %1613 = vmatpush1.bf16.msra.mxu0 %v1571
      %1614 = vmatprep.subr.bf16.mxu0 0
      %1615 = vmatpush1.bf16.msra.mxu0 %v1570
      %1616 = vmatprep.subr.bf16.mxu0 0
      %1617 = vmatpush1.bf16.msra.mxu0 %v1569
      %1618 = vmatprep.subr.bf16.mxu0 0
      %1619 = vmatpush1.bf16.msra.mxu0 %v1568
      %1620 = vmatprep.subr.bf16.mxu0 0
      %1621 = vmatpush1.bf16.msra.mxu0 %v1567
      %1622 = vmatprep.subr.bf16.mxu0 0
      %1623 = vmatpush1.bf16.msra.mxu0 %v1566
      %1624 = vmatprep.subr.bf16.mxu0 0
      %1625 = vmatpush1.bf16.msra.mxu0 %v1565
      %1626 = vmatprep.subr.bf16.mxu0 0
      %1627 = vmatpush1.bf16.msra.mxu0 %v1564
      %1628 = vmatprep.subr.bf16.mxu0 0
      %1629 = vmatpush2.bf16.msra.mxu0 %v1579
      %1630 = vmatprep.subr.bf16.mxu0 0
      %1631 = vmatpush2.bf16.msra.mxu0 %v1578
      %1632 = vmatprep.subr.bf16.mxu0 0
      %1633 = vmatpush2.bf16.msra.mxu0 %v1577
      %1634 = vmatprep.subr.bf16.mxu0 0
      %1635 = vmatpush2.bf16.msra.mxu0 %v1576
      %1636 = vmatprep.subr.bf16.mxu0 0
      %1637 = vmatpush2.bf16.msra.mxu0 %v1575
      %1638 = vmatprep.subr.bf16.mxu0 0
      %1639 = vmatpush2.bf16.msra.mxu0 %v1574
      %1640 = vmatprep.subr.bf16.mxu0 0
      %1641 = vmatpush2.bf16.msra.mxu0 %v1573
      %1642 = vmatprep.subr.bf16.mxu0 0
      %1643 = vmatpush2.bf16.msra.mxu0 %v1572
      %1644 = vmatprep.mubr.bf16.mxu0 %v492
      %1645 = vmatmul.mubr.bf16.gmra.mxu0 %v585
      %v1646 = vpop.f32.mrf.mxu0
      %v1647 = vadd.f32 0.0, %v1646
      %v1648 = vpop.f32.mrf.mxu0
      %v1649 = vpop.f32.mrf.mxu0
      %v1650 = vadd.f32 0.0, %v1649
      %v1651 = vpop.f32.mrf.mxu0
      %1652 = vmatprep.mubr.bf16.mxu0 %v493
      %1653 = vmatmul.mubr.bf16.gmra.mxu0 %v586
      %v1654 = vpop.f32.mrf.mxu0
      %v1655 = vadd.f32 0.0, %v1654
      %v1656 = vpop.f32.mrf.mxu0
      %v1657 = vpop.f32.mrf.mxu0
      %v1658 = vadd.f32 0.0, %v1657
      %v1659 = vpop.f32.mrf.mxu0
      %1660 = vmatprep.mubr.bf16.mxu0 %v494
      %1661 = vmatmul.mubr.bf16.gmra.mxu0 %v587
      %v1662 = vpop.f32.mrf.mxu0
      %v1663 = vadd.f32 0.0, %v1662
      %v1664 = vpop.f32.mrf.mxu0
      %v1665 = vpop.f32.mrf.mxu0
      %v1666 = vadd.f32 0.0, %v1665
      %v1667 = vpop.f32.mrf.mxu0
      %1668 = vmatprep.mubr.bf16.mxu0 %v495
      %1669 = vmatmul.mubr.bf16.gmra.mxu0 %v588
      %v1670 = vpop.f32.mrf.mxu0
      %v1671 = vadd.f32 0.0, %v1670
      %v1672 = vpop.f32.mrf.mxu0
      %v1673 = vpop.f32.mrf.mxu0
      %v1674 = vadd.f32 0.0, %v1673
      %v1675 = vpop.f32.mrf.mxu0
      %1676 = vmatprep.mubr.bf16.mxu0 %v496
      %1677 = vmatmul.mubr.bf16.gmra.mxu0 %v589
      %v1678 = vpop.f32.mrf.mxu0
      %v1679 = vadd.f32 0.0, %v1678
      %v1680 = vpop.f32.mrf.mxu0
      %v1681 = vpop.f32.mrf.mxu0
      %v1682 = vadd.f32 0.0, %v1681
      %v1683 = vpop.f32.mrf.mxu0
      %1684 = vmatprep.mubr.bf16.mxu0 %v497
      %1685 = vmatmul.mubr.bf16.gmra.mxu0 %v590
      %v1686 = vpop.f32.mrf.mxu0
      %v1687 = vadd.f32 0.0, %v1686
      %v1688 = vpop.f32.mrf.mxu0
      %v1689 = vpop.f32.mrf.mxu0
      %v1690 = vadd.f32 0.0, %v1689
      %v1691 = vpop.f32.mrf.mxu0
      %1692 = vmatprep.mubr.bf16.mxu0 %v498
      %1693 = vmatmul.mubr.bf16.gmra.mxu0 %v591
      %v1694 = vpop.f32.mrf.mxu0
      %v1695 = vadd.f32 0.0, %v1694
      %v1696 = vpop.f32.mrf.mxu0
      %v1697 = vpop.f32.mrf.mxu0
      %v1698 = vadd.f32 0.0, %v1697
      %v1699 = vpop.f32.mrf.mxu0
      %1700 = vmatprep.mubr.bf16.mxu0 %v499
      %1701 = vmatmul.mubr.bf16.gmra.mxu0 %v592
      %v1702 = vpop.f32.mrf.mxu0
      %v1703 = vadd.f32 0.0, %v1702
      %v1704 = vpop.f32.mrf.mxu0
      %v1705 = vpop.f32.mrf.mxu0
      %v1706 = vadd.f32 0.0, %v1705
      %v1707 = vpop.f32.mrf.mxu0
      %1708 = vdwg.mxu0
      %1709 = vmatprep.subr.bf16.mxu0 0
      %1710 = vmatpush1.bf16.msra.mxu0 %v1587
      %1711 = vmatprep.subr.bf16.mxu0 0
      %1712 = vmatpush1.bf16.msra.mxu0 %v1586
      %1713 = vmatprep.subr.bf16.mxu0 0
      %1714 = vmatpush1.bf16.msra.mxu0 %v1585
      %1715 = vmatprep.subr.bf16.mxu0 0
      %1716 = vmatpush1.bf16.msra.mxu0 %v1584
      %1717 = vmatprep.subr.bf16.mxu0 0
      %1718 = vmatpush1.bf16.msra.mxu0 %v1583
      %1719 = vmatprep.subr.bf16.mxu0 0
      %1720 = vmatpush1.bf16.msra.mxu0 %v1582
      %1721 = vmatprep.subr.bf16.mxu0 0
      %1722 = vmatpush1.bf16.msra.mxu0 %v1581
      %1723 = vmatprep.subr.bf16.mxu0 0
      %1724 = vmatpush1.bf16.msra.mxu0 %v1580
      %1725 = vmatprep.subr.bf16.mxu0 0
      %1726 = vmatpush2.bf16.msra.mxu0 0
      %1727 = vmatprep.subr.bf16.mxu0 0
      %1728 = vmatpush2.bf16.msra.mxu0 0
      %1729 = vmatprep.subr.bf16.mxu0 0
      %1730 = vmatpush2.bf16.msra.mxu0 0
      %1731 = vmatprep.subr.bf16.mxu0 0
      %1732 = vmatpush2.bf16.msra.mxu0 0
      %1733 = vmatprep.subr.bf16.mxu0 0
      %1734 = vmatpush2.bf16.msra.mxu0 0
      %1735 = vmatprep.subr.bf16.mxu0 0
      %1736 = vmatpush2.bf16.msra.mxu0 0
      %1737 = vmatprep.subr.bf16.mxu0 0
      %1738 = vmatpush2.bf16.msra.mxu0 0
      %1739 = vmatprep.subr.bf16.mxu0 0
      %1740 = vmatpush2.bf16.msra.mxu0 0
      %1741 = vmatprep.mubr.bf16.mxu0 0
      %1742 = vmatmul.mubr.bf16.gmra.mxu0 %v628
      %v1743 = vpop.f32.mrf.mxu0
      %v1744 = vadd.f32 %v1647, %v1743
      %v1745 = vpop.f32.mrf.mxu0
      %v1746 = vpop.f32.mrf.mxu0
      %v1747 = vadd.f32 %v1650, %v1746
      %v1748 = vpop.f32.mrf.mxu0
      %1749 = vmatprep.mubr.bf16.mxu0 0
      %1750 = vmatmul.mubr.bf16.gmra.mxu0 %v629
      %v1751 = vpop.f32.mrf.mxu0
      %v1752 = vadd.f32 %v1655, %v1751
      %v1753 = vpop.f32.mrf.mxu0
      %v1754 = vpop.f32.mrf.mxu0
      %v1755 = vadd.f32 %v1658, %v1754
      %v1756 = vpop.f32.mrf.mxu0
      %1757 = vmatprep.mubr.bf16.mxu0 0
      %1758 = vmatmul.mubr.bf16.gmra.mxu0 %v630
      %v1759 = vpop.f32.mrf.mxu0
      %v1760 = vadd.f32 %v1663, %v1759
      %v1761 = vpop.f32.mrf.mxu0
      %v1762 = vpop.f32.mrf.mxu0
      %v1763 = vadd.f32 %v1666, %v1762
      %v1764 = vpop.f32.mrf.mxu0
      %1765 = vmatprep.mubr.bf16.mxu0 0
      %1766 = vmatmul.mubr.bf16.gmra.mxu0 %v631
      %v1767 = vpop.f32.mrf.mxu0
      %v1768 = vadd.f32 %v1671, %v1767
      %v1769 = vpop.f32.mrf.mxu0
      %v1770 = vpop.f32.mrf.mxu0
      %v1771 = vadd.f32 %v1674, %v1770
      %v1772 = vpop.f32.mrf.mxu0
      %1773 = vmatprep.mubr.bf16.mxu0 0
      %1774 = vmatmul.mubr.bf16.gmra.mxu0 %v632
      %v1775 = vpop.f32.mrf.mxu0
      %v1776 = vadd.f32 %v1679, %v1775
      %v1777 = vpop.f32.mrf.mxu0
      %v1778 = vpop.f32.mrf.mxu0
      %v1779 = vadd.f32 %v1682, %v1778
      %v1780 = vpop.f32.mrf.mxu0
      %1781 = vmatprep.mubr.bf16.mxu0 0
      %1782 = vmatmul.mubr.bf16.gmra.mxu0 %v633
      %v1783 = vpop.f32.mrf.mxu0
      %v1784 = vadd.f32 %v1687, %v1783
      %v1785 = vpop.f32.mrf.mxu0
      %v1786 = vpop.f32.mrf.mxu0
      %v1787 = vadd.f32 %v1690, %v1786
      %v1788 = vpop.f32.mrf.mxu0
      %1789 = vmatprep.mubr.bf16.mxu0 0
      %1790 = vmatmul.mubr.bf16.gmra.mxu0 %v634
      %v1791 = vpop.f32.mrf.mxu0
      %v1792 = vadd.f32 %v1695, %v1791
      %v1793 = vpop.f32.mrf.mxu0
      %v1794 = vpop.f32.mrf.mxu0
      %v1795 = vadd.f32 %v1698, %v1794
      %v1796 = vpop.f32.mrf.mxu0
      %1797 = vmatprep.mubr.bf16.mxu0 0
      %1798 = vmatmul.mubr.bf16.gmra.mxu0 %v635
      %v1799 = vpop.f32.mrf.mxu0
      %v1800 = vadd.f32 %v1703, %v1799
      %v1801 = vpop.f32.mrf.mxu0
      %v1802 = vpop.f32.mrf.mxu0
      %v1803 = vadd.f32 %v1706, %v1802
      %v1804 = vpop.f32.mrf.mxu0
      %1805 = vdwg.mxu0
      %v1806 = vadd.f32 %v1357, %v1744
      %v1807 = vadd.f32 %v1360, %v1747
      %v1808 = vadd.f32 %v1365, %v1752
      %v1809 = vadd.f32 %v1368, %v1755
      %v1810 = vadd.f32 %v1373, %v1760
      %v1811 = vadd.f32 %v1376, %v1763
      %v1812 = vadd.f32 %v1381, %v1768
      %v1813 = vadd.f32 %v1384, %v1771
      %v1814 = vadd.f32 %v1389, %v1776
      %v1815 = vadd.f32 %v1392, %v1779
      %v1816 = vadd.f32 %v1397, %v1784
      %v1817 = vadd.f32 %v1400, %v1787
      %v1818 = vadd.f32 %v1405, %v1792
      %v1819 = vadd.f32 %v1408, %v1795
      %v1820 = vadd.f32 %v1413, %v1800
      %v1821 = vadd.f32 %v1416, %v1803
      %v1822 = vld [vmem:[%s4] sm:$0x1]
      %v1824 = vlaneseq
      %v1825 = vshrl.u32 %v1824, 7
      %v1826 = vsub.s32 0, %v1825
      %v1827 = vrot.slane %v1822, %v1826
      %v1829 = vadd.f32 %v1806, %v1827
      %v1830 = vadd.f32 %v1807, %v1827
      %v1831 = vadd.f32 %v1808, %v1827
      %v1832 = vadd.f32 %v1809, %v1827
      %v1833 = vadd.f32 %v1810, %v1827
      %v1834 = vadd.f32 %v1811, %v1827
      %v1835 = vadd.f32 %v1812, %v1827
      %v1836 = vadd.f32 %v1813, %v1827
      %v1837 = vadd.f32 %v1814, %v1827
      %v1838 = vadd.f32 %v1815, %v1827
      %v1839 = vadd.f32 %v1816, %v1827
      %v1840 = vadd.f32 %v1817, %v1827
      %v1841 = vadd.f32 %v1818, %v1827
      %v1842 = vadd.f32 %v1819, %v1827
      %v1843 = vadd.f32 %v1820, %v1827
      %v1844 = vadd.f32 %v1821, %v1827
      %v1845 = vmax.f32 %v1829, 0.0
      %v1846 = vmax.f32 %v1830, 0.0
      %v1847 = vmax.f32 %v1831, 0.0
      %v1848 = vmax.f32 %v1832, 0.0
      %v1849 = vmax.f32 %v1833, 0.0
      %v1850 = vmax.f32 %v1834, 0.0
      %v1851 = vmax.f32 %v1835, 0.0
      %v1852 = vmax.f32 %v1836, 0.0
      %v1853 = vmax.f32 %v1837, 0.0
      %v1854 = vmax.f32 %v1838, 0.0
      %v1855 = vmax.f32 %v1839, 0.0
      %v1856 = vmax.f32 %v1840, 0.0
      %v1857 = vmax.f32 %v1841, 0.0
      %v1858 = vmax.f32 %v1842, 0.0
      %v1859 = vmax.f32 %v1843, 0.0
      %v1860 = vmax.f32 %v1844, 0.0
      %1861 = vst [vmem:[%s391] sm:$0xff] %v1845
      %1862 = vst [vmem:[%s391 + $0x8] sm:$0xff] %v1846
      %1863 = vst [vmem:[%s391 + $0x10] sm:$0xff] %v1847
      %1864 = vst [vmem:[%s391 + $0x18] sm:$0xff] %v1848
      %1865 = vst [vmem:[%s391 + $0x20] sm:$0xff] %v1849
      %1866 = vst [vmem:[%s391 + $0x28] sm:$0xff] %v1850
      %1867 = vst [vmem:[%s391 + $0x30] sm:$0xff] %v1851
      %1868 = vst [vmem:[%s391 + $0x38] sm:$0xff] %v1852
      %1869 = vst [vmem:[%s391 + $0x40] sm:$0xff] %v1853
      %1870 = vst [vmem:[%s391 + $0x48] sm:$0xff] %v1854
      %1871 = vst [vmem:[%s391 + $0x50] sm:$0xff] %v1855
      %1872 = vst [vmem:[%s391 + $0x58] sm:$0xff] %v1856
      %1873 = vst [vmem:[%s391 + $0x60] sm:$0xff] %v1857
      %1874 = vst [vmem:[%s391 + $0x68] sm:$0xff] %v1858
      %1875 = vst [vmem:[%s391 + $0x70] sm:$0xff] %v1859
      %1876 = vst [vmem:[%s391 + $0x78] sm:$0xff] %v1860
      %s1877 = smul.u32 8, %s21
      %p1878 = scmp.lt.s32.totalorder %s20, 1
      %s1879 = scalar_select %p1878, %s20, 1
      %p1880 = scmp.lt.s32.totalorder %s1877, 15
      %s1881 = scalar_select %p1880, %s1877, 15
      %s1882 = smul.addr %s1881, 2
      %s1883 = smul.addr %s1879, 32
      %s1884 = sadd.s32 %s1882, %s1883
      %s1885 = smul.addr %s1884, 8
      %s1886 = scalar_lea.vmem %s5, %s1885
      // Predicated region
      $region41: #{_lambda_.5} parent=39 // pred_check
        %p1887 = pneg %p190
      $region42: #{_lambda_.5} parent=39 // pred_check_branch
        %1889 = sbr.rel (%p1887) target = $region44
      $region43: #{_lambda_.5} parent=39 // pred_region
        %s1890 = smul.u32 8, %s21
      $region44: #{_lambda_.5} parent=39 // pred_fallthru
        _
    $region40: #{_lambda_.5} parent=5 // pred_fallthru
      _
    %p1891 = scmp.le.s32.totalorder 2, %s11
    // Predicated region
    $region45: #{_lambda_.5} parent=5 // pred_check
      %p1892 = pneg %p1891
    $region46: #{_lambda_.5} parent=5 // pred_check_branch
      %1894 = sbr.rel (%p1892) target = $region48
    $region47: #{_lambda_.5} parent=5 // pred_region
      %s1895 = ssub.s32 %s11, 2
      // Predicated region
      $region49: #{_lambda_.5} parent=47 // pred_check
        %p1896 = pneg %p196
      $region50: #{_lambda_.5} parent=47 // pred_check_branch
        %1898 = sbr.rel (%p1896) target = $region52
      $region51: #{_lambda_.5} parent=47 // pred_region
        %s1899 = smul.u32 8, %s23
        %p1900 = scmp.lt.s32.totalorder %s22, 1
        %s1901 = scalar_select %p1900, %s22, 1
        %p1902 = scmp.lt.s32.totalorder %s1899, 15
        %s1903 = scalar_select %p1902, %s1899, 15
        %s1904 = smul.addr %s1903, 2
        %s1905 = smul.addr %s1901, 32
        %s1906 = sadd.s32 %s1904, %s1905
        %s1907 = smul.addr %s1906, 8
        %s1908 = scalar_lea.vmem %s5, %s1907
      $region52: #{_lambda_.5} parent=47 // pred_fallthru
        _
    $region48: #{_lambda_.5} parent=5 // pred_fallthru
      _
  $region6: #{_lambda_.5} parent=0 // loop_footer
    %s15 = sadd.s32 1, %s11
  $region7: #{_lambda_.5} parent=0 // loop_footer_branch
    %10 = sbr.rel target = $region3
  $region8: #{_lambda_.5} parent=0 // loop_exit
    _

</llo_original>
